<compile_context>
chip_gen: v5e
topology: v5e:2x2
jax: 0.10.0
libtpu: 0.0.40
codegen_flags: <defaults>
</compile_context>

<pallas_src>
import jax
import jax.numpy as jnp
import numpy as np
from jax.experimental import pallas as pl
from jax.experimental.pallas import tpu as pltpu


# Matmul operand dtype.  On v6e / v7x set to jnp.bfloat16 for ~2x MXU rate and
# halved weight DMA/VMEM (accumulation stays f32 via preferred_element_type;
# gate nonlinearities and the c/h state update stay f32).  Kept f32 here so the
# numerical check against the pure-f32 reference stays tight.
MATMUL_DTYPE = jnp.float32


def _cell_update(gates, c_prev, H):
    """One LSTM cell update from pre-activation gates (B, 4H), order i,f,o,c."""
    # Apply sigmoid to the whole (B, 4H) tile (at H=32, 4H=128 is exactly one
    # full-lane vreg row) and slice afterwards; slices are static lane selects.
    # For realistic H, pad H to a multiple of 128 so each gate is lane-aligned.
    sig = jax.nn.sigmoid(gates)
    i_t = sig[:, 0 * H:1 * H]
    f_t = sig[:, 1 * H:2 * H]
    o_t = sig[:, 2 * H:3 * H]
    c_tilda = jnp.tanh(gates[:, 3 * H:4 * H])
    c_t = f_t * c_prev + i_t * c_tilda
    h_t = o_t * jnp.tanh(c_t)
    return h_t, c_t


def _make_xlstm_kernel(num_layers, hidden_size, t_block):
    H = hidden_size
    T = t_block
    n_w = 1 + 3 * (num_layers - 1)   # Wh_0, then (Wx_l, Wh_l, b_l) per layer>0

    def kernel(gx_ref, *refs):
        w_refs = refs[:n_w]
        h_out_ref = refs[n_w]
        c_out_ref = refs[n_w + 1]
        h_state = refs[n_w + 2]
        c_state = refs[n_w + 3]

        # New batch block -> reset the recurrent state.
        @pl.when(pl.program_id(1) == 0)
        def _():
            h_state[...] = jnp.zeros_like(h_state)
            c_state[...] = jnp.zeros_like(c_state)

        # Grid-invariant weights: load once, hoisted out of the time loop.
        Wh0 = w_refs[0][...]                               # (H, 4H)
        deeper = []
        for l in range(1, num_layers):
            base = 1 + 3 * (l - 1)
            deeper.append((w_refs[base][...],              # Wx_l  (H, 4H)
                           w_refs[base + 1][...],          # Wh_l  (H, 4H)
                           w_refs[base + 2][...]))         # b_l   (1, 4H)

        # T timesteps per grid step; static Python unroll -> static slices.
        for ts in range(T):
            # Layer 0: x @ Wx0 + b0 was precomputed in the wrapper (gates_x);
            # only the recurrent matmul sits on the serial critical path.
            h_prev = h_state[0]
            c_prev = c_state[0]
            gates = gx_ref[ts] + jnp.dot(
                h_prev.astype(Wh0.dtype), Wh0,
                preferred_element_type=jnp.float32)
            h_t, c_t = _cell_update(gates, c_prev, H)
            h_state[0] = h_t
            c_state[0] = c_t
            x_t = h_t

            for l in range(1, num_layers):
                Wx, Wh, b = deeper[l - 1]
                h_prev = h_state[l]
                c_prev = c_state[l]
                gates = (
                    jnp.dot(x_t.astype(Wx.dtype), Wx,
                            preferred_element_type=jnp.float32)
                    + jnp.dot(h_prev.astype(Wh.dtype), Wh,
                              preferred_element_type=jnp.float32)
                    + b
                )
                h_t, c_t = _cell_update(gates, c_prev, H)
                h_state[l] = h_t
                c_state[l] = c_t
                x_t = h_t

            # Lane-dense output slab: last dim T*H is a multiple of 128, so the
            # block writeback to HBM uses unmasked full-lane stores.
            h_out_ref[0, 0, :, ts * H:(ts + 1) * H] = h_t.astype(h_out_ref.dtype)
            c_out_ref[0, 0, :, ts * H:(ts + 1) * H] = c_t.astype(c_out_ref.dtype)

    return kernel


def xlstm_forward(x, params, hidden_size, *, t_block=8, batch_block=8):
    """x: (B, S, D_in); params: list of (Wx, Wh, b) per layer, already laid out
    so gates = x @ Wx + h @ Wh + b with gate order i, f, o, c."""
    B, S, D_in = x.shape
    H = hidden_size
    L = len(params)

    T = min(t_block, S)
    BB = min(batch_block, B)
    assert S % T == 0, "seq_len must be divisible by t_block"
    assert B % BB == 0, "batch must be divisible by batch_block"
    nb, nt = B // BB, S // T

    Wx0, Wh0, b0 = params[0]
    # Hoist the layer-0 input projection out of the serial recurrence: one big
    # parallel (B*S, D_in) x (D_in, 4H) matmul, laid out time-major so the
    # kernel reads whole (BB, 4H) tiles per timestep.
    gates_x = jnp.einsum("bsd,dg->sbg", x, Wx0,
                         preferred_element_type=jnp.float32) + b0  # (S, B, 4H)

    kernel = _make_xlstm_kernel(L, H, T)

    in_specs = [pl.BlockSpec((T, BB, 4 * H), lambda b, t: (t, b, 0))]
    flat_params = []

    # Weights are grid-invariant (constant index_map), so the pipeline only
    # re-fetches them when the block index changes (i.e. never).  For realistic
    # H, additionally use pipeline_mode=pl.Buffered(1) on these specs and bf16
    # weights to fit v7x's 64 MiB VMEM.
    in_specs.append(pl.BlockSpec(Wh0.shape, lambda b, t: (0, 0)))
    flat_params.append(Wh0.astype(MATMUL_DTYPE))
    for l in range(1, L):
        Wx, Wh, bias = params[l]
        for w in (Wx.astype(MATMUL_DTYPE), Wh.astype(MATMUL_DTYPE), bias):
            in_specs.append(pl.BlockSpec(w.shape, lambda b, t: (0, 0)))
            flat_params.append(w)

    out_specs = [
        pl.BlockSpec((1, 1, BB, T * H), lambda b, t: (b, t, 0, 0)),
        pl.BlockSpec((1, 1, BB, T * H), lambda b, t: (b, t, 0, 0)),
    ]
    out_shape = (
        jax.ShapeDtypeStruct((nb, nt, BB, T * H), jnp.float32),
        jax.ShapeDtypeStruct((nb, nt, BB, T * H), jnp.float32),
    )

    grid_spec = pltpu.PrefetchScalarGridSpec(
        num_scalar_prefetch=0,
        grid=(nb, nt),                       # recurrent (time) axis last
        in_specs=in_specs,
        out_specs=out_specs,
        scratch_shapes=[
            pltpu.VMEM((L, BB, H), jnp.float32),   # h state per layer
            pltpu.VMEM((L, BB, H), jnp.float32),   # c state per layer
        ],
    )

    h_slab, c_slab = pl.pallas_call(
        kernel,
        grid_spec=grid_spec,
        out_shape=out_shape,
        compiler_params=pltpu.CompilerParams(
            # batch blocks independent (split across v7x's 2 TensorCores);
            # time axis is a serial recurrence.
            dimension_semantics=("parallel", "arbitrary"),
        ),
    )(gates_x, *flat_params)

    def unslab(y):
        y = y.reshape(nb, nt, BB, T, H)
        y = jnp.transpose(y, (0, 2, 1, 3, 4))          # (nb, BB, nt, T, H)
        return y.reshape(B, S, H)

    return unslab(h_slab), unslab(c_slab)


def xlstm_reference(x, params, hidden_size):
    """Pure-JAX reference mirroring the PyTorch module (zero initial state)."""
    B, S, _ = x.shape
    H = hidden_size
    L = len(params)
    h = [jnp.zeros((B, H), jnp.float32) for _ in range(L)]
    c = [jnp.zeros((B, H), jnp.float32) for _ in range(L)]
    h_n, c_n = [], []
    for t in range(S):
        x_t = x[:, t, :]
        for l, (Wx, Wh, b) in enumerate(params):
            gates = x_t @ Wx + h[l] @ Wh + b
            i_t = jax.nn.sigmoid(gates[:, 0 * H:1 * H])
            f_t = jax.nn.sigmoid(gates[:, 1 * H:2 * H])
            o_t = jax.nn.sigmoid(gates[:, 2 * H:3 * H])
            c_tilda = jnp.tanh(gates[:, 3 * H:4 * H])
            c[l] = f_t * c[l] + i_t * c_tilda
            h[l] = o_t * jnp.tanh(c[l])
            x_t = h[l]
        h_n.append(h[-1])
        c_n.append(c[-1])
    return jnp.stack(h_n, axis=1), jnp.stack(c_n, axis=1)


def init_params(key, input_size, hidden_size, num_layers):
    """Deterministic synthetic weights.  Per layer: Wx (in_l, 4H), Wh (H, 4H),
    b (1, 4H) -- equivalent to the four PyTorch Linear layers over
    cat(x, h_prev), gate order i, f, o, c."""
    params = []
    for layer in range(num_layers):
        in_l = input_size if layer == 0 else hidden_size
        key, k1, k2, k3 = jax.random.split(key, 4)
        bound = 1.0 / np.sqrt(in_l + hidden_size)
        Wx = jax.random.uniform(k1, (in_l, 4 * hidden_size), jnp.float32,
                                -bound, bound)
        Wh = jax.random.uniform(k2, (hidden_size, 4 * hidden_size), jnp.float32,
                                -bound, bound)
        b = jax.random.uniform(k3, (1, 4 * hidden_size), jnp.float32,
                               -bound, bound)
        params.append((Wx, Wh, b))
    return params


if __name__ == "__main__":
    batch = 16          # 2 batch blocks of 8 (exercises the "parallel" axis)
    seq_len = 16        # 2 time blocks of 8
    input_size = 16
    hidden_size = 32
    num_layers = 2

    key = jax.random.PRNGKey(0)
    key, kx = jax.random.split(key)
    x = jax.random.normal(kx, (batch, seq_len, input_size), jnp.float32)
    params = init_params(key, input_size, hidden_size, num_layers)

    h_n, c_n = xlstm_forward(x, params, hidden_size, t_block=8, batch_block=8)
    jax.block_until_ready((h_n, c_n))

    h_ref, c_ref = xlstm_reference(x, params, hidden_size)
    np.testing.assert_allclose(np.asarray(h_n), np.asarray(h_ref),
                               rtol=1e-4, atol=1e-4)
    np.testing.assert_allclose(np.asarray(c_n), np.asarray(c_ref),
                               rtol=1e-4, atol=1e-4)

    print("KERNEL_OK")
</pallas_src>

<mosaic_0001>
module attributes {stable_mosaic.version = 11 : i64} {
  func.func @kernel(%arg0: i32, %arg1: i32, %arg2: memref<8x8x128xf32, #tpu.memory_space<vmem>>, %arg3: memref<32x128xf32, #tpu.memory_space<vmem>>, %arg4: memref<32x128xf32, #tpu.memory_space<vmem>>, %arg5: memref<32x128xf32, #tpu.memory_space<vmem>>, %arg6: memref<1x128xf32, #tpu.memory_space<vmem>>, %arg7: memref<1x1x8x256xf32, #tpu.memory_space<vmem>>, %arg8: memref<1x1x8x256xf32, #tpu.memory_space<vmem>>, %arg9: memref<2x8x32xf32, #tpu.memory_space<vmem>>, %arg10: memref<2x8x32xf32, #tpu.memory_space<vmem>>) attributes {dimension_semantics = [#tpu.dimension_semantics<parallel>, #tpu.dimension_semantics<arbitrary>], iteration_bounds = array<i64: 2, 2>, scalar_prefetch = 0 : i64, scratch_operands = 2 : i64, tpu.core_type = #tpu.core_type<tc>, window_params = [{transform_indices = @transform_0, window_bounds = array<i64: 8, 8, 128>}, {pipeline_mode = #tpu.pipeline_mode<synchronous>, transform_indices = @transform_1, window_bounds = array<i64: 32, 128>}, {pipeline_mode = #tpu.pipeline_mode<synchronous>, transform_indices = @transform_2, window_bounds = array<i64: 32, 128>}, {pipeline_mode = #tpu.pipeline_mode<synchronous>, transform_indices = @transform_3, window_bounds = array<i64: 32, 128>}, {pipeline_mode = #tpu.pipeline_mode<synchronous>, transform_indices = @transform_4, window_bounds = array<i64: 1, 128>}, {transform_indices = @transform_5, window_bounds = array<i64: 1, 1, 8, 256>}, {transform_indices = @transform_6, window_bounds = array<i64: 1, 1, 8, 256>}]} {
    %c0_i32 = arith.constant 0 : i32
    %0 = arith.cmpi eq, %arg1, %c0_i32 : i32
    %1 = arith.extui %0 : i1 to i32
    %c0_i32_0 = arith.constant 0 : i32
    %2 = arith.cmpi ne, %1, %c0_i32_0 : i32
    scf.if %2 {
      %cst_313 = arith.constant 0.000000e+00 : f32
      %527 = vector.broadcast %cst_313 : f32 to vector<2x8x32xf32>
      %c0_314 = arith.constant 0 : index
      %c0_315 = arith.constant 0 : index
      %c0_316 = arith.constant 0 : index
      %528 = vector.load %arg9[%c0_314, %c0_315, %c0_316] : memref<2x8x32xf32, #tpu.memory_space<vmem>>, vector<2x8x32xf32>
      tpu.vector_store %arg9[%c0_314, %c0_315, %c0_316], %527 {strides = array<i32>} : memref<2x8x32xf32, #tpu.memory_space<vmem>>, vector<2x8x32xf32>,
      %cst_317 = arith.constant 0.000000e+00 : f32
      %529 = vector.broadcast %cst_317 : f32 to vector<2x8x32xf32>
      %c0_318 = arith.constant 0 : index
      %c0_319 = arith.constant 0 : index
      %c0_320 = arith.constant 0 : index
      %530 = vector.load %arg10[%c0_318, %c0_319, %c0_320] : memref<2x8x32xf32, #tpu.memory_space<vmem>>, vector<2x8x32xf32>
      tpu.vector_store %arg10[%c0_318, %c0_319, %c0_320], %529 {strides = array<i32>} : memref<2x8x32xf32, #tpu.memory_space<vmem>>, vector<2x8x32xf32>,
    } else {
    }
    %c0 = arith.constant 0 : index
    %c0_1 = arith.constant 0 : index
    %3 = vector.load %arg3[%c0, %c0_1] : memref<32x128xf32, #tpu.memory_space<vmem>>, vector<32x128xf32>
    %c0_2 = arith.constant 0 : index
    %c0_3 = arith.constant 0 : index
    %4 = vector.load %arg4[%c0_2, %c0_3] : memref<32x128xf32, #tpu.memory_space<vmem>>, vector<32x128xf32>
    %c0_4 = arith.constant 0 : index
    %c0_5 = arith.constant 0 : index
    %5 = vector.load %arg5[%c0_4, %c0_5] : memref<32x128xf32, #tpu.memory_space<vmem>>, vector<32x128xf32>
    %c0_6 = arith.constant 0 : index
    %c0_7 = arith.constant 0 : index
    %6 = vector.load %arg6[%c0_6, %c0_7] : memref<1x128xf32, #tpu.memory_space<vmem>>, vector<1x128xf32>
    %c0_8 = arith.constant 0 : index
    %c0_9 = arith.constant 0 : index
    %c0_10 = arith.constant 0 : index
    %7 = vector.load %arg9[%c0_8, %c0_9, %c0_10] : memref<2x8x32xf32, #tpu.memory_space<vmem>>, vector<1x8x32xf32>
    %8 = vector.shape_cast %7 : vector<1x8x32xf32> to vector<8x32xf32>
    %c0_11 = arith.constant 0 : index
    %c0_12 = arith.constant 0 : index
    %c0_13 = arith.constant 0 : index
    %9 = vector.load %arg10[%c0_11, %c0_12, %c0_13] : memref<2x8x32xf32, #tpu.memory_space<vmem>>, vector<1x8x32xf32>
    %10 = vector.shape_cast %9 : vector<1x8x32xf32> to vector<8x32xf32>
    %c0_14 = arith.constant 0 : index
    %c0_15 = arith.constant 0 : index
    %c0_16 = arith.constant 0 : index
    %11 = vector.load %arg2[%c0_14, %c0_15, %c0_16] : memref<8x8x128xf32, #tpu.memory_space<vmem>>, vector<1x8x128xf32>
    %12 = vector.shape_cast %11 : vector<1x8x128xf32> to vector<8x128xf32>
    %cst = arith.constant dense<0.000000e+00> : vector<8x128xf32>
    %13 = tpu.matmul %8, %3, %cst {dimension_numbers = #tpu.dot_dimension_numbers<[1], [0], [0], [1], [0, 0, 1, 1], [], []>} : vector<8x32xf32>, vector<32x128xf32>, vector<8x128xf32> -> vector<8x128xf32>
    %14 = arith.addf %12, %13 : vector<8x128xf32>
    %15 = arith.negf %14 : vector<8x128xf32>
    %16 = math.exp %15 : vector<8x128xf32>
    %cst_17 = arith.constant 1.000000e+00 : f32
    %17 = vector.broadcast %cst_17 : f32 to vector<8x128xf32>
    %18 = arith.addf %17, %16 : vector<8x128xf32>
    %19 = arith.divf %17, %18 : vector<8x128xf32>
    %20 = vector.extract_strided_slice %19 {offsets = [0, 0], sizes = [8, 32], strides = [1, 1]} : vector<8x128xf32> to vector<8x32xf32>
    %21 = vector.extract_strided_slice %19 {offsets = [0, 32], sizes = [8, 32], strides = [1, 1]} : vector<8x128xf32> to vector<8x32xf32>
    %22 = vector.extract_strided_slice %19 {offsets = [0, 64], sizes = [8, 32], strides = [1, 1]} : vector<8x128xf32> to vector<8x32xf32>
    %23 = vector.extract_strided_slice %14 {offsets = [0, 96], sizes = [8, 32], strides = [1, 1]} : vector<8x128xf32> to vector<8x32xf32>
    %24 = math.tanh %23 : vector<8x32xf32>
    %25 = arith.mulf %21, %10 : vector<8x32xf32>
    %26 = arith.mulf %20, %24 : vector<8x32xf32>
    %27 = arith.addf %25, %26 : vector<8x32xf32>
    %28 = math.tanh %27 : vector<8x32xf32>
    %29 = arith.mulf %22, %28 : vector<8x32xf32>
    %c0_18 = arith.constant 0 : index
    %c0_19 = arith.constant 0 : index
    %c0_20 = arith.constant 0 : index
    %30 = vector.load %arg9[%c0_18, %c0_19, %c0_20] : memref<2x8x32xf32, #tpu.memory_space<vmem>>, vector<1x8x32xf32>
    %31 = vector.shape_cast %30 : vector<1x8x32xf32> to vector<8x32xf32>
    %32 = vector.shape_cast %29 : vector<8x32xf32> to vector<1x8x32xf32>
    tpu.vector_store %arg9[%c0_18, %c0_19, %c0_20], %32 {strides = array<i32>} : memref<2x8x32xf32, #tpu.memory_space<vmem>>, vector<1x8x32xf32>,
    %c0_21 = arith.constant 0 : index
    %c0_22 = arith.constant 0 : index
    %c0_23 = arith.constant 0 : index
    %33 = vector.load %arg10[%c0_21, %c0_22, %c0_23] : memref<2x8x32xf32, #tpu.memory_space<vmem>>, vector<1x8x32xf32>
    %34 = vector.shape_cast %33 : vector<1x8x32xf32> to vector<8x32xf32>
    %35 = vector.shape_cast %27 : vector<8x32xf32> to vector<1x8x32xf32>
    tpu.vector_store %arg10[%c0_21, %c0_22, %c0_23], %35 {strides = array<i32>} : memref<2x8x32xf32, #tpu.memory_space<vmem>>, vector<1x8x32xf32>,
    %c1 = arith.constant 1 : index
    %c0_24 = arith.constant 0 : index
    %c0_25 = arith.constant 0 : index
    %36 = vector.load %arg9[%c1, %c0_24, %c0_25] : memref<2x8x32xf32, #tpu.memory_space<vmem>>, vector<1x8x32xf32>
    %37 = vector.shape_cast %36 : vector<1x8x32xf32> to vector<8x32xf32>
    %c1_26 = arith.constant 1 : index
    %c0_27 = arith.constant 0 : index
    %c0_28 = arith.constant 0 : index
    %38 = vector.load %arg10[%c1_26, %c0_27, %c0_28] : memref<2x8x32xf32, #tpu.memory_space<vmem>>, vector<1x8x32xf32>
    %39 = vector.shape_cast %38 : vector<1x8x32xf32> to vector<8x32xf32>
    %cst_29 = arith.constant dense<0.000000e+00> : vector<8x128xf32>
    %40 = tpu.matmul %29, %4, %cst_29 {dimension_numbers = #tpu.dot_dimension_numbers<[1], [0], [0], [1], [0, 0, 1, 1], [], []>} : vector<8x32xf32>, vector<32x128xf32>, vector<8x128xf32> -> vector<8x128xf32>
    %cst_30 = arith.constant dense<0.000000e+00> : vector<8x128xf32>
    %41 = tpu.matmul %37, %5, %cst_30 {dimension_numbers = #tpu.dot_dimension_numbers<[1], [0], [0], [1], [0, 0, 1, 1], [], []>} : vector<8x32xf32>, vector<32x128xf32>, vector<8x128xf32> -> vector<8x128xf32>
    %42 = arith.addf %40, %41 : vector<8x128xf32>
    %43 = vector.broadcast %6 : vector<1x128xf32> to vector<8x128xf32>
    %44 = arith.addf %42, %43 : vector<8x128xf32>
    %45 = arith.negf %44 : vector<8x128xf32>
    %46 = math.exp %45 : vector<8x128xf32>
    %cst_31 = arith.constant 1.000000e+00 : f32
    %47 = vector.broadcast %cst_31 : f32 to vector<8x128xf32>
    %48 = arith.addf %47, %46 : vector<8x128xf32>
    %49 = arith.divf %47, %48 : vector<8x128xf32>
    %50 = vector.extract_strided_slice %49 {offsets = [0, 0], sizes = [8, 32], strides = [1, 1]} : vector<8x128xf32> to vector<8x32xf32>
    %51 = vector.extract_strided_slice %49 {offsets = [0, 32], sizes = [8, 32], strides = [1, 1]} : vector<8x128xf32> to vector<8x32xf32>
    %52 = vector.extract_strided_slice %49 {offsets = [0, 64], sizes = [8, 32], strides = [1, 1]} : vector<8x128xf32> to vector<8x32xf32>
    %53 = vector.extract_strided_slice %44 {offsets = [0, 96], sizes = [8, 32], strides = [1, 1]} : vector<8x128xf32> to vector<8x32xf32>
    %54 = math.tanh %53 : vector<8x32xf32>
    %55 = arith.mulf %51, %39 : vector<8x32xf32>
    %56 = arith.mulf %50, %54 : vector<8x32xf32>
    %57 = arith.addf %55, %56 : vector<8x32xf32>
    %58 = math.tanh %57 : vector<8x32xf32>
    %59 = arith.mulf %52, %58 : vector<8x32xf32>
    %c1_32 = arith.constant 1 : index
    %c0_33 = arith.constant 0 : index
    %c0_34 = arith.constant 0 : index
    %60 = vector.load %arg9[%c1_32, %c0_33, %c0_34] : memref<2x8x32xf32, #tpu.memory_space<vmem>>, vector<1x8x32xf32>
    %61 = vector.shape_cast %60 : vector<1x8x32xf32> to vector<8x32xf32>
    %62 = vector.shape_cast %59 : vector<8x32xf32> to vector<1x8x32xf32>
    tpu.vector_store %arg9[%c1_32, %c0_33, %c0_34], %62 {strides = array<i32>} : memref<2x8x32xf32, #tpu.memory_space<vmem>>, vector<1x8x32xf32>,
    %c1_35 = arith.constant 1 : index
    %c0_36 = arith.constant 0 : index
    %c0_37 = arith.constant 0 : index
    %63 = vector.load %arg10[%c1_35, %c0_36, %c0_37] : memref<2x8x32xf32, #tpu.memory_space<vmem>>, vector<1x8x32xf32>
    %64 = vector.shape_cast %63 : vector<1x8x32xf32> to vector<8x32xf32>
    %65 = vector.shape_cast %57 : vector<8x32xf32> to vector<1x8x32xf32>
    tpu.vector_store %arg10[%c1_35, %c0_36, %c0_37], %65 {strides = array<i32>} : memref<2x8x32xf32, #tpu.memory_space<vmem>>, vector<1x8x32xf32>,
    %c0_38 = arith.constant 0 : index
    %c0_39 = arith.constant 0 : index
    %c0_40 = arith.constant 0 : index
    %c0_41 = arith.constant 0 : index
    %66 = vector.load %arg7[%c0_38, %c0_39, %c0_40, %c0_41] : memref<1x1x8x256xf32, #tpu.memory_space<vmem>>, vector<1x1x8x32xf32>
    %67 = vector.shape_cast %66 : vector<1x1x8x32xf32> to vector<8x32xf32>
    %68 = vector.shape_cast %59 : vector<8x32xf32> to vector<1x1x8x32xf32>
    tpu.vector_store %arg7[%c0_38, %c0_39, %c0_40, %c0_41], %68 {strides = array<i32>} : memref<1x1x8x256xf32, #tpu.memory_space<vmem>>, vector<1x1x8x32xf32>,
    %c0_42 = arith.constant 0 : index
    %c0_43 = arith.constant 0 : index
    %c0_44 = arith.constant 0 : index
    %c0_45 = arith.constant 0 : index
    %69 = vector.load %arg8[%c0_42, %c0_43, %c0_44, %c0_45] : memref<1x1x8x256xf32, #tpu.memory_space<vmem>>, vector<1x1x8x32xf32>
    %70 = vector.shape_cast %69 : vector<1x1x8x32xf32> to vector<8x32xf32>
    %71 = vector.shape_cast %57 : vector<8x32xf32> to vector<1x1x8x32xf32>
    tpu.vector_store %arg8[%c0_42, %c0_43, %c0_44, %c0_45], %71 {strides = array<i32>} : memref<1x1x8x256xf32, #tpu.memory_space<vmem>>, vector<1x1x8x32xf32>,
    %c0_46 = arith.constant 0 : index
    %c0_47 = arith.constant 0 : index
    %c0_48 = arith.constant 0 : index
    %72 = vector.load %arg9[%c0_46, %c0_47, %c0_48] : memref<2x8x32xf32, #tpu.memory_space<vmem>>, vector<1x8x32xf32>
    %73 = vector.shape_cast %72 : vector<1x8x32xf32> to vector<8x32xf32>
    %c0_49 = arith.constant 0 : index
    %c0_50 = arith.constant 0 : index
    %c0_51 = arith.constant 0 : index
    %74 = vector.load %arg10[%c0_49, %c0_50, %c0_51] : memref<2x8x32xf32, #tpu.memory_space<vmem>>, vector<1x8x32xf32>
    %75 = vector.shape_cast %74 : vector<1x8x32xf32> to vector<8x32xf32>
    %c1_52 = arith.constant 1 : index
    %c0_53 = arith.constant 0 : index
    %c0_54 = arith.constant 0 : index
    %76 = vector.load %arg2[%c1_52, %c0_53, %c0_54] : memref<8x8x128xf32, #tpu.memory_space<vmem>>, vector<1x8x128xf32>
    %77 = vector.shape_cast %76 : vector<1x8x128xf32> to vector<8x128xf32>
    %cst_55 = arith.constant dense<0.000000e+00> : vector<8x128xf32>
    %78 = tpu.matmul %73, %3, %cst_55 {dimension_numbers = #tpu.dot_dimension_numbers<[1], [0], [0], [1], [0, 0, 1, 1], [], []>} : vector<8x32xf32>, vector<32x128xf32>, vector<8x128xf32> -> vector<8x128xf32>
    %79 = arith.addf %77, %78 : vector<8x128xf32>
    %80 = arith.negf %79 : vector<8x128xf32>
    %81 = math.exp %80 : vector<8x128xf32>
    %cst_56 = arith.constant 1.000000e+00 : f32
    %82 = vector.broadcast %cst_56 : f32 to vector<8x128xf32>
    %83 = arith.addf %82, %81 : vector<8x128xf32>
    %84 = arith.divf %82, %83 : vector<8x128xf32>
    %85 = vector.extract_strided_slice %84 {offsets = [0, 0], sizes = [8, 32], strides = [1, 1]} : vector<8x128xf32> to vector<8x32xf32>
    %86 = vector.extract_strided_slice %84 {offsets = [0, 32], sizes = [8, 32], strides = [1, 1]} : vector<8x128xf32> to vector<8x32xf32>
    %87 = vector.extract_strided_slice %84 {offsets = [0, 64], sizes = [8, 32], strides = [1, 1]} : vector<8x128xf32> to vector<8x32xf32>
    %88 = vector.extract_strided_slice %79 {offsets = [0, 96], sizes = [8, 32], strides = [1, 1]} : vector<8x128xf32> to vector<8x32xf32>
    %89 = math.tanh %88 : vector<8x32xf32>
    %90 = arith.mulf %86, %75 : vector<8x32xf32>
    %91 = arith.mulf %85, %89 : vector<8x32xf32>
    %92 = arith.addf %90, %91 : vector<8x32xf32>
    %93 = math.tanh %92 : vector<8x32xf32>
    %94 = arith.mulf %87, %93 : vector<8x32xf32>
    %c0_57 = arith.constant 0 : index
    %c0_58 = arith.constant 0 : index
    %c0_59 = arith.constant 0 : index
    %95 = vector.load %arg9[%c0_57, %c0_58, %c0_59] : memref<2x8x32xf32, #tpu.memory_space<vmem>>, vector<1x8x32xf32>
    %96 = vector.shape_cast %95 : vector<1x8x32xf32> to vector<8x32xf32>
    %97 = vector.shape_cast %94 : vector<8x32xf32> to vector<1x8x32xf32>
    tpu.vector_store %arg9[%c0_57, %c0_58, %c0_59], %97 {strides = array<i32>} : memref<2x8x32xf32, #tpu.memory_space<vmem>>, vector<1x8x32xf32>,
    %c0_60 = arith.constant 0 : index
    %c0_61 = arith.constant 0 : index
    %c0_62 = arith.constant 0 : index
    %98 = vector.load %arg10[%c0_60, %c0_61, %c0_62] : memref<2x8x32xf32, #tpu.memory_space<vmem>>, vector<1x8x32xf32>
    %99 = vector.shape_cast %98 : vector<1x8x32xf32> to vector<8x32xf32>
    %100 = vector.shape_cast %92 : vector<8x32xf32> to vector<1x8x32xf32>
    tpu.vector_store %arg10[%c0_60, %c0_61, %c0_62], %100 {strides = array<i32>} : memref<2x8x32xf32, #tpu.memory_space<vmem>>, vector<1x8x32xf32>,
    %c1_63 = arith.constant 1 : index
    %c0_64 = arith.constant 0 : index
    %c0_65 = arith.constant 0 : index
    %101 = vector.load %arg9[%c1_63, %c0_64, %c0_65] : memref<2x8x32xf32, #tpu.memory_space<vmem>>, vector<1x8x32xf32>
    %102 = vector.shape_cast %101 : vector<1x8x32xf32> to vector<8x32xf32>
    %c1_66 = arith.constant 1 : index
    %c0_67 = arith.constant 0 : index
    %c0_68 = arith.constant 0 : index
    %103 = vector.load %arg10[%c1_66, %c0_67, %c0_68] : memref<2x8x32xf32, #tpu.memory_space<vmem>>, vector<1x8x32xf32>
    %104 = vector.shape_cast %103 : vector<1x8x32xf32> to vector<8x32xf32>
    %cst_69 = arith.constant dense<0.000000e+00> : vector<8x128xf32>
    %105 = tpu.matmul %94, %4, %cst_69 {dimension_numbers = #tpu.dot_dimension_numbers<[1], [0], [0], [1], [0, 0, 1, 1], [], []>} : vector<8x32xf32>, vector<32x128xf32>, vector<8x128xf32> -> vector<8x128xf32>
    %cst_70 = arith.constant dense<0.000000e+00> : vector<8x128xf32>
    %106 = tpu.matmul %102, %5, %cst_70 {dimension_numbers = #tpu.dot_dimension_numbers<[1], [0], [0], [1], [0, 0, 1, 1], [], []>} : vector<8x32xf32>, vector<32x128xf32>, vector<8x128xf32> -> vector<8x128xf32>
    %107 = arith.addf %105, %106 : vector<8x128xf32>
    %108 = vector.broadcast %6 : vector<1x128xf32> to vector<8x128xf32>
    %109 = arith.addf %107, %108 : vector<8x128xf32>
    %110 = arith.negf %109 : vector<8x128xf32>
    %111 = math.exp %110 : vector<8x128xf32>
    %cst_71 = arith.constant 1.000000e+00 : f32
    %112 = vector.broadcast %cst_71 : f32 to vector<8x128xf32>
    %113 = arith.addf %112, %111 : vector<8x128xf32>
    %114 = arith.divf %112, %113 : vector<8x128xf32>
    %115 = vector.extract_strided_slice %114 {offsets = [0, 0], sizes = [8, 32], strides = [1, 1]} : vector<8x128xf32> to vector<8x32xf32>
    %116 = vector.extract_strided_slice %114 {offsets = [0, 32], sizes = [8, 32], strides = [1, 1]} : vector<8x128xf32> to vector<8x32xf32>
    %117 = vector.extract_strided_slice %114 {offsets = [0, 64], sizes = [8, 32], strides = [1, 1]} : vector<8x128xf32> to vector<8x32xf32>
    %118 = vector.extract_strided_slice %109 {offsets = [0, 96], sizes = [8, 32], strides = [1, 1]} : vector<8x128xf32> to vector<8x32xf32>
    %119 = math.tanh %118 : vector<8x32xf32>
    %120 = arith.mulf %116, %104 : vector<8x32xf32>
    %121 = arith.mulf %115, %119 : vector<8x32xf32>
    %122 = arith.addf %120, %121 : vector<8x32xf32>
    %123 = math.tanh %122 : vector<8x32xf32>
    %124 = arith.mulf %117, %123 : vector<8x32xf32>
    %c1_72 = arith.constant 1 : index
    %c0_73 = arith.constant 0 : index
    %c0_74 = arith.constant 0 : index
    %125 = vector.load %arg9[%c1_72, %c0_73, %c0_74] : memref<2x8x32xf32, #tpu.memory_space<vmem>>, vector<1x8x32xf32>
    %126 = vector.shape_cast %125 : vector<1x8x32xf32> to vector<8x32xf32>
    %127 = vector.shape_cast %124 : vector<8x32xf32> to vector<1x8x32xf32>
    tpu.vector_store %arg9[%c1_72, %c0_73, %c0_74], %127 {strides = array<i32>} : memref<2x8x32xf32, #tpu.memory_space<vmem>>, vector<1x8x32xf32>,
    %c1_75 = arith.constant 1 : index
    %c0_76 = arith.constant 0 : index
    %c0_77 = arith.constant 0 : index
    %128 = vector.load %arg10[%c1_75, %c0_76, %c0_77] : memref<2x8x32xf32, #tpu.memory_space<vmem>>, vector<1x8x32xf32>
    %129 = vector.shape_cast %128 : vector<1x8x32xf32> to vector<8x32xf32>
    %130 = vector.shape_cast %122 : vector<8x32xf32> to vector<1x8x32xf32>
    tpu.vector_store %arg10[%c1_75, %c0_76, %c0_77], %130 {strides = array<i32>} : memref<2x8x32xf32, #tpu.memory_space<vmem>>, vector<1x8x32xf32>,
    %c0_78 = arith.constant 0 : index
    %c0_79 = arith.constant 0 : index
    %c0_80 = arith.constant 0 : index
    %c32 = arith.constant 32 : index
    %131 = vector.load %arg7[%c0_78, %c0_79, %c0_80, %c32] : memref<1x1x8x256xf32, #tpu.memory_space<vmem>>, vector<1x1x8x32xf32>
    %132 = vector.shape_cast %131 : vector<1x1x8x32xf32> to vector<8x32xf32>
    %133 = vector.shape_cast %124 : vector<8x32xf32> to vector<1x1x8x32xf32>
    tpu.vector_store %arg7[%c0_78, %c0_79, %c0_80, %c32], %133 {strides = array<i32>} : memref<1x1x8x256xf32, #tpu.memory_space<vmem>>, vector<1x1x8x32xf32>,
    %c0_81 = arith.constant 0 : index
    %c0_82 = arith.constant 0 : index
    %c0_83 = arith.constant 0 : index
    %c32_84 = arith.constant 32 : index
    %134 = vector.load %arg8[%c0_81, %c0_82, %c0_83, %c32_84] : memref<1x1x8x256xf32, #tpu.memory_space<vmem>>, vector<1x1x8x32xf32>
    %135 = vector.shape_cast %134 : vector<1x1x8x32xf32> to vector<8x32xf32>
    %136 = vector.shape_cast %122 : vector<8x32xf32> to vector<1x1x8x32xf32>
    tpu.vector_store %arg8[%c0_81, %c0_82, %c0_83, %c32_84], %136 {strides = array<i32>} : memref<1x1x8x256xf32, #tpu.memory_space<vmem>>, vector<1x1x8x32xf32>,
    %c0_85 = arith.constant 0 : index
    %c0_86 = arith.constant 0 : index
    %c0_87 = arith.constant 0 : index
    %137 = vector.load %arg9[%c0_85, %c0_86, %c0_87] : memref<2x8x32xf32, #tpu.memory_space<vmem>>, vector<1x8x32xf32>
    %138 = vector.shape_cast %137 : vector<1x8x32xf32> to vector<8x32xf32>
    %c0_88 = arith.constant 0 : index
    %c0_89 = arith.constant 0 : index
    %c0_90 = arith.constant 0 : index
    %139 = vector.load %arg10[%c0_88, %c0_89, %c0_90] : memref<2x8x32xf32, #tpu.memory_space<vmem>>, vector<1x8x32xf32>
    %140 = vector.shape_cast %139 : vector<1x8x32xf32> to vector<8x32xf32>
    %c2 = arith.constant 2 : index
    %c0_91 = arith.constant 0 : index
    %c0_92 = arith.constant 0 : index
    %141 = vector.load %arg2[%c2, %c0_91, %c0_92] : memref<8x8x128xf32, #tpu.memory_space<vmem>>, vector<1x8x128xf32>
    %142 = vector.shape_cast %141 : vector<1x8x128xf32> to vector<8x128xf32>
    %cst_93 = arith.constant dense<0.000000e+00> : vector<8x128xf32>
    %143 = tpu.matmul %138, %3, %cst_93 {dimension_numbers = #tpu.dot_dimension_numbers<[1], [0], [0], [1], [0, 0, 1, 1], [], []>} : vector<8x32xf32>, vector<32x128xf32>, vector<8x128xf32> -> vector<8x128xf32>
    %144 = arith.addf %142, %143 : vector<8x128xf32>
    %145 = arith.negf %144 : vector<8x128xf32>
    %146 = math.exp %145 : vector<8x128xf32>
    %cst_94 = arith.constant 1.000000e+00 : f32
    %147 = vector.broadcast %cst_94 : f32 to vector<8x128xf32>
    %148 = arith.addf %147, %146 : vector<8x128xf32>
    %149 = arith.divf %147, %148 : vector<8x128xf32>
    %150 = vector.extract_strided_slice %149 {offsets = [0, 0], sizes = [8, 32], strides = [1, 1]} : vector<8x128xf32> to vector<8x32xf32>
    %151 = vector.extract_strided_slice %149 {offsets = [0, 32], sizes = [8, 32], strides = [1, 1]} : vector<8x128xf32> to vector<8x32xf32>
    %152 = vector.extract_strided_slice %149 {offsets = [0, 64], sizes = [8, 32], strides = [1, 1]} : vector<8x128xf32> to vector<8x32xf32>
    %153 = vector.extract_strided_slice %144 {offsets = [0, 96], sizes = [8, 32], strides = [1, 1]} : vector<8x128xf32> to vector<8x32xf32>
    %154 = math.tanh %153 : vector<8x32xf32>
    %155 = arith.mulf %151, %140 : vector<8x32xf32>
    %156 = arith.mulf %150, %154 : vector<8x32xf32>
    %157 = arith.addf %155, %156 : vector<8x32xf32>
    %158 = math.tanh %157 : vector<8x32xf32>
    %159 = arith.mulf %152, %158 : vector<8x32xf32>
    %c0_95 = arith.constant 0 : index
    %c0_96 = arith.constant 0 : index
    %c0_97 = arith.constant 0 : index
    %160 = vector.load %arg9[%c0_95, %c0_96, %c0_97] : memref<2x8x32xf32, #tpu.memory_space<vmem>>, vector<1x8x32xf32>
    %161 = vector.shape_cast %160 : vector<1x8x32xf32> to vector<8x32xf32>
    %162 = vector.shape_cast %159 : vector<8x32xf32> to vector<1x8x32xf32>
    tpu.vector_store %arg9[%c0_95, %c0_96, %c0_97], %162 {strides = array<i32>} : memref<2x8x32xf32, #tpu.memory_space<vmem>>, vector<1x8x32xf32>,
    %c0_98 = arith.constant 0 : index
    %c0_99 = arith.constant 0 : index
    %c0_100 = arith.constant 0 : index
    %163 = vector.load %arg10[%c0_98, %c0_99, %c0_100] : memref<2x8x32xf32, #tpu.memory_space<vmem>>, vector<1x8x32xf32>
    %164 = vector.shape_cast %163 : vector<1x8x32xf32> to vector<8x32xf32>
    %165 = vector.shape_cast %157 : vector<8x32xf32> to vector<1x8x32xf32>
    tpu.vector_store %arg10[%c0_98, %c0_99, %c0_100], %165 {strides = array<i32>} : memref<2x8x32xf32, #tpu.memory_space<vmem>>, vector<1x8x32xf32>,
    %c1_101 = arith.constant 1 : index
    %c0_102 = arith.constant 0 : index
    %c0_103 = arith.constant 0 : index
    %166 = vector.load %arg9[%c1_101, %c0_102, %c0_103] : memref<2x8x32xf32, #tpu.memory_space<vmem>>, vector<1x8x32xf32>
    %167 = vector.shape_cast %166 : vector<1x8x32xf32> to vector<8x32xf32>
    %c1_104 = arith.constant 1 : index
    %c0_105 = arith.constant 0 : index
    %c0_106 = arith.constant 0 : index
    %168 = vector.load %arg10[%c1_104, %c0_105, %c0_106] : memref<2x8x32xf32, #tpu.memory_space<vmem>>, vector<1x8x32xf32>
    %169 = vector.shape_cast %168 : vector<1x8x32xf32> to vector<8x32xf32>
    %cst_107 = arith.constant dense<0.000000e+00> : vector<8x128xf32>
    %170 = tpu.matmul %159, %4, %cst_107 {dimension_numbers = #tpu.dot_dimension_numbers<[1], [0], [0], [1], [0, 0, 1, 1], [], []>} : vector<8x32xf32>, vector<32x128xf32>, vector<8x128xf32> -> vector<8x128xf32>
    %cst_108 = arith.constant dense<0.000000e+00> : vector<8x128xf32>
    %171 = tpu.matmul %167, %5, %cst_108 {dimension_numbers = #tpu.dot_dimension_numbers<[1], [0], [0], [1], [0, 0, 1, 1], [], []>} : vector<8x32xf32>, vector<32x128xf32>, vector<8x128xf32> -> vector<8x128xf32>
    %172 = arith.addf %170, %171 : vector<8x128xf32>
    %173 = vector.broadcast %6 : vector<1x128xf32> to vector<8x128xf32>
    %174 = arith.addf %172, %173 : vector<8x128xf32>
    %175 = arith.negf %174 : vector<8x128xf32>
    %176 = math.exp %175 : vector<8x128xf32>
    %cst_109 = arith.constant 1.000000e+00 : f32
    %177 = vector.broadcast %cst_109 : f32 to vector<8x128xf32>
    %178 = arith.addf %177, %176 : vector<8x128xf32>
    %179 = arith.divf %177, %178 : vector<8x128xf32>
    %180 = vector.extract_strided_slice %179 {offsets = [0, 0], sizes = [8, 32], strides = [1, 1]} : vector<8x128xf32> to vector<8x32xf32>
    %181 = vector.extract_strided_slice %179 {offsets = [0, 32], sizes = [8, 32], strides = [1, 1]} : vector<8x128xf32> to vector<8x32xf32>
    %182 = vector.extract_strided_slice %179 {offsets = [0, 64], sizes = [8, 32], strides = [1, 1]} : vector<8x128xf32> to vector<8x32xf32>
    %183 = vector.extract_strided_slice %174 {offsets = [0, 96], sizes = [8, 32], strides = [1, 1]} : vector<8x128xf32> to vector<8x32xf32>
    %184 = math.tanh %183 : vector<8x32xf32>
    %185 = arith.mulf %181, %169 : vector<8x32xf32>
    %186 = arith.mulf %180, %184 : vector<8x32xf32>
    %187 = arith.addf %185, %186 : vector<8x32xf32>
    %188 = math.tanh %187 : vector<8x32xf32>
    %189 = arith.mulf %182, %188 : vector<8x32xf32>
    %c1_110 = arith.constant 1 : index
    %c0_111 = arith.constant 0 : index
    %c0_112 = arith.constant 0 : index
    %190 = vector.load %arg9[%c1_110, %c0_111, %c0_112] : memref<2x8x32xf32, #tpu.memory_space<vmem>>, vector<1x8x32xf32>
    %191 = vector.shape_cast %190 : vector<1x8x32xf32> to vector<8x32xf32>
    %192 = vector.shape_cast %189 : vector<8x32xf32> to vector<1x8x32xf32>
    tpu.vector_store %arg9[%c1_110, %c0_111, %c0_112], %192 {strides = array<i32>} : memref<2x8x32xf32, #tpu.memory_space<vmem>>, vector<1x8x32xf32>,
    %c1_113 = arith.constant 1 : index
    %c0_114 = arith.constant 0 : index
    %c0_115 = arith.constant 0 : index
    %193 = vector.load %arg10[%c1_113, %c0_114, %c0_115] : memref<2x8x32xf32, #tpu.memory_space<vmem>>, vector<1x8x32xf32>
    %194 = vector.shape_cast %193 : vector<1x8x32xf32> to vector<8x32xf32>
    %195 = vector.shape_cast %187 : vector<8x32xf32> to vector<1x8x32xf32>
    tpu.vector_store %arg10[%c1_113, %c0_114, %c0_115], %195 {strides = array<i32>} : memref<2x8x32xf32, #tpu.memory_space<vmem>>, vector<1x8x32xf32>,
    %c0_116 = arith.constant 0 : index
    %c0_117 = arith.constant 0 : index
    %c0_118 = arith.constant 0 : index
    %c64 = arith.constant 64 : index
    %196 = vector.load %arg7[%c0_116, %c0_117, %c0_118, %c64] : memref<1x1x8x256xf32, #tpu.memory_space<vmem>>, vector<1x1x8x32xf32>
    %197 = vector.shape_cast %196 : vector<1x1x8x32xf32> to vector<8x32xf32>
    %198 = vector.shape_cast %189 : vector<8x32xf32> to vector<1x1x8x32xf32>
    tpu.vector_store %arg7[%c0_116, %c0_117, %c0_118, %c64], %198 {strides = array<i32>} : memref<1x1x8x256xf32, #tpu.memory_space<vmem>>, vector<1x1x8x32xf32>,
    %c0_119 = arith.constant 0 : index
    %c0_120 = arith.constant 0 : index
    %c0_121 = arith.constant 0 : index
    %c64_122 = arith.constant 64 : index
    %199 = vector.load %arg8[%c0_119, %c0_120, %c0_121, %c64_122] : memref<1x1x8x256xf32, #tpu.memory_space<vmem>>, vector<1x1x8x32xf32>
    %200 = vector.shape_cast %199 : vector<1x1x8x32xf32> to vector<8x32xf32>
    %201 = vector.shape_cast %187 : vector<8x32xf32> to vector<1x1x8x32xf32>
    tpu.vector_store %arg8[%c0_119, %c0_120, %c0_121, %c64_122], %201 {strides = array<i32>} : memref<1x1x8x256xf32, #tpu.memory_space<vmem>>, vector<1x1x8x32xf32>,
    %c0_123 = arith.constant 0 : index
    %c0_124 = arith.constant 0 : index
    %c0_125 = arith.constant 0 : index
    %202 = vector.load %arg9[%c0_123, %c0_124, %c0_125] : memref<2x8x32xf32, #tpu.memory_space<vmem>>, vector<1x8x32xf32>
    %203 = vector.shape_cast %202 : vector<1x8x32xf32> to vector<8x32xf32>
    %c0_126 = arith.constant 0 : index
    %c0_127 = arith.constant 0 : index
    %c0_128 = arith.constant 0 : index
    %204 = vector.load %arg10[%c0_126, %c0_127, %c0_128] : memref<2x8x32xf32, #tpu.memory_space<vmem>>, vector<1x8x32xf32>
    %205 = vector.shape_cast %204 : vector<1x8x32xf32> to vector<8x32xf32>
    %c3 = arith.constant 3 : index
    %c0_129 = arith.constant 0 : index
    %c0_130 = arith.constant 0 : index
    %206 = vector.load %arg2[%c3, %c0_129, %c0_130] : memref<8x8x128xf32, #tpu.memory_space<vmem>>, vector<1x8x128xf32>
    %207 = vector.shape_cast %206 : vector<1x8x128xf32> to vector<8x128xf32>
    %cst_131 = arith.constant dense<0.000000e+00> : vector<8x128xf32>
    %208 = tpu.matmul %203, %3, %cst_131 {dimension_numbers = #tpu.dot_dimension_numbers<[1], [0], [0], [1], [0, 0, 1, 1], [], []>} : vector<8x32xf32>, vector<32x128xf32>, vector<8x128xf32> -> vector<8x128xf32>
    %209 = arith.addf %207, %208 : vector<8x128xf32>
    %210 = arith.negf %209 : vector<8x128xf32>
    %211 = math.exp %210 : vector<8x128xf32>
    %cst_132 = arith.constant 1.000000e+00 : f32
    %212 = vector.broadcast %cst_132 : f32 to vector<8x128xf32>
    %213 = arith.addf %212, %211 : vector<8x128xf32>
    %214 = arith.divf %212, %213 : vector<8x128xf32>
    %215 = vector.extract_strided_slice %214 {offsets = [0, 0], sizes = [8, 32], strides = [1, 1]} : vector<8x128xf32> to vector<8x32xf32>
    %216 = vector.extract_strided_slice %214 {offsets = [0, 32], sizes = [8, 32], strides = [1, 1]} : vector<8x128xf32> to vector<8x32xf32>
    %217 = vector.extract_strided_slice %214 {offsets = [0, 64], sizes = [8, 32], strides = [1, 1]} : vector<8x128xf32> to vector<8x32xf32>
    %218 = vector.extract_strided_slice %209 {offsets = [0, 96], sizes = [8, 32], strides = [1, 1]} : vector<8x128xf32> to vector<8x32xf32>
    %219 = math.tanh %218 : vector<8x32xf32>
    %220 = arith.mulf %216, %205 : vector<8x32xf32>
    %221 = arith.mulf %215, %219 : vector<8x32xf32>
    %222 = arith.addf %220, %221 : vector<8x32xf32>
    %223 = math.tanh %222 : vector<8x32xf32>
    %224 = arith.mulf %217, %223 : vector<8x32xf32>
    %c0_133 = arith.constant 0 : index
    %c0_134 = arith.constant 0 : index
    %c0_135 = arith.constant 0 : index
    %225 = vector.load %arg9[%c0_133, %c0_134, %c0_135] : memref<2x8x32xf32, #tpu.memory_space<vmem>>, vector<1x8x32xf32>
    %226 = vector.shape_cast %225 : vector<1x8x32xf32> to vector<8x32xf32>
    %227 = vector.shape_cast %224 : vector<8x32xf32> to vector<1x8x32xf32>
    tpu.vector_store %arg9[%c0_133, %c0_134, %c0_135], %227 {strides = array<i32>} : memref<2x8x32xf32, #tpu.memory_space<vmem>>, vector<1x8x32xf32>,
    %c0_136 = arith.constant 0 : index
    %c0_137 = arith.constant 0 : index
    %c0_138 = arith.constant 0 : index
    %228 = vector.load %arg10[%c0_136, %c0_137, %c0_138] : memref<2x8x32xf32, #tpu.memory_space<vmem>>, vector<1x8x32xf32>
    %229 = vector.shape_cast %228 : vector<1x8x32xf32> to vector<8x32xf32>
    %230 = vector.shape_cast %222 : vector<8x32xf32> to vector<1x8x32xf32>
    tpu.vector_store %arg10[%c0_136, %c0_137, %c0_138], %230 {strides = array<i32>} : memref<2x8x32xf32, #tpu.memory_space<vmem>>, vector<1x8x32xf32>,
    %c1_139 = arith.constant 1 : index
    %c0_140 = arith.constant 0 : index
    %c0_141 = arith.constant 0 : index
    %231 = vector.load %arg9[%c1_139, %c0_140, %c0_141] : memref<2x8x32xf32, #tpu.memory_space<vmem>>, vector<1x8x32xf32>
    %232 = vector.shape_cast %231 : vector<1x8x32xf32> to vector<8x32xf32>
    %c1_142 = arith.constant 1 : index
    %c0_143 = arith.constant 0 : index
    %c0_144 = arith.constant 0 : index
    %233 = vector.load %arg10[%c1_142, %c0_143, %c0_144] : memref<2x8x32xf32, #tpu.memory_space<vmem>>, vector<1x8x32xf32>
    %234 = vector.shape_cast %233 : vector<1x8x32xf32> to vector<8x32xf32>
    %cst_145 = arith.constant dense<0.000000e+00> : vector<8x128xf32>
    %235 = tpu.matmul %224, %4, %cst_145 {dimension_numbers = #tpu.dot_dimension_numbers<[1], [0], [0], [1], [0, 0, 1, 1], [], []>} : vector<8x32xf32>, vector<32x128xf32>, vector<8x128xf32> -> vector<8x128xf32>
    %cst_146 = arith.constant dense<0.000000e+00> : vector<8x128xf32>
    %236 = tpu.matmul %232, %5, %cst_146 {dimension_numbers = #tpu.dot_dimension_numbers<[1], [0], [0], [1], [0, 0, 1, 1], [], []>} : vector<8x32xf32>, vector<32x128xf32>, vector<8x128xf32> -> vector<8x128xf32>
    %237 = arith.addf %235, %236 : vector<8x128xf32>
    %238 = vector.broadcast %6 : vector<1x128xf32> to vector<8x128xf32>
    %239 = arith.addf %237, %238 : vector<8x128xf32>
    %240 = arith.negf %239 : vector<8x128xf32>
    %241 = math.exp %240 : vector<8x128xf32>
    %cst_147 = arith.constant 1.000000e+00 : f32
    %242 = vector.broadcast %cst_147 : f32 to vector<8x128xf32>
    %243 = arith.addf %242, %241 : vector<8x128xf32>
    %244 = arith.divf %242, %243 : vector<8x128xf32>
    %245 = vector.extract_strided_slice %244 {offsets = [0, 0], sizes = [8, 32], strides = [1, 1]} : vector<8x128xf32> to vector<8x32xf32>
    %246 = vector.extract_strided_slice %244 {offsets = [0, 32], sizes = [8, 32], strides = [1, 1]} : vector<8x128xf32> to vector<8x32xf32>
    %247 = vector.extract_strided_slice %244 {offsets = [0, 64], sizes = [8, 32], strides = [1, 1]} : vector<8x128xf32> to vector<8x32xf32>
    %248 = vector.extract_strided_slice %239 {offsets = [0, 96], sizes = [8, 32], strides = [1, 1]} : vector<8x128xf32> to vector<8x32xf32>
    %249 = math.tanh %248 : vector<8x32xf32>
    %250 = arith.mulf %246, %234 : vector<8x32xf32>
    %251 = arith.mulf %245, %249 : vector<8x32xf32>
    %252 = arith.addf %250, %251 : vector<8x32xf32>
    %253 = math.tanh %252 : vector<8x32xf32>
    %254 = arith.mulf %247, %253 : vector<8x32xf32>
    %c1_148 = arith.constant 1 : index
    %c0_149 = arith.constant 0 : index
    %c0_150 = arith.constant 0 : index
    %255 = vector.load %arg9[%c1_148, %c0_149, %c0_150] : memref<2x8x32xf32, #tpu.memory_space<vmem>>, vector<1x8x32xf32>
    %256 = vector.shape_cast %255 : vector<1x8x32xf32> to vector<8x32xf32>
    %257 = vector.shape_cast %254 : vector<8x32xf32> to vector<1x8x32xf32>
    tpu.vector_store %arg9[%c1_148, %c0_149, %c0_150], %257 {strides = array<i32>} : memref<2x8x32xf32, #tpu.memory_space<vmem>>, vector<1x8x32xf32>,
    %c1_151 = arith.constant 1 : index
    %c0_152 = arith.constant 0 : index
    %c0_153 = arith.constant 0 : index
    %258 = vector.load %arg10[%c1_151, %c0_152, %c0_153] : memref<2x8x32xf32, #tpu.memory_space<vmem>>, vector<1x8x32xf32>
    %259 = vector.shape_cast %258 : vector<1x8x32xf32> to vector<8x32xf32>
    %260 = vector.shape_cast %252 : vector<8x32xf32> to vector<1x8x32xf32>
    tpu.vector_store %arg10[%c1_151, %c0_152, %c0_153], %260 {strides = array<i32>} : memref<2x8x32xf32, #tpu.memory_space<vmem>>, vector<1x8x32xf32>,
    %c0_154 = arith.constant 0 : index
    %c0_155 = arith.constant 0 : index
    %c0_156 = arith.constant 0 : index
    %c96 = arith.constant 96 : index
    %261 = vector.load %arg7[%c0_154, %c0_155, %c0_156, %c96] : memref<1x1x8x256xf32, #tpu.memory_space<vmem>>, vector<1x1x8x32xf32>
    %262 = vector.shape_cast %261 : vector<1x1x8x32xf32> to vector<8x32xf32>
    %263 = vector.shape_cast %254 : vector<8x32xf32> to vector<1x1x8x32xf32>
    tpu.vector_store %arg7[%c0_154, %c0_155, %c0_156, %c96], %263 {strides = array<i32>} : memref<1x1x8x256xf32, #tpu.memory_space<vmem>>, vector<1x1x8x32xf32>,
    %c0_157 = arith.constant 0 : index
    %c0_158 = arith.constant 0 : index
    %c0_159 = arith.constant 0 : index
    %c96_160 = arith.constant 96 : index
    %264 = vector.load %arg8[%c0_157, %c0_158, %c0_159, %c96_160] : memref<1x1x8x256xf32, #tpu.memory_space<vmem>>, vector<1x1x8x32xf32>
    %265 = vector.shape_cast %264 : vector<1x1x8x32xf32> to vector<8x32xf32>
    %266 = vector.shape_cast %252 : vector<8x32xf32> to vector<1x1x8x32xf32>
    tpu.vector_store %arg8[%c0_157, %c0_158, %c0_159, %c96_160], %266 {strides = array<i32>} : memref<1x1x8x256xf32, #tpu.memory_space<vmem>>, vector<1x1x8x32xf32>,
    %c0_161 = arith.constant 0 : index
    %c0_162 = arith.constant 0 : index
    %c0_163 = arith.constant 0 : index
    %267 = vector.load %arg9[%c0_161, %c0_162, %c0_163] : memref<2x8x32xf32, #tpu.memory_space<vmem>>, vector<1x8x32xf32>
    %268 = vector.shape_cast %267 : vector<1x8x32xf32> to vector<8x32xf32>
    %c0_164 = arith.constant 0 : index
    %c0_165 = arith.constant 0 : index
    %c0_166 = arith.constant 0 : index
    %269 = vector.load %arg10[%c0_164, %c0_165, %c0_166] : memref<2x8x32xf32, #tpu.memory_space<vmem>>, vector<1x8x32xf32>
    %270 = vector.shape_cast %269 : vector<1x8x32xf32> to vector<8x32xf32>
    %c4 = arith.constant 4 : index
    %c0_167 = arith.constant 0 : index
    %c0_168 = arith.constant 0 : index
    %271 = vector.load %arg2[%c4, %c0_167, %c0_168] : memref<8x8x128xf32, #tpu.memory_space<vmem>>, vector<1x8x128xf32>
    %272 = vector.shape_cast %271 : vector<1x8x128xf32> to vector<8x128xf32>
    %cst_169 = arith.constant dense<0.000000e+00> : vector<8x128xf32>
    %273 = tpu.matmul %268, %3, %cst_169 {dimension_numbers = #tpu.dot_dimension_numbers<[1], [0], [0], [1], [0, 0, 1, 1], [], []>} : vector<8x32xf32>, vector<32x128xf32>, vector<8x128xf32> -> vector<8x128xf32>
    %274 = arith.addf %272, %273 : vector<8x128xf32>
    %275 = arith.negf %274 : vector<8x128xf32>
    %276 = math.exp %275 : vector<8x128xf32>
    %cst_170 = arith.constant 1.000000e+00 : f32
    %277 = vector.broadcast %cst_170 : f32 to vector<8x128xf32>
    %278 = arith.addf %277, %276 : vector<8x128xf32>
    %279 = arith.divf %277, %278 : vector<8x128xf32>
    %280 = vector.extract_strided_slice %279 {offsets = [0, 0], sizes = [8, 32], strides = [1, 1]} : vector<8x128xf32> to vector<8x32xf32>
    %281 = vector.extract_strided_slice %279 {offsets = [0, 32], sizes = [8, 32], strides = [1, 1]} : vector<8x128xf32> to vector<8x32xf32>
    %282 = vector.extract_strided_slice %279 {offsets = [0, 64], sizes = [8, 32], strides = [1, 1]} : vector<8x128xf32> to vector<8x32xf32>
    %283 = vector.extract_strided_slice %274 {offsets = [0, 96], sizes = [8, 32], strides = [1, 1]} : vector<8x128xf32> to vector<8x32xf32>
    %284 = math.tanh %283 : vector<8x32xf32>
    %285 = arith.mulf %281, %270 : vector<8x32xf32>
    %286 = arith.mulf %280, %284 : vector<8x32xf32>
    %287 = arith.addf %285, %286 : vector<8x32xf32>
    %288 = math.tanh %287 : vector<8x32xf32>
    %289 = arith.mulf %282, %288 : vector<8x32xf32>
    %c0_171 = arith.constant 0 : index
    %c0_172 = arith.constant 0 : index
    %c0_173 = arith.constant 0 : index
    %290 = vector.load %arg9[%c0_171, %c0_172, %c0_173] : memref<2x8x32xf32, #tpu.memory_space<vmem>>, vector<1x8x32xf32>
    %291 = vector.shape_cast %290 : vector<1x8x32xf32> to vector<8x32xf32>
    %292 = vector.shape_cast %289 : vector<8x32xf32> to vector<1x8x32xf32>
    tpu.vector_store %arg9[%c0_171, %c0_172, %c0_173], %292 {strides = array<i32>} : memref<2x8x32xf32, #tpu.memory_space<vmem>>, vector<1x8x32xf32>,
    %c0_174 = arith.constant 0 : index
    %c0_175 = arith.constant 0 : index
    %c0_176 = arith.constant 0 : index
    %293 = vector.load %arg10[%c0_174, %c0_175, %c0_176] : memref<2x8x32xf32, #tpu.memory_space<vmem>>, vector<1x8x32xf32>
    %294 = vector.shape_cast %293 : vector<1x8x32xf32> to vector<8x32xf32>
    %295 = vector.shape_cast %287 : vector<8x32xf32> to vector<1x8x32xf32>
    tpu.vector_store %arg10[%c0_174, %c0_175, %c0_176], %295 {strides = array<i32>} : memref<2x8x32xf32, #tpu.memory_space<vmem>>, vector<1x8x32xf32>,
    %c1_177 = arith.constant 1 : index
    %c0_178 = arith.constant 0 : index
    %c0_179 = arith.constant 0 : index
    %296 = vector.load %arg9[%c1_177, %c0_178, %c0_179] : memref<2x8x32xf32, #tpu.memory_space<vmem>>, vector<1x8x32xf32>
    %297 = vector.shape_cast %296 : vector<1x8x32xf32> to vector<8x32xf32>
    %c1_180 = arith.constant 1 : index
    %c0_181 = arith.constant 0 : index
    %c0_182 = arith.constant 0 : index
    %298 = vector.load %arg10[%c1_180, %c0_181, %c0_182] : memref<2x8x32xf32, #tpu.memory_space<vmem>>, vector<1x8x32xf32>
    %299 = vector.shape_cast %298 : vector<1x8x32xf32> to vector<8x32xf32>
    %cst_183 = arith.constant dense<0.000000e+00> : vector<8x128xf32>
    %300 = tpu.matmul %289, %4, %cst_183 {dimension_numbers = #tpu.dot_dimension_numbers<[1], [0], [0], [1], [0, 0, 1, 1], [], []>} : vector<8x32xf32>, vector<32x128xf32>, vector<8x128xf32> -> vector<8x128xf32>
    %cst_184 = arith.constant dense<0.000000e+00> : vector<8x128xf32>
    %301 = tpu.matmul %297, %5, %cst_184 {dimension_numbers = #tpu.dot_dimension_numbers<[1], [0], [0], [1], [0, 0, 1, 1], [], []>} : vector<8x32xf32>, vector<32x128xf32>, vector<8x128xf32> -> vector<8x128xf32>
    %302 = arith.addf %300, %301 : vector<8x128xf32>
    %303 = vector.broadcast %6 : vector<1x128xf32> to vector<8x128xf32>
    %304 = arith.addf %302, %303 : vector<8x128xf32>
    %305 = arith.negf %304 : vector<8x128xf32>
    %306 = math.exp %305 : vector<8x128xf32>
    %cst_185 = arith.constant 1.000000e+00 : f32
    %307 = vector.broadcast %cst_185 : f32 to vector<8x128xf32>
    %308 = arith.addf %307, %306 : vector<8x128xf32>
    %309 = arith.divf %307, %308 : vector<8x128xf32>
    %310 = vector.extract_strided_slice %309 {offsets = [0, 0], sizes = [8, 32], strides = [1, 1]} : vector<8x128xf32> to vector<8x32xf32>
    %311 = vector.extract_strided_slice %309 {offsets = [0, 32], sizes = [8, 32], strides = [1, 1]} : vector<8x128xf32> to vector<8x32xf32>
    %312 = vector.extract_strided_slice %309 {offsets = [0, 64], sizes = [8, 32], strides = [1, 1]} : vector<8x128xf32> to vector<8x32xf32>
    %313 = vector.extract_strided_slice %304 {offsets = [0, 96], sizes = [8, 32], strides = [1, 1]} : vector<8x128xf32> to vector<8x32xf32>
    %314 = math.tanh %313 : vector<8x32xf32>
    %315 = arith.mulf %311, %299 : vector<8x32xf32>
    %316 = arith.mulf %310, %314 : vector<8x32xf32>
    %317 = arith.addf %315, %316 : vector<8x32xf32>
    %318 = math.tanh %317 : vector<8x32xf32>
    %319 = arith.mulf %312, %318 : vector<8x32xf32>
    %c1_186 = arith.constant 1 : index
    %c0_187 = arith.constant 0 : index
    %c0_188 = arith.constant 0 : index
    %320 = vector.load %arg9[%c1_186, %c0_187, %c0_188] : memref<2x8x32xf32, #tpu.memory_space<vmem>>, vector<1x8x32xf32>
    %321 = vector.shape_cast %320 : vector<1x8x32xf32> to vector<8x32xf32>
    %322 = vector.shape_cast %319 : vector<8x32xf32> to vector<1x8x32xf32>
    tpu.vector_store %arg9[%c1_186, %c0_187, %c0_188], %322 {strides = array<i32>} : memref<2x8x32xf32, #tpu.memory_space<vmem>>, vector<1x8x32xf32>,
    %c1_189 = arith.constant 1 : index
    %c0_190 = arith.constant 0 : index
    %c0_191 = arith.constant 0 : index
    %323 = vector.load %arg10[%c1_189, %c0_190, %c0_191] : memref<2x8x32xf32, #tpu.memory_space<vmem>>, vector<1x8x32xf32>
    %324 = vector.shape_cast %323 : vector<1x8x32xf32> to vector<8x32xf32>
    %325 = vector.shape_cast %317 : vector<8x32xf32> to vector<1x8x32xf32>
    tpu.vector_store %arg10[%c1_189, %c0_190, %c0_191], %325 {strides = array<i32>} : memref<2x8x32xf32, #tpu.memory_space<vmem>>, vector<1x8x32xf32>,
    %c0_192 = arith.constant 0 : index
    %c0_193 = arith.constant 0 : index
    %c0_194 = arith.constant 0 : index
    %c128 = arith.constant 128 : index
    %326 = vector.load %arg7[%c0_192, %c0_193, %c0_194, %c128] : memref<1x1x8x256xf32, #tpu.memory_space<vmem>>, vector<1x1x8x32xf32>
    %327 = vector.shape_cast %326 : vector<1x1x8x32xf32> to vector<8x32xf32>
    %328 = vector.shape_cast %319 : vector<8x32xf32> to vector<1x1x8x32xf32>
    tpu.vector_store %arg7[%c0_192, %c0_193, %c0_194, %c128], %328 {strides = array<i32>} : memref<1x1x8x256xf32, #tpu.memory_space<vmem>>, vector<1x1x8x32xf32>,
    %c0_195 = arith.constant 0 : index
    %c0_196 = arith.constant 0 : index
    %c0_197 = arith.constant 0 : index
    %c128_198 = arith.constant 128 : index
    %329 = vector.load %arg8[%c0_195, %c0_196, %c0_197, %c128_198] : memref<1x1x8x256xf32, #tpu.memory_space<vmem>>, vector<1x1x8x32xf32>
    %330 = vector.shape_cast %329 : vector<1x1x8x32xf32> to vector<8x32xf32>
    %331 = vector.shape_cast %317 : vector<8x32xf32> to vector<1x1x8x32xf32>
    tpu.vector_store %arg8[%c0_195, %c0_196, %c0_197, %c128_198], %331 {strides = array<i32>} : memref<1x1x8x256xf32, #tpu.memory_space<vmem>>, vector<1x1x8x32xf32>,
    %c0_199 = arith.constant 0 : index
    %c0_200 = arith.constant 0 : index
    %c0_201 = arith.constant 0 : index
    %332 = vector.load %arg9[%c0_199, %c0_200, %c0_201] : memref<2x8x32xf32, #tpu.memory_space<vmem>>, vector<1x8x32xf32>
    %333 = vector.shape_cast %332 : vector<1x8x32xf32> to vector<8x32xf32>
    %c0_202 = arith.constant 0 : index
    %c0_203 = arith.constant 0 : index
    %c0_204 = arith.constant 0 : index
    %334 = vector.load %arg10[%c0_202, %c0_203, %c0_204] : memref<2x8x32xf32, #tpu.memory_space<vmem>>, vector<1x8x32xf32>
    %335 = vector.shape_cast %334 : vector<1x8x32xf32> to vector<8x32xf32>
    %c5 = arith.constant 5 : index
    %c0_205 = arith.constant 0 : index
    %c0_206 = arith.constant 0 : index
    %336 = vector.load %arg2[%c5, %c0_205, %c0_206] : memref<8x8x128xf32, #tpu.memory_space<vmem>>, vector<1x8x128xf32>
    %337 = vector.shape_cast %336 : vector<1x8x128xf32> to vector<8x128xf32>
    %cst_207 = arith.constant dense<0.000000e+00> : vector<8x128xf32>
    %338 = tpu.matmul %333, %3, %cst_207 {dimension_numbers = #tpu.dot_dimension_numbers<[1], [0], [0], [1], [0, 0, 1, 1], [], []>} : vector<8x32xf32>, vector<32x128xf32>, vector<8x128xf32> -> vector<8x128xf32>
    %339 = arith.addf %337, %338 : vector<8x128xf32>
    %340 = arith.negf %339 : vector<8x128xf32>
    %341 = math.exp %340 : vector<8x128xf32>
    %cst_208 = arith.constant 1.000000e+00 : f32
    %342 = vector.broadcast %cst_208 : f32 to vector<8x128xf32>
    %343 = arith.addf %342, %341 : vector<8x128xf32>
    %344 = arith.divf %342, %343 : vector<8x128xf32>
    %345 = vector.extract_strided_slice %344 {offsets = [0, 0], sizes = [8, 32], strides = [1, 1]} : vector<8x128xf32> to vector<8x32xf32>
    %346 = vector.extract_strided_slice %344 {offsets = [0, 32], sizes = [8, 32], strides = [1, 1]} : vector<8x128xf32> to vector<8x32xf32>
    %347 = vector.extract_strided_slice %344 {offsets = [0, 64], sizes = [8, 32], strides = [1, 1]} : vector<8x128xf32> to vector<8x32xf32>
    %348 = vector.extract_strided_slice %339 {offsets = [0, 96], sizes = [8, 32], strides = [1, 1]} : vector<8x128xf32> to vector<8x32xf32>
    %349 = math.tanh %348 : vector<8x32xf32>
    %350 = arith.mulf %346, %335 : vector<8x32xf32>
    %351 = arith.mulf %345, %349 : vector<8x32xf32>
    %352 = arith.addf %350, %351 : vector<8x32xf32>
    %353 = math.tanh %352 : vector<8x32xf32>
    %354 = arith.mulf %347, %353 : vector<8x32xf32>
    %c0_209 = arith.constant 0 : index
    %c0_210 = arith.constant 0 : index
    %c0_211 = arith.constant 0 : index
    %355 = vector.load %arg9[%c0_209, %c0_210, %c0_211] : memref<2x8x32xf32, #tpu.memory_space<vmem>>, vector<1x8x32xf32>
    %356 = vector.shape_cast %355 : vector<1x8x32xf32> to vector<8x32xf32>
    %357 = vector.shape_cast %354 : vector<8x32xf32> to vector<1x8x32xf32>
    tpu.vector_store %arg9[%c0_209, %c0_210, %c0_211], %357 {strides = array<i32>} : memref<2x8x32xf32, #tpu.memory_space<vmem>>, vector<1x8x32xf32>,
    %c0_212 = arith.constant 0 : index
    %c0_213 = arith.constant 0 : index
    %c0_214 = arith.constant 0 : index
    %358 = vector.load %arg10[%c0_212, %c0_213, %c0_214] : memref<2x8x32xf32, #tpu.memory_space<vmem>>, vector<1x8x32xf32>
    %359 = vector.shape_cast %358 : vector<1x8x32xf32> to vector<8x32xf32>
    %360 = vector.shape_cast %352 : vector<8x32xf32> to vector<1x8x32xf32>
    tpu.vector_store %arg10[%c0_212, %c0_213, %c0_214], %360 {strides = array<i32>} : memref<2x8x32xf32, #tpu.memory_space<vmem>>, vector<1x8x32xf32>,
    %c1_215 = arith.constant 1 : index
    %c0_216 = arith.constant 0 : index
    %c0_217 = arith.constant 0 : index
    %361 = vector.load %arg9[%c1_215, %c0_216, %c0_217] : memref<2x8x32xf32, #tpu.memory_space<vmem>>, vector<1x8x32xf32>
    %362 = vector.shape_cast %361 : vector<1x8x32xf32> to vector<8x32xf32>
    %c1_218 = arith.constant 1 : index
    %c0_219 = arith.constant 0 : index
    %c0_220 = arith.constant 0 : index
    %363 = vector.load %arg10[%c1_218, %c0_219, %c0_220] : memref<2x8x32xf32, #tpu.memory_space<vmem>>, vector<1x8x32xf32>
    %364 = vector.shape_cast %363 : vector<1x8x32xf32> to vector<8x32xf32>
    %cst_221 = arith.constant dense<0.000000e+00> : vector<8x128xf32>
    %365 = tpu.matmul %354, %4, %cst_221 {dimension_numbers = #tpu.dot_dimension_numbers<[1], [0], [0], [1], [0, 0, 1, 1], [], []>} : vector<8x32xf32>, vector<32x128xf32>, vector<8x128xf32> -> vector<8x128xf32>
    %cst_222 = arith.constant dense<0.000000e+00> : vector<8x128xf32>
    %366 = tpu.matmul %362, %5, %cst_222 {dimension_numbers = #tpu.dot_dimension_numbers<[1], [0], [0], [1], [0, 0, 1, 1], [], []>} : vector<8x32xf32>, vector<32x128xf32>, vector<8x128xf32> -> vector<8x128xf32>
    %367 = arith.addf %365, %366 : vector<8x128xf32>
    %368 = vector.broadcast %6 : vector<1x128xf32> to vector<8x128xf32>
    %369 = arith.addf %367, %368 : vector<8x128xf32>
    %370 = arith.negf %369 : vector<8x128xf32>
    %371 = math.exp %370 : vector<8x128xf32>
    %cst_223 = arith.constant 1.000000e+00 : f32
    %372 = vector.broadcast %cst_223 : f32 to vector<8x128xf32>
    %373 = arith.addf %372, %371 : vector<8x128xf32>
    %374 = arith.divf %372, %373 : vector<8x128xf32>
    %375 = vector.extract_strided_slice %374 {offsets = [0, 0], sizes = [8, 32], strides = [1, 1]} : vector<8x128xf32> to vector<8x32xf32>
    %376 = vector.extract_strided_slice %374 {offsets = [0, 32], sizes = [8, 32], strides = [1, 1]} : vector<8x128xf32> to vector<8x32xf32>
    %377 = vector.extract_strided_slice %374 {offsets = [0, 64], sizes = [8, 32], strides = [1, 1]} : vector<8x128xf32> to vector<8x32xf32>
    %378 = vector.extract_strided_slice %369 {offsets = [0, 96], sizes = [8, 32], strides = [1, 1]} : vector<8x128xf32> to vector<8x32xf32>
    %379 = math.tanh %378 : vector<8x32xf32>
    %380 = arith.mulf %376, %364 : vector<8x32xf32>
    %381 = arith.mulf %375, %379 : vector<8x32xf32>
    %382 = arith.addf %380, %381 : vector<8x32xf32>
    %383 = math.tanh %382 : vector<8x32xf32>
    %384 = arith.mulf %377, %383 : vector<8x32xf32>
    %c1_224 = arith.constant 1 : index
    %c0_225 = arith.constant 0 : index
    %c0_226 = arith.constant 0 : index
    %385 = vector.load %arg9[%c1_224, %c0_225, %c0_226] : memref<2x8x32xf32, #tpu.memory_space<vmem>>, vector<1x8x32xf32>
    %386 = vector.shape_cast %385 : vector<1x8x32xf32> to vector<8x32xf32>
    %387 = vector.shape_cast %384 : vector<8x32xf32> to vector<1x8x32xf32>
    tpu.vector_store %arg9[%c1_224, %c0_225, %c0_226], %387 {strides = array<i32>} : memref<2x8x32xf32, #tpu.memory_space<vmem>>, vector<1x8x32xf32>,
    %c1_227 = arith.constant 1 : index
    %c0_228 = arith.constant 0 : index
    %c0_229 = arith.constant 0 : index
    %388 = vector.load %arg10[%c1_227, %c0_228, %c0_229] : memref<2x8x32xf32, #tpu.memory_space<vmem>>, vector<1x8x32xf32>
    %389 = vector.shape_cast %388 : vector<1x8x32xf32> to vector<8x32xf32>
    %390 = vector.shape_cast %382 : vector<8x32xf32> to vector<1x8x32xf32>
    tpu.vector_store %arg10[%c1_227, %c0_228, %c0_229], %390 {strides = array<i32>} : memref<2x8x32xf32, #tpu.memory_space<vmem>>, vector<1x8x32xf32>,
    %c0_230 = arith.constant 0 : index
    %c0_231 = arith.constant 0 : index
    %c0_232 = arith.constant 0 : index
    %c160 = arith.constant 160 : index
    %391 = vector.load %arg7[%c0_230, %c0_231, %c0_232, %c160] : memref<1x1x8x256xf32, #tpu.memory_space<vmem>>, vector<1x1x8x32xf32>
    %392 = vector.shape_cast %391 : vector<1x1x8x32xf32> to vector<8x32xf32>
    %393 = vector.shape_cast %384 : vector<8x32xf32> to vector<1x1x8x32xf32>
    tpu.vector_store %arg7[%c0_230, %c0_231, %c0_232, %c160], %393 {strides = array<i32>} : memref<1x1x8x256xf32, #tpu.memory_space<vmem>>, vector<1x1x8x32xf32>,
    %c0_233 = arith.constant 0 : index
    %c0_234 = arith.constant 0 : index
    %c0_235 = arith.constant 0 : index
    %c160_236 = arith.constant 160 : index
    %394 = vector.load %arg8[%c0_233, %c0_234, %c0_235, %c160_236] : memref<1x1x8x256xf32, #tpu.memory_space<vmem>>, vector<1x1x8x32xf32>
    %395 = vector.shape_cast %394 : vector<1x1x8x32xf32> to vector<8x32xf32>
    %396 = vector.shape_cast %382 : vector<8x32xf32> to vector<1x1x8x32xf32>
    tpu.vector_store %arg8[%c0_233, %c0_234, %c0_235, %c160_236], %396 {strides = array<i32>} : memref<1x1x8x256xf32, #tpu.memory_space<vmem>>, vector<1x1x8x32xf32>,
    %c0_237 = arith.constant 0 : index
    %c0_238 = arith.constant 0 : index
    %c0_239 = arith.constant 0 : index
    %397 = vector.load %arg9[%c0_237, %c0_238, %c0_239] : memref<2x8x32xf32, #tpu.memory_space<vmem>>, vector<1x8x32xf32>
    %398 = vector.shape_cast %397 : vector<1x8x32xf32> to vector<8x32xf32>
    %c0_240 = arith.constant 0 : index
    %c0_241 = arith.constant 0 : index
    %c0_242 = arith.constant 0 : index
    %399 = vector.load %arg10[%c0_240, %c0_241, %c0_242] : memref<2x8x32xf32, #tpu.memory_space<vmem>>, vector<1x8x32xf32>
    %400 = vector.shape_cast %399 : vector<1x8x32xf32> to vector<8x32xf32>
    %c6 = arith.constant 6 : index
    %c0_243 = arith.constant 0 : index
    %c0_244 = arith.constant 0 : index
    %401 = vector.load %arg2[%c6, %c0_243, %c0_244] : memref<8x8x128xf32, #tpu.memory_space<vmem>>, vector<1x8x128xf32>
    %402 = vector.shape_cast %401 : vector<1x8x128xf32> to vector<8x128xf32>
    %cst_245 = arith.constant dense<0.000000e+00> : vector<8x128xf32>
    %403 = tpu.matmul %398, %3, %cst_245 {dimension_numbers = #tpu.dot_dimension_numbers<[1], [0], [0], [1], [0, 0, 1, 1], [], []>} : vector<8x32xf32>, vector<32x128xf32>, vector<8x128xf32> -> vector<8x128xf32>
    %404 = arith.addf %402, %403 : vector<8x128xf32>
    %405 = arith.negf %404 : vector<8x128xf32>
    %406 = math.exp %405 : vector<8x128xf32>
    %cst_246 = arith.constant 1.000000e+00 : f32
    %407 = vector.broadcast %cst_246 : f32 to vector<8x128xf32>
    %408 = arith.addf %407, %406 : vector<8x128xf32>
    %409 = arith.divf %407, %408 : vector<8x128xf32>
    %410 = vector.extract_strided_slice %409 {offsets = [0, 0], sizes = [8, 32], strides = [1, 1]} : vector<8x128xf32> to vector<8x32xf32>
    %411 = vector.extract_strided_slice %409 {offsets = [0, 32], sizes = [8, 32], strides = [1, 1]} : vector<8x128xf32> to vector<8x32xf32>
    %412 = vector.extract_strided_slice %409 {offsets = [0, 64], sizes = [8, 32], strides = [1, 1]} : vector<8x128xf32> to vector<8x32xf32>
    %413 = vector.extract_strided_slice %404 {offsets = [0, 96], sizes = [8, 32], strides = [1, 1]} : vector<8x128xf32> to vector<8x32xf32>
    %414 = math.tanh %413 : vector<8x32xf32>
    %415 = arith.mulf %411, %400 : vector<8x32xf32>
    %416 = arith.mulf %410, %414 : vector<8x32xf32>
    %417 = arith.addf %415, %416 : vector<8x32xf32>
    %418 = math.tanh %417 : vector<8x32xf32>
    %419 = arith.mulf %412, %418 : vector<8x32xf32>
    %c0_247 = arith.constant 0 : index
    %c0_248 = arith.constant 0 : index
    %c0_249 = arith.constant 0 : index
    %420 = vector.load %arg9[%c0_247, %c0_248, %c0_249] : memref<2x8x32xf32, #tpu.memory_space<vmem>>, vector<1x8x32xf32>
    %421 = vector.shape_cast %420 : vector<1x8x32xf32> to vector<8x32xf32>
    %422 = vector.shape_cast %419 : vector<8x32xf32> to vector<1x8x32xf32>
    tpu.vector_store %arg9[%c0_247, %c0_248, %c0_249], %422 {strides = array<i32>} : memref<2x8x32xf32, #tpu.memory_space<vmem>>, vector<1x8x32xf32>,
    %c0_250 = arith.constant 0 : index
    %c0_251 = arith.constant 0 : index
    %c0_252 = arith.constant 0 : index
    %423 = vector.load %arg10[%c0_250, %c0_251, %c0_252] : memref<2x8x32xf32, #tpu.memory_space<vmem>>, vector<1x8x32xf32>
    %424 = vector.shape_cast %423 : vector<1x8x32xf32> to vector<8x32xf32>
    %425 = vector.shape_cast %417 : vector<8x32xf32> to vector<1x8x32xf32>
    tpu.vector_store %arg10[%c0_250, %c0_251, %c0_252], %425 {strides = array<i32>} : memref<2x8x32xf32, #tpu.memory_space<vmem>>, vector<1x8x32xf32>,
    %c1_253 = arith.constant 1 : index
    %c0_254 = arith.constant 0 : index
    %c0_255 = arith.constant 0 : index
    %426 = vector.load %arg9[%c1_253, %c0_254, %c0_255] : memref<2x8x32xf32, #tpu.memory_space<vmem>>, vector<1x8x32xf32>
    %427 = vector.shape_cast %426 : vector<1x8x32xf32> to vector<8x32xf32>
    %c1_256 = arith.constant 1 : index
    %c0_257 = arith.constant 0 : index
    %c0_258 = arith.constant 0 : index
    %428 = vector.load %arg10[%c1_256, %c0_257, %c0_258] : memref<2x8x32xf32, #tpu.memory_space<vmem>>, vector<1x8x32xf32>
    %429 = vector.shape_cast %428 : vector<1x8x32xf32> to vector<8x32xf32>
    %cst_259 = arith.constant dense<0.000000e+00> : vector<8x128xf32>
    %430 = tpu.matmul %419, %4, %cst_259 {dimension_numbers = #tpu.dot_dimension_numbers<[1], [0], [0], [1], [0, 0, 1, 1], [], []>} : vector<8x32xf32>, vector<32x128xf32>, vector<8x128xf32> -> vector<8x128xf32>
    %cst_260 = arith.constant dense<0.000000e+00> : vector<8x128xf32>
    %431 = tpu.matmul %427, %5, %cst_260 {dimension_numbers = #tpu.dot_dimension_numbers<[1], [0], [0], [1], [0, 0, 1, 1], [], []>} : vector<8x32xf32>, vector<32x128xf32>, vector<8x128xf32> -> vector<8x128xf32>
    %432 = arith.addf %430, %431 : vector<8x128xf32>
    %433 = vector.broadcast %6 : vector<1x128xf32> to vector<8x128xf32>
    %434 = arith.addf %432, %433 : vector<8x128xf32>
    %435 = arith.negf %434 : vector<8x128xf32>
    %436 = math.exp %435 : vector<8x128xf32>
    %cst_261 = arith.constant 1.000000e+00 : f32
    %437 = vector.broadcast %cst_261 : f32 to vector<8x128xf32>
    %438 = arith.addf %437, %436 : vector<8x128xf32>
    %439 = arith.divf %437, %438 : vector<8x128xf32>
    %440 = vector.extract_strided_slice %439 {offsets = [0, 0], sizes = [8, 32], strides = [1, 1]} : vector<8x128xf32> to vector<8x32xf32>
    %441 = vector.extract_strided_slice %439 {offsets = [0, 32], sizes = [8, 32], strides = [1, 1]} : vector<8x128xf32> to vector<8x32xf32>
    %442 = vector.extract_strided_slice %439 {offsets = [0, 64], sizes = [8, 32], strides = [1, 1]} : vector<8x128xf32> to vector<8x32xf32>
    %443 = vector.extract_strided_slice %434 {offsets = [0, 96], sizes = [8, 32], strides = [1, 1]} : vector<8x128xf32> to vector<8x32xf32>
    %444 = math.tanh %443 : vector<8x32xf32>
    %445 = arith.mulf %441, %429 : vector<8x32xf32>
    %446 = arith.mulf %440, %444 : vector<8x32xf32>
    %447 = arith.addf %445, %446 : vector<8x32xf32>
    %448 = math.tanh %447 : vector<8x32xf32>
    %449 = arith.mulf %442, %448 : vector<8x32xf32>
    %c1_262 = arith.constant 1 : index
    %c0_263 = arith.constant 0 : index
    %c0_264 = arith.constant 0 : index
    %450 = vector.load %arg9[%c1_262, %c0_263, %c0_264] : memref<2x8x32xf32, #tpu.memory_space<vmem>>, vector<1x8x32xf32>
    %451 = vector.shape_cast %450 : vector<1x8x32xf32> to vector<8x32xf32>
    %452 = vector.shape_cast %449 : vector<8x32xf32> to vector<1x8x32xf32>
    tpu.vector_store %arg9[%c1_262, %c0_263, %c0_264], %452 {strides = array<i32>} : memref<2x8x32xf32, #tpu.memory_space<vmem>>, vector<1x8x32xf32>,
    %c1_265 = arith.constant 1 : index
    %c0_266 = arith.constant 0 : index
    %c0_267 = arith.constant 0 : index
    %453 = vector.load %arg10[%c1_265, %c0_266, %c0_267] : memref<2x8x32xf32, #tpu.memory_space<vmem>>, vector<1x8x32xf32>
    %454 = vector.shape_cast %453 : vector<1x8x32xf32> to vector<8x32xf32>
    %455 = vector.shape_cast %447 : vector<8x32xf32> to vector<1x8x32xf32>
    tpu.vector_store %arg10[%c1_265, %c0_266, %c0_267], %455 {strides = array<i32>} : memref<2x8x32xf32, #tpu.memory_space<vmem>>, vector<1x8x32xf32>,
    %c0_268 = arith.constant 0 : index
    %c0_269 = arith.constant 0 : index
    %c0_270 = arith.constant 0 : index
    %c192 = arith.constant 192 : index
    %456 = vector.load %arg7[%c0_268, %c0_269, %c0_270, %c192] : memref<1x1x8x256xf32, #tpu.memory_space<vmem>>, vector<1x1x8x32xf32>
    %457 = vector.shape_cast %456 : vector<1x1x8x32xf32> to vector<8x32xf32>
    %458 = vector.shape_cast %449 : vector<8x32xf32> to vector<1x1x8x32xf32>
    tpu.vector_store %arg7[%c0_268, %c0_269, %c0_270, %c192], %458 {strides = array<i32>} : memref<1x1x8x256xf32, #tpu.memory_space<vmem>>, vector<1x1x8x32xf32>,
    %c0_271 = arith.constant 0 : index
    %c0_272 = arith.constant 0 : index
    %c0_273 = arith.constant 0 : index
    %c192_274 = arith.constant 192 : index
    %459 = vector.load %arg8[%c0_271, %c0_272, %c0_273, %c192_274] : memref<1x1x8x256xf32, #tpu.memory_space<vmem>>, vector<1x1x8x32xf32>
    %460 = vector.shape_cast %459 : vector<1x1x8x32xf32> to vector<8x32xf32>
    %461 = vector.shape_cast %447 : vector<8x32xf32> to vector<1x1x8x32xf32>
    tpu.vector_store %arg8[%c0_271, %c0_272, %c0_273, %c192_274], %461 {strides = array<i32>} : memref<1x1x8x256xf32, #tpu.memory_space<vmem>>, vector<1x1x8x32xf32>,
    %c0_275 = arith.constant 0 : index
    %c0_276 = arith.constant 0 : index
    %c0_277 = arith.constant 0 : index
    %462 = vector.load %arg9[%c0_275, %c0_276, %c0_277] : memref<2x8x32xf32, #tpu.memory_space<vmem>>, vector<1x8x32xf32>
    %463 = vector.shape_cast %462 : vector<1x8x32xf32> to vector<8x32xf32>
    %c0_278 = arith.constant 0 : index
    %c0_279 = arith.constant 0 : index
    %c0_280 = arith.constant 0 : index
    %464 = vector.load %arg10[%c0_278, %c0_279, %c0_280] : memref<2x8x32xf32, #tpu.memory_space<vmem>>, vector<1x8x32xf32>
    %465 = vector.shape_cast %464 : vector<1x8x32xf32> to vector<8x32xf32>
    %c7 = arith.constant 7 : index
    %c0_281 = arith.constant 0 : index
    %c0_282 = arith.constant 0 : index
    %466 = vector.load %arg2[%c7, %c0_281, %c0_282] : memref<8x8x128xf32, #tpu.memory_space<vmem>>, vector<1x8x128xf32>
    %467 = vector.shape_cast %466 : vector<1x8x128xf32> to vector<8x128xf32>
    %cst_283 = arith.constant dense<0.000000e+00> : vector<8x128xf32>
    %468 = tpu.matmul %463, %3, %cst_283 {dimension_numbers = #tpu.dot_dimension_numbers<[1], [0], [0], [1], [0, 0, 1, 1], [], []>} : vector<8x32xf32>, vector<32x128xf32>, vector<8x128xf32> -> vector<8x128xf32>
    %469 = arith.addf %467, %468 : vector<8x128xf32>
    %470 = arith.negf %469 : vector<8x128xf32>
    %471 = math.exp %470 : vector<8x128xf32>
    %cst_284 = arith.constant 1.000000e+00 : f32
    %472 = vector.broadcast %cst_284 : f32 to vector<8x128xf32>
    %473 = arith.addf %472, %471 : vector<8x128xf32>
    %474 = arith.divf %472, %473 : vector<8x128xf32>
    %475 = vector.extract_strided_slice %474 {offsets = [0, 0], sizes = [8, 32], strides = [1, 1]} : vector<8x128xf32> to vector<8x32xf32>
    %476 = vector.extract_strided_slice %474 {offsets = [0, 32], sizes = [8, 32], strides = [1, 1]} : vector<8x128xf32> to vector<8x32xf32>
    %477 = vector.extract_strided_slice %474 {offsets = [0, 64], sizes = [8, 32], strides = [1, 1]} : vector<8x128xf32> to vector<8x32xf32>
    %478 = vector.extract_strided_slice %469 {offsets = [0, 96], sizes = [8, 32], strides = [1, 1]} : vector<8x128xf32> to vector<8x32xf32>
    %479 = math.tanh %478 : vector<8x32xf32>
    %480 = arith.mulf %476, %465 : vector<8x32xf32>
    %481 = arith.mulf %475, %479 : vector<8x32xf32>
    %482 = arith.addf %480, %481 : vector<8x32xf32>
    %483 = math.tanh %482 : vector<8x32xf32>
    %484 = arith.mulf %477, %483 : vector<8x32xf32>
    %c0_285 = arith.constant 0 : index
    %c0_286 = arith.constant 0 : index
    %c0_287 = arith.constant 0 : index
    %485 = vector.load %arg9[%c0_285, %c0_286, %c0_287] : memref<2x8x32xf32, #tpu.memory_space<vmem>>, vector<1x8x32xf32>
    %486 = vector.shape_cast %485 : vector<1x8x32xf32> to vector<8x32xf32>
    %487 = vector.shape_cast %484 : vector<8x32xf32> to vector<1x8x32xf32>
    tpu.vector_store %arg9[%c0_285, %c0_286, %c0_287], %487 {strides = array<i32>} : memref<2x8x32xf32, #tpu.memory_space<vmem>>, vector<1x8x32xf32>,
    %c0_288 = arith.constant 0 : index
    %c0_289 = arith.constant 0 : index
    %c0_290 = arith.constant 0 : index
    %488 = vector.load %arg10[%c0_288, %c0_289, %c0_290] : memref<2x8x32xf32, #tpu.memory_space<vmem>>, vector<1x8x32xf32>
    %489 = vector.shape_cast %488 : vector<1x8x32xf32> to vector<8x32xf32>
    %490 = vector.shape_cast %482 : vector<8x32xf32> to vector<1x8x32xf32>
    tpu.vector_store %arg10[%c0_288, %c0_289, %c0_290], %490 {strides = array<i32>} : memref<2x8x32xf32, #tpu.memory_space<vmem>>, vector<1x8x32xf32>,
    %c1_291 = arith.constant 1 : index
    %c0_292 = arith.constant 0 : index
    %c0_293 = arith.constant 0 : index
    %491 = vector.load %arg9[%c1_291, %c0_292, %c0_293] : memref<2x8x32xf32, #tpu.memory_space<vmem>>, vector<1x8x32xf32>
    %492 = vector.shape_cast %491 : vector<1x8x32xf32> to vector<8x32xf32>
    %c1_294 = arith.constant 1 : index
    %c0_295 = arith.constant 0 : index
    %c0_296 = arith.constant 0 : index
    %493 = vector.load %arg10[%c1_294, %c0_295, %c0_296] : memref<2x8x32xf32, #tpu.memory_space<vmem>>, vector<1x8x32xf32>
    %494 = vector.shape_cast %493 : vector<1x8x32xf32> to vector<8x32xf32>
    %cst_297 = arith.constant dense<0.000000e+00> : vector<8x128xf32>
    %495 = tpu.matmul %484, %4, %cst_297 {dimension_numbers = #tpu.dot_dimension_numbers<[1], [0], [0], [1], [0, 0, 1, 1], [], []>} : vector<8x32xf32>, vector<32x128xf32>, vector<8x128xf32> -> vector<8x128xf32>
    %cst_298 = arith.constant dense<0.000000e+00> : vector<8x128xf32>
    %496 = tpu.matmul %492, %5, %cst_298 {dimension_numbers = #tpu.dot_dimension_numbers<[1], [0], [0], [1], [0, 0, 1, 1], [], []>} : vector<8x32xf32>, vector<32x128xf32>, vector<8x128xf32> -> vector<8x128xf32>
    %497 = arith.addf %495, %496 : vector<8x128xf32>
    %498 = vector.broadcast %6 : vector<1x128xf32> to vector<8x128xf32>
    %499 = arith.addf %497, %498 : vector<8x128xf32>
    %500 = arith.negf %499 : vector<8x128xf32>
    %501 = math.exp %500 : vector<8x128xf32>
    %cst_299 = arith.constant 1.000000e+00 : f32
    %502 = vector.broadcast %cst_299 : f32 to vector<8x128xf32>
    %503 = arith.addf %502, %501 : vector<8x128xf32>
    %504 = arith.divf %502, %503 : vector<8x128xf32>
    %505 = vector.extract_strided_slice %504 {offsets = [0, 0], sizes = [8, 32], strides = [1, 1]} : vector<8x128xf32> to vector<8x32xf32>
    %506 = vector.extract_strided_slice %504 {offsets = [0, 32], sizes = [8, 32], strides = [1, 1]} : vector<8x128xf32> to vector<8x32xf32>
    %507 = vector.extract_strided_slice %504 {offsets = [0, 64], sizes = [8, 32], strides = [1, 1]} : vector<8x128xf32> to vector<8x32xf32>
    %508 = vector.extract_strided_slice %499 {offsets = [0, 96], sizes = [8, 32], strides = [1, 1]} : vector<8x128xf32> to vector<8x32xf32>
    %509 = math.tanh %508 : vector<8x32xf32>
    %510 = arith.mulf %506, %494 : vector<8x32xf32>
    %511 = arith.mulf %505, %509 : vector<8x32xf32>
    %512 = arith.addf %510, %511 : vector<8x32xf32>
    %513 = math.tanh %512 : vector<8x32xf32>
    %514 = arith.mulf %507, %513 : vector<8x32xf32>
    %c1_300 = arith.constant 1 : index
    %c0_301 = arith.constant 0 : index
    %c0_302 = arith.constant 0 : index
    %515 = vector.load %arg9[%c1_300, %c0_301, %c0_302] : memref<2x8x32xf32, #tpu.memory_space<vmem>>, vector<1x8x32xf32>
    %516 = vector.shape_cast %515 : vector<1x8x32xf32> to vector<8x32xf32>
    %517 = vector.shape_cast %514 : vector<8x32xf32> to vector<1x8x32xf32>
    tpu.vector_store %arg9[%c1_300, %c0_301, %c0_302], %517 {strides = array<i32>} : memref<2x8x32xf32, #tpu.memory_space<vmem>>, vector<1x8x32xf32>,
    %c1_303 = arith.constant 1 : index
    %c0_304 = arith.constant 0 : index
    %c0_305 = arith.constant 0 : index
    %518 = vector.load %arg10[%c1_303, %c0_304, %c0_305] : memref<2x8x32xf32, #tpu.memory_space<vmem>>, vector<1x8x32xf32>
    %519 = vector.shape_cast %518 : vector<1x8x32xf32> to vector<8x32xf32>
    %520 = vector.shape_cast %512 : vector<8x32xf32> to vector<1x8x32xf32>
    tpu.vector_store %arg10[%c1_303, %c0_304, %c0_305], %520 {strides = array<i32>} : memref<2x8x32xf32, #tpu.memory_space<vmem>>, vector<1x8x32xf32>,
    %c0_306 = arith.constant 0 : index
    %c0_307 = arith.constant 0 : index
    %c0_308 = arith.constant 0 : index
    %c224 = arith.constant 224 : index
    %521 = vector.load %arg7[%c0_306, %c0_307, %c0_308, %c224] : memref<1x1x8x256xf32, #tpu.memory_space<vmem>>, vector<1x1x8x32xf32>
    %522 = vector.shape_cast %521 : vector<1x1x8x32xf32> to vector<8x32xf32>
    %523 = vector.shape_cast %514 : vector<8x32xf32> to vector<1x1x8x32xf32>
    tpu.vector_store %arg7[%c0_306, %c0_307, %c0_308, %c224], %523 {strides = array<i32>} : memref<1x1x8x256xf32, #tpu.memory_space<vmem>>, vector<1x1x8x32xf32>,
    %c0_309 = arith.constant 0 : index
    %c0_310 = arith.constant 0 : index
    %c0_311 = arith.constant 0 : index
    %c224_312 = arith.constant 224 : index
    %524 = vector.load %arg8[%c0_309, %c0_310, %c0_311, %c224_312] : memref<1x1x8x256xf32, #tpu.memory_space<vmem>>, vector<1x1x8x32xf32>
    %525 = vector.shape_cast %524 : vector<1x1x8x32xf32> to vector<8x32xf32>
    %526 = vector.shape_cast %512 : vector<8x32xf32> to vector<1x1x8x32xf32>
    tpu.vector_store %arg8[%c0_309, %c0_310, %c0_311, %c224_312], %526 {strides = array<i32>} : memref<1x1x8x256xf32, #tpu.memory_space<vmem>>, vector<1x1x8x32xf32>,
    return
  }
  func.func @transform_0(%arg0: i32, %arg1: i32) -> (i32, i32, i32) {
    %c0_i32 = arith.constant 0 : i32
    %c0_i32_0 = arith.constant 0 : i32
    return %arg1, %arg0, %c0_i32 : i32, i32, i32
  }
  func.func @transform_1(%arg0: i32, %arg1: i32) -> (i32, i32) {
    %c0_i32 = arith.constant 0 : i32
    %c0_i32_0 = arith.constant 0 : i32
    %c0_i32_1 = arith.constant 0 : i32
    return %c0_i32, %c0_i32_0 : i32, i32
  }
  func.func @transform_2(%arg0: i32, %arg1: i32) -> (i32, i32) {
    %c0_i32 = arith.constant 0 : i32
    %c0_i32_0 = arith.constant 0 : i32
    %c0_i32_1 = arith.constant 0 : i32
    return %c0_i32, %c0_i32_0 : i32, i32
  }
  func.func @transform_3(%arg0: i32, %arg1: i32) -> (i32, i32) {
    %c0_i32 = arith.constant 0 : i32
    %c0_i32_0 = arith.constant 0 : i32
    %c0_i32_1 = arith.constant 0 : i32
    return %c0_i32, %c0_i32_0 : i32, i32
  }
  func.func @transform_4(%arg0: i32, %arg1: i32) -> (i32, i32) {
    %c0_i32 = arith.constant 0 : i32
    %c0_i32_0 = arith.constant 0 : i32
    %c0_i32_1 = arith.constant 0 : i32
    return %c0_i32, %c0_i32_0 : i32, i32
  }
  func.func @transform_5(%arg0: i32, %arg1: i32) -> (i32, i32, i32, i32) {
    %c0_i32 = arith.constant 0 : i32
    %c0_i32_0 = arith.constant 0 : i32
    %c0_i32_1 = arith.constant 0 : i32
    return %arg0, %arg1, %c0_i32, %c0_i32_0 : i32, i32, i32, i32
  }
  func.func @transform_6(%arg0: i32, %arg1: i32) -> (i32, i32, i32, i32) {
    %c0_i32 = arith.constant 0 : i32
    %c0_i32_0 = arith.constant 0 : i32
    %c0_i32_1 = arith.constant 0 : i32
    return %arg0, %arg1, %c0_i32, %c0_i32_0 : i32, i32, i32, i32
  }
}

</mosaic_0001>

<llo_original>
// kernel: tpu_custom_call.1
$region0: #{tpu_custom_call.1}
  #allocation0 [shape = 'u32[]', space=smem, size = 0x4, offset = 0x4, fixed_abs, tag = 'smem constant byte address 0x4 - core index']
  #allocation1 [shape = 'u32[72,128]{1,0:T(1,128)}', space=vmem, size = 0x9000, scoped, tag = 'internal scratch']
  #allocation2 [shape = 'f32[2,8,32]{2,1,0:T(8,128)}', space=vmem, size = 0x2000, scoped, tag = 'scratch operand']
  #allocation3 [shape = 'f32[2,8,32]{2,1,0:T(8,128)}', space=vmem, size = 0x2000, scoped, tag = 'scratch operand']
  %s0 = inlined_call_operand.hbm [shape: f32[16,16,128], index: 0, kind: input, shape index: {}]
  %s1 = inlined_call_operand.hbm [shape: f32[32,128], index: 1, kind: input, shape index: {}]
  %s2 = inlined_call_operand.hbm [shape: f32[32,128], index: 2, kind: input, shape index: {}]
  %s3 = inlined_call_operand.hbm [shape: f32[32,128], index: 3, kind: input, shape index: {}]
  %s4 = inlined_call_operand.vmem [shape: f32[1,128], index: 4, kind: input, shape index: {}]
  %s5 = inlined_call_operand.hbm [shape: f32[2,2,8,256], index: 5, kind: output, shape index: {0}]
  %s6 = inlined_call_operand.hbm [shape: f32[2,2,8,256], index: 6, kind: output, shape index: {1}]
  %7 = xla_tuple %s5, %s6
  %s8 = sld [smem:[#allocation0]]
  $region81: #{tpu_custom_call.1} parent=0
    _
  %s10 = ssub.s32 1, %s8
  %s11 = scalar_select 0, %s10, %s8
  $region1: #{tpu_custom_call.1} parent=0
    #allocation4 [shape = 'u8[65536]{0}', space=vmem, size = 0x10000, scoped, tag = 'input window, operand 0']
    #allocation5 [shape = 's32[2]{0}', space=sflag, size = 0x8, scoped, tag = 'scoped memory for tpu_custom_call.1']
    #allocation6 [shape = 's32[2]{0}', space=sflag, size = 0x8, scoped, tag = 'scoped memory for tpu_custom_call.1']
    #allocation7 [shape = 'u8[16384]{0}', space=vmem, size = 0x4000, scoped, tag = 'input window, operand 1, single buffered']
    #allocation8 [shape = 's32[1]{0}', space=sflag, size = 0x4, scoped, tag = 'scoped memory for tpu_custom_call.1']
    #allocation9 [shape = 'u8[16384]{0}', space=vmem, size = 0x4000, scoped, tag = 'input window, operand 2, single buffered']
    #allocation10 [shape = 'u8[16384]{0}', space=vmem, size = 0x4000, scoped, tag = 'input window, operand 3, single buffered']
    #allocation11 [shape = 's32[1]{0}', space=sflag, size = 0x4, scoped, tag = 'scoped memory for tpu_custom_call.1']
    #allocation12 [shape = 'u8[16384]{0}', space=vmem, size = 0x4000, scoped, tag = 'output window, operand 0']
    #allocation13 [shape = 'u8[16384]{0}', space=vmem, size = 0x4000, scoped, tag = 'output window, operand 1']
    #allocation14 [shape = 's32[2]{0}', space=sflag, size = 0x8, scoped, tag = 'scoped memory for tpu_custom_call.1']
    %12 = vsyncpa [#allocation5], 0
    %s13 = scalar_lea.sflag [#allocation5], 1
    %14 = vsyncpa %s13, 0
    %15 = vsyncpa [#allocation8], 0
    %16 = vsyncpa [#allocation11], 0
    %17 = vsyncpa [#allocation6], 0
    %s18 = scalar_lea.sflag [#allocation6], 1
    %19 = vsyncpa %s18, 0
    %20 = vsyncpa [#allocation14], 0
    %s21 = scalar_lea.sflag [#allocation14], 1
    %22 = vsyncpa %s21, 0
    loop: start=0, step=1, limit=6
    $region2: #{tpu_custom_call.1} parent=1 // loop_pre_header
      _
    $region3: #{tpu_custom_call.1} parent=1 // loop_header
      %s24 = sphi 0, %s28
      %p25 = scmp.ge.s32.totalorder %s24, 6
      %s31 = sphi 0, %s43
      %s32 = sphi 0, %s39
      %s33 = sphi 0, %s31
      %s34 = sphi 0, %s32
      %s35 = sphi 0, %s33
      %s36 = sphi 0, %s34
      %s48 = sphi 0, %s50
      %s51 = sphi 0, %s48
      %s52 = sphi 0, %s51
      %s68 = sphi 0, %s52
      %s72 = sphi 0, %s72
      %s74 = sphi 0, %s72
      %s75 = sphi 0, %s74
      %s89 = sphi 0, %s75
      %s93 = sphi 0, %s93
      %s95 = sphi 0, %s93
      %s96 = sphi 0, %s95
      %s110 = sphi 0, %s96
      %s114 = sphi 0, %s114
      %s116 = sphi 0, %s114
      %s117 = sphi 0, %s116
      %s131 = sphi 0, %s117
      %s135 = sphi 0, %s135
      %s137 = sphi 0, %s135
      %s138 = sphi 0, %s137
      %s152 = sphi 0, %s138
      %s160 = sphi 0, %s162
      %s163 = sphi 0, %s160
      %s164 = sphi 0, %s163
      %s180 = sphi 0, %s164
      %s188 = sphi 0, %s190
      %s191 = sphi 0, %s188
      %s192 = sphi 0, %s191
      %s208 = sphi 0, %s192
    $region4: #{tpu_custom_call.1} parent=1 // loop_header_branch
      %27 = sbr.rel (%p25) target = $region8
    $region5: #{tpu_custom_call.1} parent=1 // loop_body
      %s29 = ssub.s32 %s24, 1
      %s30 = ssub.s32 %s24, 2
      %s37 = sadd.s32 1, %s32
      %p38 = scmp.ge.s32.totalorder %s37, 2
      %s39 = scalar_select %p38, 0, %s37
      %s40 = sadd.s32 1, %s31
      %s41 = scalar_select %p38, %s40, %s31
      %p42 = scmp.ge.s32.totalorder %s41, 2
      %s43 = scalar_select %p42, 0, %s41
      %s44 = ssub.s32 %s32, %s39
      %s45 = ssub.s32 %s31, %s43
      %s46 = sor.u32 %s44, %s45
      %p47 = scmp.eq.s32.totalorder %s46, 0
      %s49 = sadd.s32 %s48, 1
      %s50 = scalar_select %p47, %s48, %s49
      %p53 = pneg %p47
      %p54 = scmp.eq.s32.totalorder %s24, 3
      %p55 = por %p53, %p54
      %p56 = scmp.ne.s32.totalorder %s48, %s51
      %p57 = scmp.eq.s32.totalorder %s24, 0
      %p58 = por %p56, %p57
      %p59 = scmp.ne.s32.totalorder %s48, %s51
      %p60 = scmp.eq.s32.totalorder %s29, 3
      %p61 = por %p59, %p60
      %p62 = scmp.ne.s32.totalorder %s51, %s52
      %p63 = scmp.eq.s32.totalorder %s29, 0
      %p64 = por %p62, %p63
      %p65 = scmp.ne.s32.totalorder %s51, %s52
      %p66 = scmp.eq.s32.totalorder %s30, 3
      %p67 = por %p65, %p66
      %p69 = scmp.ne.s32.totalorder %s52, %s68
      %p70 = scmp.eq.s32.totalorder %s30, 0
      %p71 = por %p69, %p70
      %s73 = sadd.s32 %s72, 1
      %p76 = scmp.eq.s32.totalorder %s24, 3
      %p77 = scmp.ne.s32.totalorder %s72, %s74
      %p78 = scmp.eq.s32.totalorder %s24, 0
      %p79 = por %p77, %p78
      %p80 = scmp.ne.s32.totalorder %s72, %s74
      %p81 = scmp.eq.s32.totalorder %s29, 3
      %p82 = por %p80, %p81
      %p83 = scmp.ne.s32.totalorder %s74, %s75
      %p84 = scmp.eq.s32.totalorder %s29, 0
      %p85 = por %p83, %p84
      %p86 = scmp.ne.s32.totalorder %s74, %s75
      %p87 = scmp.eq.s32.totalorder %s30, 3
      %p88 = por %p86, %p87
      %p90 = scmp.ne.s32.totalorder %s75, %s89
      %p91 = scmp.eq.s32.totalorder %s30, 0
      %p92 = por %p90, %p91
      %s94 = sadd.s32 %s93, 1
      %p97 = scmp.eq.s32.totalorder %s24, 3
      %p98 = scmp.ne.s32.totalorder %s93, %s95
      %p99 = scmp.eq.s32.totalorder %s24, 0
      %p100 = por %p98, %p99
      %p101 = scmp.ne.s32.totalorder %s93, %s95
      %p102 = scmp.eq.s32.totalorder %s29, 3
      %p103 = por %p101, %p102
      %p104 = scmp.ne.s32.totalorder %s95, %s96
      %p105 = scmp.eq.s32.totalorder %s29, 0
      %p106 = por %p104, %p105
      %p107 = scmp.ne.s32.totalorder %s95, %s96
      %p108 = scmp.eq.s32.totalorder %s30, 3
      %p109 = por %p107, %p108
      %p111 = scmp.ne.s32.totalorder %s96, %s110
      %p112 = scmp.eq.s32.totalorder %s30, 0
      %p113 = por %p111, %p112
      %s115 = sadd.s32 %s114, 1
      %p118 = scmp.eq.s32.totalorder %s24, 3
      %p119 = scmp.ne.s32.totalorder %s114, %s116
      %p120 = scmp.eq.s32.totalorder %s24, 0
      %p121 = por %p119, %p120
      %p122 = scmp.ne.s32.totalorder %s114, %s116
      %p123 = scmp.eq.s32.totalorder %s29, 3
      %p124 = por %p122, %p123
      %p125 = scmp.ne.s32.totalorder %s116, %s117
      %p126 = scmp.eq.s32.totalorder %s29, 0
      %p127 = por %p125, %p126
      %p128 = scmp.ne.s32.totalorder %s116, %s117
      %p129 = scmp.eq.s32.totalorder %s30, 3
      %p130 = por %p128, %p129
      %p132 = scmp.ne.s32.totalorder %s117, %s131
      %p133 = scmp.eq.s32.totalorder %s30, 0
      %p134 = por %p132, %p133
      %s136 = sadd.s32 %s135, 1
      %p139 = scmp.eq.s32.totalorder %s24, 3
      %p140 = scmp.ne.s32.totalorder %s135, %s137
      %p141 = scmp.eq.s32.totalorder %s24, 0
      %p142 = por %p140, %p141
      %p143 = scmp.ne.s32.totalorder %s135, %s137
      %p144 = scmp.eq.s32.totalorder %s29, 3
      %p145 = por %p143, %p144
      %p146 = scmp.ne.s32.totalorder %s137, %s138
      %p147 = scmp.eq.s32.totalorder %s29, 0
      %p148 = por %p146, %p147
      %p149 = scmp.ne.s32.totalorder %s137, %s138
      %p150 = scmp.eq.s32.totalorder %s30, 3
      %p151 = por %p149, %p150
      %p153 = scmp.ne.s32.totalorder %s138, %s152
      %p154 = scmp.eq.s32.totalorder %s30, 0
      %p155 = por %p153, %p154
      %s156 = ssub.s32 %s31, %s43
      %s157 = ssub.s32 %s32, %s39
      %s158 = sor.u32 %s156, %s157
      %p159 = scmp.eq.s32.totalorder %s158, 0
      %s161 = sadd.s32 %s160, 1
      %s162 = scalar_select %p159, %s160, %s161
      %p165 = pneg %p159
      %p166 = scmp.eq.s32.totalorder %s24, 3
      %p167 = por %p165, %p166
      %p168 = scmp.ne.s32.totalorder %s160, %s163
      %p169 = scmp.eq.s32.totalorder %s24, 0
      %p170 = por %p168, %p169
      %p171 = scmp.ne.s32.totalorder %s160, %s163
      %p172 = scmp.eq.s32.totalorder %s29, 3
      %p173 = por %p171, %p172
      %p174 = scmp.ne.s32.totalorder %s163, %s164
      %p175 = scmp.eq.s32.totalorder %s29, 0
      %p176 = por %p174, %p175
      %p177 = scmp.ne.s32.totalorder %s163, %s164
      %p178 = scmp.eq.s32.totalorder %s30, 3
      %p179 = por %p177, %p178
      %p181 = scmp.ne.s32.totalorder %s164, %s180
      %p182 = scmp.eq.s32.totalorder %s30, 0
      %p183 = por %p181, %p182
      %s184 = ssub.s32 %s31, %s43
      %s185 = ssub.s32 %s32, %s39
      %s186 = sor.u32 %s184, %s185
      %p187 = scmp.eq.s32.totalorder %s186, 0
      %s189 = sadd.s32 %s188, 1
      %s190 = scalar_select %p187, %s188, %s189
      %p193 = pneg %p187
      %p194 = scmp.eq.s32.totalorder %s24, 3
      %p195 = por %p193, %p194
      %p196 = scmp.ne.s32.totalorder %s188, %s191
      %p197 = scmp.eq.s32.totalorder %s24, 0
      %p198 = por %p196, %p197
      %p199 = scmp.ne.s32.totalorder %s188, %s191
      %p200 = scmp.eq.s32.totalorder %s29, 3
      %p201 = por %p199, %p200
      %p202 = scmp.ne.s32.totalorder %s191, %s192
      %p203 = scmp.eq.s32.totalorder %s29, 0
      %p204 = por %p202, %p203
      %p205 = scmp.ne.s32.totalorder %s191, %s192
      %p206 = scmp.eq.s32.totalorder %s30, 3
      %p207 = por %p205, %p206
      %p209 = scmp.ne.s32.totalorder %s192, %s208
      %p210 = scmp.eq.s32.totalorder %s30, 0
      %p211 = por %p209, %p210
      %p212 = scmp.le.s32.totalorder 1, %s24
      %p213 = scmp.lt.s32.totalorder %s24, 5
      %p214 = pnand %p212, %p213
      %p215 = pneg %p214
      // Predicated region
      $region9: #{tpu_custom_call.1} parent=5 // pred_check
        _
      $region10: #{tpu_custom_call.1} parent=5 // pred_check_branch
        %217 = sbr.rel (%p214) target = $region12
      $region11: #{tpu_custom_call.1} parent=5 // pred_region
        %s218 = ssub.s32 %s24, 1
        // Predicated region
        $region13: #{tpu_custom_call.1} parent=11 // pred_check
          %p219 = pneg %p85
        $region14: #{tpu_custom_call.1} parent=11 // pred_check_branch
          %221 = sbr.rel (%p219) target = $region16
        $region15: #{tpu_custom_call.1} parent=11 // pred_region
          %223 = vsyncadd [#allocation8], 0
          %s224 = sshll.u32 %s1, 4
          %s225 = int_to_ptr.hbm [resolvable:$true] %s224
          %s226 = sshll.u32 [#allocation7], 4
          %s227 = int_to_ptr.vmem [resolvable:$true] %s226
          %232 = dma.hbm_to_vmem [thread:$0]  %s225, 512, %s227, [#allocation8], 128, 128, 8
        $region16: #{tpu_custom_call.1} parent=11 // pred_fallthru
          _
        // Predicated region
        $region17: #{tpu_custom_call.1} parent=11 // pred_check
          %p233 = pneg %p106
        $region18: #{tpu_custom_call.1} parent=11 // pred_check_branch
          %235 = sbr.rel (%p233) target = $region20
        $region19: #{tpu_custom_call.1} parent=11 // pred_region
          %237 = vsyncadd [#allocation8], 0
          %s238 = sshll.u32 %s2, 4
          %s239 = int_to_ptr.hbm [resolvable:$true] %s238
          %s240 = sshll.u32 [#allocation9], 4
          %s241 = int_to_ptr.vmem [resolvable:$true] %s240
          %246 = dma.hbm_to_vmem [thread:$0]  %s239, 512, %s241, [#allocation8], 128, 128, 8
        $region20: #{tpu_custom_call.1} parent=11 // pred_fallthru
          _
        // Predicated region
        $region21: #{tpu_custom_call.1} parent=11 // pred_check
          %p247 = pneg %p127
        $region22: #{tpu_custom_call.1} parent=11 // pred_check_branch
          %249 = sbr.rel (%p247) target = $region24
        $region23: #{tpu_custom_call.1} parent=11 // pred_region
          %251 = vsyncadd [#allocation11], 0
          %s252 = sshll.u32 %s3, 4
          %s253 = int_to_ptr.hbm [resolvable:$true] %s252
          %s254 = sshll.u32 [#allocation10], 4
          %s255 = int_to_ptr.vmem [resolvable:$true] %s254
          %260 = dma.hbm_to_vmem [thread:$0]  %s253, 512, %s255, [#allocation11], 128, 128, 8
        $region24: #{tpu_custom_call.1} parent=11 // pred_fallthru
          _
        // Predicated region
        $region25: #{tpu_custom_call.1} parent=11 // pred_check
          %p261 = pneg %p148
        $region26: #{tpu_custom_call.1} parent=11 // pred_check_branch
          %263 = sbr.rel (%p261) target = $region28
        $region27: #{tpu_custom_call.1} parent=11 // pred_region
          _
        $region28: #{tpu_custom_call.1} parent=11 // pred_fallthru
          _
      $region12: #{tpu_custom_call.1} parent=5 // pred_fallthru
        _
      %p264 = scmp.lt.s32.totalorder %s24, 4
      // Predicated region
      $region29: #{tpu_custom_call.1} parent=5 // pred_check
        %p265 = pneg %p264
      $region30: #{tpu_custom_call.1} parent=5 // pred_check_branch
        %267 = sbr.rel (%p265) target = $region32
      $region31: #{tpu_custom_call.1} parent=5 // pred_region
        // Predicated region
        $region33: #{tpu_custom_call.1} parent=31 // pred_check
          %p268 = pneg %p58
        $region34: #{tpu_custom_call.1} parent=31 // pred_check_branch
          %270 = sbr.rel (%p268) target = $region36
        $region35: #{tpu_custom_call.1} parent=31 // pred_region
          %s271 = sand.u32 %s48, 1
          %s272 = scalar_lea.sflag [#allocation5], %s271
          %s273 = sand.u32 %s48, 1
          %s274 = smul.addr %s273, 64
          %s275 = scalar_lea.vmem [#allocation4], %s274
          %s276 = smul.u32 8, %s32
          %278 = vsyncadd %s272, 0
          %s279 = smul.addr %s276, 2
          %s280 = sadd.s32 %s31, %s279
          %s281 = smul.addr %s280, 8
          %s282 = scalar_lea.hbm %s0, %s281
          %s283 = sshll.u32 %s282, 4
          %s284 = int_to_ptr.hbm [resolvable:$true] %s283
          %s285 = sshll.u32 %s275, 4
          %s286 = int_to_ptr.vmem [resolvable:$true] %s285
          %291 = dma.hbm_to_vmem [thread:$0]  %s284, 1024, %s286, %s272, 256, 128, 8
        $region36: #{tpu_custom_call.1} parent=31 // pred_fallthru
          _
      $region32: #{tpu_custom_call.1} parent=5 // pred_fallthru
        _
      %p292 = scmp.le.s32.totalorder 1, %s24
      %p293 = scmp.lt.s32.totalorder %s24, 5
      %p294 = pnand %p292, %p293
      %p295 = pneg %p294
      // Predicated region
      $region37: #{tpu_custom_call.1} parent=5 // pred_check
        _
      $region38: #{tpu_custom_call.1} parent=5 // pred_check_branch
        %297 = sbr.rel (%p294) target = $region40
      $region39: #{tpu_custom_call.1} parent=5 // pred_region
        %s298 = ssub.s32 %s24, 1
        %s299 = sand.u32 %s51, 1
        %s300 = scalar_lea.sflag [#allocation5], %s299
        %s301 = sand.u32 %s51, 1
        %s302 = smul.addr %s301, 64
        %s303 = scalar_lea.vmem [#allocation4], %s302
        // Predicated region
        $region41: #{tpu_custom_call.1} parent=39 // pred_check
          %p304 = pneg %p64
        $region42: #{tpu_custom_call.1} parent=39 // pred_check_branch
          %306 = sbr.rel (%p304) target = $region44
        $region43: #{tpu_custom_call.1} parent=39 // pred_region
          %308 = dma.done %s300, 1024
        $region44: #{tpu_custom_call.1} parent=39 // pred_fallthru
          _
        // Predicated region
        $region45: #{tpu_custom_call.1} parent=39 // pred_check
          %p309 = pneg %p85
        $region46: #{tpu_custom_call.1} parent=39 // pred_check_branch
          %311 = sbr.rel (%p309) target = $region48
        $region47: #{tpu_custom_call.1} parent=39 // pred_region
          %313 = dma.done [#allocation8], 512
        $region48: #{tpu_custom_call.1} parent=39 // pred_fallthru
          _
        // Predicated region
        $region49: #{tpu_custom_call.1} parent=39 // pred_check
          %p314 = pneg %p106
        $region50: #{tpu_custom_call.1} parent=39 // pred_check_branch
          %316 = sbr.rel (%p314) target = $region52
        $region51: #{tpu_custom_call.1} parent=39 // pred_region
          %318 = dma.done [#allocation8], 512
        $region52: #{tpu_custom_call.1} parent=39 // pred_fallthru
          _
        // Predicated region
        $region53: #{tpu_custom_call.1} parent=39 // pred_check
          %p319 = pneg %p127
        $region54: #{tpu_custom_call.1} parent=39 // pred_check_branch
          %321 = sbr.rel (%p319) target = $region56
        $region55: #{tpu_custom_call.1} parent=39 // pred_region
          %323 = dma.done [#allocation11], 512
        $region56: #{tpu_custom_call.1} parent=39 // pred_fallthru
          _
        %s324 = sand.u32 %s51, 1
        %s325 = scalar_lea.sflag [#allocation5], %s324
        %s326 = sand.u32 %s51, 1
        %s327 = smul.addr %s326, 64
        %s328 = scalar_lea.vmem [#allocation4], %s327
        %p329 = pneg %p64
        %p330 = pneg %p61
        %p331 = pneg %p85
        %p332 = pneg %p82
        %p333 = pneg %p106
        %p334 = pneg %p103
        %p335 = pneg %p127
        %p336 = pneg %p124
        %p337 = pneg %p148
        %p338 = pneg %p145
        %p339 = pneg %p176
        %p340 = pneg %p173
        %s341 = sand.u32 %s163, 1
        %s342 = scalar_lea.sflag [#allocation6], %s341
        %s343 = sand.u32 %s163, 1
        %s344 = smul.addr %s343, 16
        %s345 = scalar_lea.vmem [#allocation12], %s344
        %p346 = pneg %p204
        %p347 = pneg %p201
        %s348 = sand.u32 %s191, 1
        %s349 = scalar_lea.sflag [#allocation14], %s348
        %s350 = sand.u32 %s191, 1
        %s351 = smul.addr %s350, 16
        %s352 = scalar_lea.vmem [#allocation13], %s351
        %s353 = smul.u32 8, %s34
        %p354 = scmp.eq.s32.totalorder %s34, 0
        // Predicated region
        $region57: #{tpu_custom_call.1} parent=39 // pred_check
          %p355 = pneg %p354
        $region58: #{tpu_custom_call.1} parent=39 // pred_check_branch
          %357 = sbr.rel (%p355) target = $region60
        $region59: #{tpu_custom_call.1} parent=39 // pred_region
          %vm358 = vcmask 261120
          %359 = vst.msk [vmem:[#allocation2] sm:$0xff] %vm358, 0.0
          %360 = vst.msk [vmem:[#allocation2 + $0x8] sm:$0xff] %vm358, 0.0
          %361 = vst.msk [vmem:[#allocation3] sm:$0xff] %vm358, 0.0
          %362 = vst.msk [vmem:[#allocation3 + $0x8] sm:$0xff] %vm358, 0.0
        $region60: #{tpu_custom_call.1} parent=39 // pred_fallthru
          _
        %v363 = vld [vmem:[#allocation7] sm:$0xff]
        %v364 = vld [vmem:[#allocation7 + $0x8] sm:$0xff]
        %v365 = vld [vmem:[#allocation7 + $0x10] sm:$0xff]
        %v366 = vld [vmem:[#allocation7 + $0x18] sm:$0xff]
        %v367 = vld [vmem:[#allocation9] sm:$0xff]
        %v368 = vld [vmem:[#allocation9 + $0x8] sm:$0xff]
        %v369 = vld [vmem:[#allocation9 + $0x10] sm:$0xff]
        %v370 = vld [vmem:[#allocation9 + $0x18] sm:$0xff]
        %v371 = vld [vmem:[#allocation10] sm:$0xff]
        %v372 = vld [vmem:[#allocation10 + $0x8] sm:$0xff]
        %v373 = vld [vmem:[#allocation10 + $0x10] sm:$0xff]
        %v374 = vld [vmem:[#allocation10 + $0x18] sm:$0xff]
        %v375 = vld [vmem:[%s4] sm:$0x1]
        %v376 = vld [vmem:[#allocation2] sm:$0xff]
        %v377 = vld [vmem:[#allocation3] sm:$0xff]
        %v378 = vld [vmem:[%s303] sm:$0xff]
        %vm379 = vcmask 261120
        %v381 = vsel %vm379, %v376, 0
        %383 = vmatpush.msra.mxu0 0.0
        %384 = vmatpush.msra.mxu0 0.0
        %385 = vmatpush.msra.mxu0 0.0
        %386 = vmatpush.msra.mxu0 0.0
        %387 = vmatpush.msra.mxu0 0.0
        %388 = vmatpush.msra.mxu0 0.0
        %389 = vmatpush.msra.mxu0 0.0
        %390 = vmatpush.msra.mxu0 0.0
        %391 = vmatpush.msra.mxu0 0.0
        %392 = vmatpush.msra.mxu0 0.0
        %393 = vmatpush.msra.mxu0 0.0
        %394 = vmatpush.msra.mxu0 0.0
        %395 = vmatpush.msra.mxu0 %v366
        %396 = vmatpush.msra.mxu0 %v365
        %397 = vmatpush.msra.mxu0 %v364
        %398 = vmatpush.msra.mxu0 %v363
        %399 = vmatmul.f32.gmra.mxu0 %v381
        %v400 = vpop.f32.mrf.mxu0
        %v401 = vadd.f32 0.0, %v400
        %402 = vdwg.mxu0
        %v403 = vadd.f32 %v378, %v401
        %v404 = vxor.u32 %v403, 2147483648
        %v405 = vmul.f32 %v404, 1.442695
        %v406 = vpow.pop %v405
        %v407 = vadd.f32 %v406, 1.0
        %v408 = vrcp.pop %v407
        %v409 = vmul.f32 %v407, %v408
        %v410 = vsub.f32 1.0, %v409
        %v411 = vmul.f32 %v408, %v410
        %v412 = vadd.f32 %v408, %v411
        %vm413 = vweird.f32 %v407
        %vm414 = vweird.f32 %v408
        %vm415 = vmor %vm413, %vm414
        %v416 = vsel %vm415, %v408, %v412
        %v417 = vand.u32 2147483647, %v407
        %vm418 = vcmp.eq.f32.partialorder %v417, 8.507059e+37
        %v419 = vand.u32 %v407, 2147483648
        %v420 = vor.u32 1.1754944e-38, %v419
        %v421 = vsel %vm418, %v420, %v416
        %v422 = vmul.f32 1.0, %v421
        %v423 = vtanh.pop %v403
        %425 = vrot.lane.b32.xlu0 %v377, 32
        %v426 = vpop.permute.xlu0 %425
        %v428 = vmul.f32 %v422, %v426
        %430 = vrot.lane.b32.xlu0 %v423, 32
        %v431 = vpop.permute.xlu0 %430
        %v433 = vmul.f32 %v422, %v431
        %435 = vrot.lane.b32.xlu0 %v433, 32
        %v436 = vpop.permute.xlu0 %435
        %v438 = vadd.f32 %v428, %v436
        %v439 = vtanh.pop %v438
        %441 = vrot.lane.b32.xlu0 %v439, 32
        %v442 = vpop.permute.xlu0 %441
        %v444 = vmul.f32 %v422, %v442
        %446 = vrot.lane.b32.xlu0 %v444, 64
        %v447 = vpop.permute.xlu0 %446
        %449 = vst.msk [vmem:[#allocation2] sm:$0xff] %vm379, %v447
        %451 = vrot.lane.b32.xlu0 %v438, 96
        %v452 = vpop.permute.xlu0 %451
        %454 = vst.msk [vmem:[#allocation3] sm:$0xff] %vm379, %v452
        %s455 = scalar_lea.vmem [#allocation2], 8
        %v456 = vld [vmem:[%s455] sm:$0xff]
        %s457 = scalar_lea.vmem [#allocation3], 8
        %v458 = vld [vmem:[%s457] sm:$0xff]
        %v460 = vsel %vm379, %v456, 0
        %462 = vmatpush.msra.mxu0 0.0
        %463 = vmatpush.msra.mxu0 0.0
        %464 = vmatpush.msra.mxu0 0.0
        %465 = vmatpush.msra.mxu0 0.0
        %466 = vmatpush.msra.mxu0 0.0
        %467 = vmatpush.msra.mxu0 0.0
        %468 = vmatpush.msra.mxu0 0.0
        %469 = vmatpush.msra.mxu0 0.0
        %470 = vmatpush.msra.mxu0 0.0
        %471 = vmatpush.msra.mxu0 0.0
        %472 = vmatpush.msra.mxu0 0.0
        %473 = vmatpush.msra.mxu0 0.0
        %474 = vmatpush.msra.mxu0 %v374
        %475 = vmatpush.msra.mxu0 %v373
        %476 = vmatpush.msra.mxu0 %v372
        %477 = vmatpush.msra.mxu0 %v371
        %478 = vmatmul.f32.gmra.mxu0 %v460
        %v479 = vpop.f32.mrf.mxu0
        %v480 = vadd.f32 0.0, %v479
        %481 = vdwg.mxu0
        %v482 = vsel %vm379, %v447, 0
        %484 = vmatpush.msra.mxu0 0.0
        %485 = vmatpush.msra.mxu0 0.0
        %486 = vmatpush.msra.mxu0 0.0
        %487 = vmatpush.msra.mxu0 0.0
        %488 = vmatpush.msra.mxu0 0.0
        %489 = vmatpush.msra.mxu0 0.0
        %490 = vmatpush.msra.mxu0 0.0
        %491 = vmatpush.msra.mxu0 0.0
        %492 = vmatpush.msra.mxu0 0.0
        %493 = vmatpush.msra.mxu0 0.0
        %494 = vmatpush.msra.mxu0 0.0
        %495 = vmatpush.msra.mxu0 0.0
        %496 = vmatpush.msra.mxu0 %v370
        %497 = vmatpush.msra.mxu0 %v369
        %498 = vmatpush.msra.mxu0 %v368
        %499 = vmatpush.msra.mxu0 %v367
        %500 = vmatmul.f32.gmra.mxu0 %v482
        %v501 = vpop.f32.mrf.mxu0
        %v502 = vadd.f32 %v480, %v501
        %503 = vdwg.mxu0
        %v505 = vperm.slane %v375, 0
        %v507 = vadd.f32 %v502, %v505
        %v508 = vxor.u32 %v507, 2147483648
        %v509 = vmul.f32 %v508, 1.442695
        %v510 = vpow.pop %v509
        %v511 = vadd.f32 %v510, 1.0
        %v512 = vrcp.pop %v511
        %v513 = vmul.f32 %v511, %v512
        %v514 = vsub.f32 1.0, %v513
        %v515 = vmul.f32 %v512, %v514
        %v516 = vadd.f32 %v512, %v515
        %vm517 = vweird.f32 %v511
        %vm518 = vweird.f32 %v512
        %vm519 = vmor %vm517, %vm518
        %v520 = vsel %vm519, %v512, %v516
        %v521 = vand.u32 2147483647, %v511
        %vm522 = vcmp.eq.f32.partialorder %v521, 8.507059e+37
        %v523 = vand.u32 %v511, 2147483648
        %v524 = vor.u32 1.1754944e-38, %v523
        %v525 = vsel %vm522, %v524, %v520
        %v526 = vmul.f32 1.0, %v525
        %v527 = vtanh.pop %v507
        %529 = vrot.lane.b32.xlu0 %v458, 32
        %v530 = vpop.permute.xlu0 %529
        %v532 = vmul.f32 %v526, %v530
        %534 = vrot.lane.b32.xlu0 %v527, 32
        %v535 = vpop.permute.xlu0 %534
        %v537 = vmul.f32 %v526, %v535
        %539 = vrot.lane.b32.xlu0 %v537, 32
        %v540 = vpop.permute.xlu0 %539
        %v542 = vadd.f32 %v532, %v540
        %v543 = vtanh.pop %v542
        %545 = vrot.lane.b32.xlu0 %v543, 32
        %v546 = vpop.permute.xlu0 %545
        %v548 = vmul.f32 %v526, %v546
        %550 = vrot.lane.b32.xlu0 %v548, 64
        %v551 = vpop.permute.xlu0 %550
        %553 = vst.msk [vmem:[%s455] sm:$0xff] %vm379, %v551
        %555 = vrot.lane.b32.xlu0 %v542, 96
        %v556 = vpop.permute.xlu0 %555
        %558 = vst.msk [vmem:[%s457] sm:$0xff] %vm379, %v556
        %559 = vst.msk [vmem:[%s345] sm:$0xff] %vm379, %v551
        %560 = vst.msk [vmem:[%s352] sm:$0xff] %vm379, %v556
        %v561 = vld [vmem:[#allocation2] sm:$0xff]
        %v562 = vld [vmem:[#allocation3] sm:$0xff]
        %s563 = scalar_lea.vmem %s303, 8 [#allocation4]
        %v564 = vld [vmem:[%s563] sm:$0xff]
        %v566 = vsel %vm379, %v561, 0
        %568 = vmatpush.msra.mxu0 0.0
        %569 = vmatpush.msra.mxu0 0.0
        %570 = vmatpush.msra.mxu0 0.0
        %571 = vmatpush.msra.mxu0 0.0
        %572 = vmatpush.msra.mxu0 0.0
        %573 = vmatpush.msra.mxu0 0.0
        %574 = vmatpush.msra.mxu0 0.0
        %575 = vmatpush.msra.mxu0 0.0
        %576 = vmatpush.msra.mxu0 0.0
        %577 = vmatpush.msra.mxu0 0.0
        %578 = vmatpush.msra.mxu0 0.0
        %579 = vmatpush.msra.mxu0 0.0
        %580 = vmatpush.msra.mxu0 %v366
        %581 = vmatpush.msra.mxu0 %v365
        %582 = vmatpush.msra.mxu0 %v364
        %583 = vmatpush.msra.mxu0 %v363
        %584 = vmatmul.f32.gmra.mxu0 %v566
        %v585 = vpop.f32.mrf.mxu0
        %v586 = vadd.f32 0.0, %v585
        %587 = vdwg.mxu0
        %v588 = vadd.f32 %v564, %v586
        %v589 = vxor.u32 %v588, 2147483648
        %v590 = vmul.f32 %v589, 1.442695
        %v591 = vpow.pop %v590
        %v592 = vadd.f32 %v591, 1.0
        %v593 = vrcp.pop %v592
        %v594 = vmul.f32 %v592, %v593
        %v595 = vsub.f32 1.0, %v594
        %v596 = vmul.f32 %v593, %v595
        %v597 = vadd.f32 %v593, %v596
        %vm598 = vweird.f32 %v592
        %vm599 = vweird.f32 %v593
        %vm600 = vmor %vm598, %vm599
        %v601 = vsel %vm600, %v593, %v597
        %v602 = vand.u32 2147483647, %v592
        %vm603 = vcmp.eq.f32.partialorder %v602, 8.507059e+37
        %v604 = vand.u32 %v592, 2147483648
        %v605 = vor.u32 1.1754944e-38, %v604
        %v606 = vsel %vm603, %v605, %v601
        %v607 = vmul.f32 1.0, %v606
        %v608 = vtanh.pop %v588
        %610 = vrot.lane.b32.xlu0 %v562, 32
        %v611 = vpop.permute.xlu0 %610
        %v613 = vmul.f32 %v607, %v611
        %615 = vrot.lane.b32.xlu0 %v608, 32
        %v616 = vpop.permute.xlu0 %615
        %v618 = vmul.f32 %v607, %v616
        %620 = vrot.lane.b32.xlu0 %v618, 32
        %v621 = vpop.permute.xlu0 %620
        %v623 = vadd.f32 %v613, %v621
        %v624 = vtanh.pop %v623
        %626 = vrot.lane.b32.xlu0 %v624, 32
        %v627 = vpop.permute.xlu0 %626
        %v629 = vmul.f32 %v607, %v627
        %631 = vrot.lane.b32.xlu0 %v629, 64
        %v632 = vpop.permute.xlu0 %631
        %634 = vst.msk [vmem:[#allocation2] sm:$0xff] %vm379, %v632
        %636 = vrot.lane.b32.xlu0 %v623, 96
        %v637 = vpop.permute.xlu0 %636
        %639 = vst.msk [vmem:[#allocation3] sm:$0xff] %vm379, %v637
        %v640 = vld [vmem:[%s455] sm:$0xff]
        %v641 = vld [vmem:[%s457] sm:$0xff]
        %v643 = vsel %vm379, %v640, 0
        %645 = vmatpush.msra.mxu0 0.0
        %646 = vmatpush.msra.mxu0 0.0
        %647 = vmatpush.msra.mxu0 0.0
        %648 = vmatpush.msra.mxu0 0.0
        %649 = vmatpush.msra.mxu0 0.0
        %650 = vmatpush.msra.mxu0 0.0
        %651 = vmatpush.msra.mxu0 0.0
        %652 = vmatpush.msra.mxu0 0.0
        %653 = vmatpush.msra.mxu0 0.0
        %654 = vmatpush.msra.mxu0 0.0
        %655 = vmatpush.msra.mxu0 0.0
        %656 = vmatpush.msra.mxu0 0.0
        %657 = vmatpush.msra.mxu0 %v374
        %658 = vmatpush.msra.mxu0 %v373
        %659 = vmatpush.msra.mxu0 %v372
        %660 = vmatpush.msra.mxu0 %v371
        %661 = vmatmul.f32.gmra.mxu0 %v643
        %v662 = vpop.f32.mrf.mxu0
        %v663 = vadd.f32 0.0, %v662
        %664 = vdwg.mxu0
        %v665 = vsel %vm379, %v632, 0
        %667 = vmatpush.msra.mxu0 0.0
        %668 = vmatpush.msra.mxu0 0.0
        %669 = vmatpush.msra.mxu0 0.0
        %670 = vmatpush.msra.mxu0 0.0
        %671 = vmatpush.msra.mxu0 0.0
        %672 = vmatpush.msra.mxu0 0.0
        %673 = vmatpush.msra.mxu0 0.0
        %674 = vmatpush.msra.mxu0 0.0
        %675 = vmatpush.msra.mxu0 0.0
        %676 = vmatpush.msra.mxu0 0.0
        %677 = vmatpush.msra.mxu0 0.0
        %678 = vmatpush.msra.mxu0 0.0
        %679 = vmatpush.msra.mxu0 %v370
        %680 = vmatpush.msra.mxu0 %v369
        %681 = vmatpush.msra.mxu0 %v368
        %682 = vmatpush.msra.mxu0 %v367
        %683 = vmatmul.f32.gmra.mxu0 %v665
        %v684 = vpop.f32.mrf.mxu0
        %v685 = vadd.f32 %v663, %v684
        %686 = vdwg.mxu0
        %v687 = vadd.f32 %v685, %v505
        %v688 = vxor.u32 %v687, 2147483648
        %v689 = vmul.f32 %v688, 1.442695
        %v690 = vpow.pop %v689
        %v691 = vadd.f32 %v690, 1.0
        %v692 = vrcp.pop %v691
        %v693 = vmul.f32 %v691, %v692
        %v694 = vsub.f32 1.0, %v693
        %v695 = vmul.f32 %v692, %v694
        %v696 = vadd.f32 %v692, %v695
        %vm697 = vweird.f32 %v691
        %vm698 = vweird.f32 %v692
        %vm699 = vmor %vm697, %vm698
        %v700 = vsel %vm699, %v692, %v696
        %v701 = vand.u32 2147483647, %v691
        %vm702 = vcmp.eq.f32.partialorder %v701, 8.507059e+37
        %v703 = vand.u32 %v691, 2147483648
        %v704 = vor.u32 1.1754944e-38, %v703
        %v705 = vsel %vm702, %v704, %v700
        %v706 = vmul.f32 1.0, %v705
        %v707 = vtanh.pop %v687
        %709 = vrot.lane.b32.xlu0 %v641, 32
        %v710 = vpop.permute.xlu0 %709
        %v712 = vmul.f32 %v706, %v710
        %714 = vrot.lane.b32.xlu0 %v707, 32
        %v715 = vpop.permute.xlu0 %714
        %v717 = vmul.f32 %v706, %v715
        %719 = vrot.lane.b32.xlu0 %v717, 32
        %v720 = vpop.permute.xlu0 %719
        %v722 = vadd.f32 %v712, %v720
        %v723 = vtanh.pop %v722
        %725 = vrot.lane.b32.xlu0 %v723, 32
        %v726 = vpop.permute.xlu0 %725
        %v728 = vmul.f32 %v706, %v726
        %730 = vrot.lane.b32.xlu0 %v728, 64
        %v731 = vpop.permute.xlu0 %730
        %733 = vst.msk [vmem:[%s455] sm:$0xff] %vm379, %v731
        %735 = vrot.lane.b32.xlu0 %v722, 96
        %v736 = vpop.permute.xlu0 %735
        %738 = vst.msk [vmem:[%s457] sm:$0xff] %vm379, %v736
        %739 = vrot.lane.b32.xlu0 %v728, 96
        %v740 = vpop.permute.xlu0 %739
        %vm742 = vcmask 523520
        %743 = vst.msk [vmem:[%s345] sm:$0xff] %vm742, %v740
        %744 = vst.msk [vmem:[%s352] sm:$0xff] %vm742, %v722
        %v745 = vld [vmem:[#allocation2] sm:$0xff]
        %v746 = vld [vmem:[#allocation3] sm:$0xff]
        %s747 = scalar_lea.vmem %s303, 16 [#allocation4]
        %v748 = vld [vmem:[%s747] sm:$0xff]
        %v750 = vsel %vm379, %v745, 0
        %752 = vmatpush.msra.mxu0 0.0
        %753 = vmatpush.msra.mxu0 0.0
        %754 = vmatpush.msra.mxu0 0.0
        %755 = vmatpush.msra.mxu0 0.0
        %756 = vmatpush.msra.mxu0 0.0
        %757 = vmatpush.msra.mxu0 0.0
        %758 = vmatpush.msra.mxu0 0.0
        %759 = vmatpush.msra.mxu0 0.0
        %760 = vmatpush.msra.mxu0 0.0
        %761 = vmatpush.msra.mxu0 0.0
        %762 = vmatpush.msra.mxu0 0.0
        %763 = vmatpush.msra.mxu0 0.0
        %764 = vmatpush.msra.mxu0 %v366
        %765 = vmatpush.msra.mxu0 %v365
        %766 = vmatpush.msra.mxu0 %v364
        %767 = vmatpush.msra.mxu0 %v363
        %768 = vmatmul.f32.gmra.mxu0 %v750
        %v769 = vpop.f32.mrf.mxu0
        %v770 = vadd.f32 0.0, %v769
        %771 = vdwg.mxu0
        %v772 = vadd.f32 %v748, %v770
        %v773 = vxor.u32 %v772, 2147483648
        %v774 = vmul.f32 %v773, 1.442695
        %v775 = vpow.pop %v774
        %v776 = vadd.f32 %v775, 1.0
        %v777 = vrcp.pop %v776
        %v778 = vmul.f32 %v776, %v777
        %v779 = vsub.f32 1.0, %v778
        %v780 = vmul.f32 %v777, %v779
        %v781 = vadd.f32 %v777, %v780
        %vm782 = vweird.f32 %v776
        %vm783 = vweird.f32 %v777
        %vm784 = vmor %vm782, %vm783
        %v785 = vsel %vm784, %v777, %v781
        %v786 = vand.u32 2147483647, %v776
        %vm787 = vcmp.eq.f32.partialorder %v786, 8.507059e+37
        %v788 = vand.u32 %v776, 2147483648
        %v789 = vor.u32 1.1754944e-38, %v788
        %v790 = vsel %vm787, %v789, %v785
        %v791 = vmul.f32 1.0, %v790
        %v792 = vtanh.pop %v772
        %794 = vrot.lane.b32.xlu0 %v746, 32
        %v795 = vpop.permute.xlu0 %794
        %v797 = vmul.f32 %v791, %v795
        %799 = vrot.lane.b32.xlu0 %v792, 32
        %v800 = vpop.permute.xlu0 %799
        %v802 = vmul.f32 %v791, %v800
        %804 = vrot.lane.b32.xlu0 %v802, 32
        %v805 = vpop.permute.xlu0 %804
        %v807 = vadd.f32 %v797, %v805
        %v808 = vtanh.pop %v807
        %810 = vrot.lane.b32.xlu0 %v808, 32
        %v811 = vpop.permute.xlu0 %810
        %v813 = vmul.f32 %v791, %v811
        %815 = vrot.lane.b32.xlu0 %v813, 64
        %v816 = vpop.permute.xlu0 %815
        %818 = vst.msk [vmem:[#allocation2] sm:$0xff] %vm379, %v816
        %820 = vrot.lane.b32.xlu0 %v807, 96
        %v821 = vpop.permute.xlu0 %820
        %823 = vst.msk [vmem:[#allocation3] sm:$0xff] %vm379, %v821
        %v824 = vld [vmem:[%s455] sm:$0xff]
        %v825 = vld [vmem:[%s457] sm:$0xff]
        %v827 = vsel %vm379, %v824, 0
        %829 = vmatpush.msra.mxu0 0.0
        %830 = vmatpush.msra.mxu0 0.0
        %831 = vmatpush.msra.mxu0 0.0
        %832 = vmatpush.msra.mxu0 0.0
        %833 = vmatpush.msra.mxu0 0.0
        %834 = vmatpush.msra.mxu0 0.0
        %835 = vmatpush.msra.mxu0 0.0
        %836 = vmatpush.msra.mxu0 0.0
        %837 = vmatpush.msra.mxu0 0.0
        %838 = vmatpush.msra.mxu0 0.0
        %839 = vmatpush.msra.mxu0 0.0
        %840 = vmatpush.msra.mxu0 0.0
        %841 = vmatpush.msra.mxu0 %v374
        %842 = vmatpush.msra.mxu0 %v373
        %843 = vmatpush.msra.mxu0 %v372
        %844 = vmatpush.msra.mxu0 %v371
        %845 = vmatmul.f32.gmra.mxu0 %v827
        %v846 = vpop.f32.mrf.mxu0
        %v847 = vadd.f32 0.0, %v846
        %848 = vdwg.mxu0
        %v849 = vsel %vm379, %v816, 0
        %851 = vmatpush.msra.mxu0 0.0
        %852 = vmatpush.msra.mxu0 0.0
        %853 = vmatpush.msra.mxu0 0.0
        %854 = vmatpush.msra.mxu0 0.0
        %855 = vmatpush.msra.mxu0 0.0
        %856 = vmatpush.msra.mxu0 0.0
        %857 = vmatpush.msra.mxu0 0.0
        %858 = vmatpush.msra.mxu0 0.0
        %859 = vmatpush.msra.mxu0 0.0
        %860 = vmatpush.msra.mxu0 0.0
        %861 = vmatpush.msra.mxu0 0.0
        %862 = vmatpush.msra.mxu0 0.0
        %863 = vmatpush.msra.mxu0 %v370
        %864 = vmatpush.msra.mxu0 %v369
        %865 = vmatpush.msra.mxu0 %v368
        %866 = vmatpush.msra.mxu0 %v367
        %867 = vmatmul.f32.gmra.mxu0 %v849
        %v868 = vpop.f32.mrf.mxu0
        %v869 = vadd.f32 %v847, %v868
        %870 = vdwg.mxu0
        %v871 = vadd.f32 %v869, %v505
        %v872 = vxor.u32 %v871, 2147483648
        %v873 = vmul.f32 %v872, 1.442695
        %v874 = vpow.pop %v873
        %v875 = vadd.f32 %v874, 1.0
        %v876 = vrcp.pop %v875
        %v877 = vmul.f32 %v875, %v876
        %v878 = vsub.f32 1.0, %v877
        %v879 = vmul.f32 %v876, %v878
        %v880 = vadd.f32 %v876, %v879
        %vm881 = vweird.f32 %v875
        %vm882 = vweird.f32 %v876
        %vm883 = vmor %vm881, %vm882
        %v884 = vsel %vm883, %v876, %v880
        %v885 = vand.u32 2147483647, %v875
        %vm886 = vcmp.eq.f32.partialorder %v885, 8.507059e+37
        %v887 = vand.u32 %v875, 2147483648
        %v888 = vor.u32 1.1754944e-38, %v887
        %v889 = vsel %vm886, %v888, %v884
        %v890 = vmul.f32 1.0, %v889
        %v891 = vtanh.pop %v871
        %893 = vrot.lane.b32.xlu0 %v825, 32
        %v894 = vpop.permute.xlu0 %893
        %v896 = vmul.f32 %v890, %v894
        %898 = vrot.lane.b32.xlu0 %v891, 32
        %v899 = vpop.permute.xlu0 %898
        %v901 = vmul.f32 %v890, %v899
        %903 = vrot.lane.b32.xlu0 %v901, 32
        %v904 = vpop.permute.xlu0 %903
        %v906 = vadd.f32 %v896, %v904
        %v907 = vtanh.pop %v906
        %909 = vrot.lane.b32.xlu0 %v907, 32
        %v910 = vpop.permute.xlu0 %909
        %v912 = vmul.f32 %v890, %v910
        %914 = vrot.lane.b32.xlu0 %v912, 64
        %v915 = vpop.permute.xlu0 %914
        %917 = vst.msk [vmem:[%s455] sm:$0xff] %vm379, %v915
        %919 = vrot.lane.b32.xlu0 %v906, 96
        %v920 = vpop.permute.xlu0 %919
        %922 = vst.msk [vmem:[%s457] sm:$0xff] %vm379, %v920
        %vm923 = vcmask 785920
        %924 = vst.msk [vmem:[%s345] sm:$0xff] %vm923, %v912
        %925 = vrot.lane.b32.xlu0 %v906, 32
        %v926 = vpop.permute.xlu0 %925
        %928 = vst.msk [vmem:[%s352] sm:$0xff] %vm923, %v926
        %v929 = vld [vmem:[#allocation2] sm:$0xff]
        %v930 = vld [vmem:[#allocation3] sm:$0xff]
        %s931 = scalar_lea.vmem %s303, 24 [#allocation4]
        %v932 = vld [vmem:[%s931] sm:$0xff]
        %v934 = vsel %vm379, %v929, 0
        %936 = vmatpush.msra.mxu0 0.0
        %937 = vmatpush.msra.mxu0 0.0
        %938 = vmatpush.msra.mxu0 0.0
        %939 = vmatpush.msra.mxu0 0.0
        %940 = vmatpush.msra.mxu0 0.0
        %941 = vmatpush.msra.mxu0 0.0
        %942 = vmatpush.msra.mxu0 0.0
        %943 = vmatpush.msra.mxu0 0.0
        %944 = vmatpush.msra.mxu0 0.0
        %945 = vmatpush.msra.mxu0 0.0
        %946 = vmatpush.msra.mxu0 0.0
        %947 = vmatpush.msra.mxu0 0.0
        %948 = vmatpush.msra.mxu0 %v366
        %949 = vmatpush.msra.mxu0 %v365
        %950 = vmatpush.msra.mxu0 %v364
        %951 = vmatpush.msra.mxu0 %v363
        %952 = vmatmul.f32.gmra.mxu0 %v934
        %v953 = vpop.f32.mrf.mxu0
        %v954 = vadd.f32 0.0, %v953
        %955 = vdwg.mxu0
        %v956 = vadd.f32 %v932, %v954
        %v957 = vxor.u32 %v956, 2147483648
        %v958 = vmul.f32 %v957, 1.442695
        %v959 = vpow.pop %v958
        %v960 = vadd.f32 %v959, 1.0
        %v961 = vrcp.pop %v960
        %v962 = vmul.f32 %v960, %v961
        %v963 = vsub.f32 1.0, %v962
        %v964 = vmul.f32 %v961, %v963
        %v965 = vadd.f32 %v961, %v964
        %vm966 = vweird.f32 %v960
        %vm967 = vweird.f32 %v961
        %vm968 = vmor %vm966, %vm967
        %v969 = vsel %vm968, %v961, %v965
        %v970 = vand.u32 2147483647, %v960
        %vm971 = vcmp.eq.f32.partialorder %v970, 8.507059e+37
        %v972 = vand.u32 %v960, 2147483648
        %v973 = vor.u32 1.1754944e-38, %v972
        %v974 = vsel %vm971, %v973, %v969
        %v975 = vmul.f32 1.0, %v974
        %v976 = vtanh.pop %v956
        %978 = vrot.lane.b32.xlu0 %v930, 32
        %v979 = vpop.permute.xlu0 %978
        %v981 = vmul.f32 %v975, %v979
        %983 = vrot.lane.b32.xlu0 %v976, 32
        %v984 = vpop.permute.xlu0 %983
        %v986 = vmul.f32 %v975, %v984
        %988 = vrot.lane.b32.xlu0 %v986, 32
        %v989 = vpop.permute.xlu0 %988
        %v991 = vadd.f32 %v981, %v989
        %v992 = vtanh.pop %v991
        %994 = vrot.lane.b32.xlu0 %v992, 32
        %v995 = vpop.permute.xlu0 %994
        %v997 = vmul.f32 %v975, %v995
        %999 = vrot.lane.b32.xlu0 %v997, 64
        %v1000 = vpop.permute.xlu0 %999
        %1002 = vst.msk [vmem:[#allocation2] sm:$0xff] %vm379, %v1000
        %1004 = vrot.lane.b32.xlu0 %v991, 96
        %v1005 = vpop.permute.xlu0 %1004
        %1007 = vst.msk [vmem:[#allocation3] sm:$0xff] %vm379, %v1005
        %v1008 = vld [vmem:[%s455] sm:$0xff]
        %v1009 = vld [vmem:[%s457] sm:$0xff]
        %v1011 = vsel %vm379, %v1008, 0
        %1013 = vmatpush.msra.mxu0 0.0
        %1014 = vmatpush.msra.mxu0 0.0
        %1015 = vmatpush.msra.mxu0 0.0
        %1016 = vmatpush.msra.mxu0 0.0
        %1017 = vmatpush.msra.mxu0 0.0
        %1018 = vmatpush.msra.mxu0 0.0
        %1019 = vmatpush.msra.mxu0 0.0
        %1020 = vmatpush.msra.mxu0 0.0
        %1021 = vmatpush.msra.mxu0 0.0
        %1022 = vmatpush.msra.mxu0 0.0
        %1023 = vmatpush.msra.mxu0 0.0
        %1024 = vmatpush.msra.mxu0 0.0
        %1025 = vmatpush.msra.mxu0 %v374
        %1026 = vmatpush.msra.mxu0 %v373
        %1027 = vmatpush.msra.mxu0 %v372
        %1028 = vmatpush.msra.mxu0 %v371
        %1029 = vmatmul.f32.gmra.mxu0 %v1011
        %v1030 = vpop.f32.mrf.mxu0
        %v1031 = vadd.f32 0.0, %v1030
        %1032 = vdwg.mxu0
        %v1033 = vsel %vm379, %v1000, 0
        %1035 = vmatpush.msra.mxu0 0.0
        %1036 = vmatpush.msra.mxu0 0.0
        %1037 = vmatpush.msra.mxu0 0.0
        %1038 = vmatpush.msra.mxu0 0.0
        %1039 = vmatpush.msra.mxu0 0.0
        %1040 = vmatpush.msra.mxu0 0.0
        %1041 = vmatpush.msra.mxu0 0.0
        %1042 = vmatpush.msra.mxu0 0.0
        %1043 = vmatpush.msra.mxu0 0.0
        %1044 = vmatpush.msra.mxu0 0.0
        %1045 = vmatpush.msra.mxu0 0.0
        %1046 = vmatpush.msra.mxu0 0.0
        %1047 = vmatpush.msra.mxu0 %v370
        %1048 = vmatpush.msra.mxu0 %v369
        %1049 = vmatpush.msra.mxu0 %v368
        %1050 = vmatpush.msra.mxu0 %v367
        %1051 = vmatmul.f32.gmra.mxu0 %v1033
        %v1052 = vpop.f32.mrf.mxu0
        %v1053 = vadd.f32 %v1031, %v1052
        %1054 = vdwg.mxu0
        %v1055 = vadd.f32 %v1053, %v505
        %v1056 = vxor.u32 %v1055, 2147483648
        %v1057 = vmul.f32 %v1056, 1.442695
        %v1058 = vpow.pop %v1057
        %v1059 = vadd.f32 %v1058, 1.0
        %v1060 = vrcp.pop %v1059
        %v1061 = vmul.f32 %v1059, %v1060
        %v1062 = vsub.f32 1.0, %v1061
        %v1063 = vmul.f32 %v1060, %v1062
        %v1064 = vadd.f32 %v1060, %v1063
        %vm1065 = vweird.f32 %v1059
        %vm1066 = vweird.f32 %v1060
        %vm1067 = vmor %vm1065, %vm1066
        %v1068 = vsel %vm1067, %v1060, %v1064
        %v1069 = vand.u32 2147483647, %v1059
        %vm1070 = vcmp.eq.f32.partialorder %v1069, 8.507059e+37
        %v1071 = vand.u32 %v1059, 2147483648
        %v1072 = vor.u32 1.1754944e-38, %v1071
        %v1073 = vsel %vm1070, %v1072, %v1068
        %v1074 = vmul.f32 1.0, %v1073
        %v1075 = vtanh.pop %v1055
        %1077 = vrot.lane.b32.xlu0 %v1009, 32
        %v1078 = vpop.permute.xlu0 %1077
        %v1080 = vmul.f32 %v1074, %v1078
        %1082 = vrot.lane.b32.xlu0 %v1075, 32
        %v1083 = vpop.permute.xlu0 %1082
        %v1085 = vmul.f32 %v1074, %v1083
        %1087 = vrot.lane.b32.xlu0 %v1085, 32
        %v1088 = vpop.permute.xlu0 %1087
        %v1090 = vadd.f32 %v1080, %v1088
        %v1091 = vtanh.pop %v1090
        %1093 = vrot.lane.b32.xlu0 %v1091, 32
        %v1094 = vpop.permute.xlu0 %1093
        %v1096 = vmul.f32 %v1074, %v1094
        %1098 = vrot.lane.b32.xlu0 %v1096, 64
        %v1099 = vpop.permute.xlu0 %1098
        %1101 = vst.msk [vmem:[%s455] sm:$0xff] %vm379, %v1099
        %1103 = vrot.lane.b32.xlu0 %v1090, 96
        %v1104 = vpop.permute.xlu0 %1103
        %1106 = vst.msk [vmem:[%s457] sm:$0xff] %vm379, %v1104
        %1107 = vrot.lane.b32.xlu0 %v1096, 32
        %v1108 = vpop.permute.xlu0 %1107
        %vm1110 = vcmask 1048320
        %1111 = vst.msk [vmem:[%s345] sm:$0xff] %vm1110, %v1108
        %1112 = vrot.lane.b32.xlu0 %v1090, 64
        %v1113 = vpop.permute.xlu0 %1112
        %1115 = vst.msk [vmem:[%s352] sm:$0xff] %vm1110, %v1113
        %v1116 = vld [vmem:[#allocation2] sm:$0xff]
        %v1117 = vld [vmem:[#allocation3] sm:$0xff]
        %s1118 = scalar_lea.vmem %s303, 32 [#allocation4]
        %v1119 = vld [vmem:[%s1118] sm:$0xff]
        %v1121 = vsel %vm379, %v1116, 0
        %1123 = vmatpush.msra.mxu0 0.0
        %1124 = vmatpush.msra.mxu0 0.0
        %1125 = vmatpush.msra.mxu0 0.0
        %1126 = vmatpush.msra.mxu0 0.0
        %1127 = vmatpush.msra.mxu0 0.0
        %1128 = vmatpush.msra.mxu0 0.0
        %1129 = vmatpush.msra.mxu0 0.0
        %1130 = vmatpush.msra.mxu0 0.0
        %1131 = vmatpush.msra.mxu0 0.0
        %1132 = vmatpush.msra.mxu0 0.0
        %1133 = vmatpush.msra.mxu0 0.0
        %1134 = vmatpush.msra.mxu0 0.0
        %1135 = vmatpush.msra.mxu0 %v366
        %1136 = vmatpush.msra.mxu0 %v365
        %1137 = vmatpush.msra.mxu0 %v364
        %1138 = vmatpush.msra.mxu0 %v363
        %1139 = vmatmul.f32.gmra.mxu0 %v1121
        %v1140 = vpop.f32.mrf.mxu0
        %v1141 = vadd.f32 0.0, %v1140
        %1142 = vdwg.mxu0
        %v1143 = vadd.f32 %v1119, %v1141
        %v1144 = vxor.u32 %v1143, 2147483648
        %v1145 = vmul.f32 %v1144, 1.442695
        %v1146 = vpow.pop %v1145
        %v1147 = vadd.f32 %v1146, 1.0
        %v1148 = vrcp.pop %v1147
        %v1149 = vmul.f32 %v1147, %v1148
        %v1150 = vsub.f32 1.0, %v1149
        %v1151 = vmul.f32 %v1148, %v1150
        %v1152 = vadd.f32 %v1148, %v1151
        %vm1153 = vweird.f32 %v1147
        %vm1154 = vweird.f32 %v1148
        %vm1155 = vmor %vm1153, %vm1154
        %v1156 = vsel %vm1155, %v1148, %v1152
        %v1157 = vand.u32 2147483647, %v1147
        %vm1158 = vcmp.eq.f32.partialorder %v1157, 8.507059e+37
        %v1159 = vand.u32 %v1147, 2147483648
        %v1160 = vor.u32 1.1754944e-38, %v1159
        %v1161 = vsel %vm1158, %v1160, %v1156
        %v1162 = vmul.f32 1.0, %v1161
        %v1163 = vtanh.pop %v1143
        %1165 = vrot.lane.b32.xlu0 %v1117, 32
        %v1166 = vpop.permute.xlu0 %1165
        %v1168 = vmul.f32 %v1162, %v1166
        %1170 = vrot.lane.b32.xlu0 %v1163, 32
        %v1171 = vpop.permute.xlu0 %1170
        %v1173 = vmul.f32 %v1162, %v1171
        %1175 = vrot.lane.b32.xlu0 %v1173, 32
        %v1176 = vpop.permute.xlu0 %1175
        %v1178 = vadd.f32 %v1168, %v1176
        %v1179 = vtanh.pop %v1178
        %1181 = vrot.lane.b32.xlu0 %v1179, 32
        %v1182 = vpop.permute.xlu0 %1181
        %v1184 = vmul.f32 %v1162, %v1182
        %1186 = vrot.lane.b32.xlu0 %v1184, 64
        %v1187 = vpop.permute.xlu0 %1186
        %1189 = vst.msk [vmem:[#allocation2] sm:$0xff] %vm379, %v1187
        %1191 = vrot.lane.b32.xlu0 %v1178, 96
        %v1192 = vpop.permute.xlu0 %1191
        %1194 = vst.msk [vmem:[#allocation3] sm:$0xff] %vm379, %v1192
        %v1195 = vld [vmem:[%s455] sm:$0xff]
        %v1196 = vld [vmem:[%s457] sm:$0xff]
        %v1198 = vsel %vm379, %v1195, 0
        %1200 = vmatpush.msra.mxu0 0.0
        %1201 = vmatpush.msra.mxu0 0.0
        %1202 = vmatpush.msra.mxu0 0.0
        %1203 = vmatpush.msra.mxu0 0.0
        %1204 = vmatpush.msra.mxu0 0.0
        %1205 = vmatpush.msra.mxu0 0.0
        %1206 = vmatpush.msra.mxu0 0.0
        %1207 = vmatpush.msra.mxu0 0.0
        %1208 = vmatpush.msra.mxu0 0.0
        %1209 = vmatpush.msra.mxu0 0.0
        %1210 = vmatpush.msra.mxu0 0.0
        %1211 = vmatpush.msra.mxu0 0.0
        %1212 = vmatpush.msra.mxu0 %v374
        %1213 = vmatpush.msra.mxu0 %v373
        %1214 = vmatpush.msra.mxu0 %v372
        %1215 = vmatpush.msra.mxu0 %v371
        %1216 = vmatmul.f32.gmra.mxu0 %v1198
        %v1217 = vpop.f32.mrf.mxu0
        %v1218 = vadd.f32 0.0, %v1217
        %1219 = vdwg.mxu0
        %v1220 = vsel %vm379, %v1187, 0
        %1222 = vmatpush.msra.mxu0 0.0
        %1223 = vmatpush.msra.mxu0 0.0
        %1224 = vmatpush.msra.mxu0 0.0
        %1225 = vmatpush.msra.mxu0 0.0
        %1226 = vmatpush.msra.mxu0 0.0
        %1227 = vmatpush.msra.mxu0 0.0
        %1228 = vmatpush.msra.mxu0 0.0
        %1229 = vmatpush.msra.mxu0 0.0
        %1230 = vmatpush.msra.mxu0 0.0
        %1231 = vmatpush.msra.mxu0 0.0
        %1232 = vmatpush.msra.mxu0 0.0
        %1233 = vmatpush.msra.mxu0 0.0
        %1234 = vmatpush.msra.mxu0 %v370
        %1235 = vmatpush.msra.mxu0 %v369
        %1236 = vmatpush.msra.mxu0 %v368
        %1237 = vmatpush.msra.mxu0 %v367
        %1238 = vmatmul.f32.gmra.mxu0 %v1220
        %v1239 = vpop.f32.mrf.mxu0
        %v1240 = vadd.f32 %v1218, %v1239
        %1241 = vdwg.mxu0
        %v1242 = vadd.f32 %v1240, %v505
        %v1243 = vxor.u32 %v1242, 2147483648
        %v1244 = vmul.f32 %v1243, 1.442695
        %v1245 = vpow.pop %v1244
        %v1246 = vadd.f32 %v1245, 1.0
        %v1247 = vrcp.pop %v1246
        %v1248 = vmul.f32 %v1246, %v1247
        %v1249 = vsub.f32 1.0, %v1248
        %v1250 = vmul.f32 %v1247, %v1249
        %v1251 = vadd.f32 %v1247, %v1250
        %vm1252 = vweird.f32 %v1246
        %vm1253 = vweird.f32 %v1247
        %vm1254 = vmor %vm1252, %vm1253
        %v1255 = vsel %vm1254, %v1247, %v1251
        %v1256 = vand.u32 2147483647, %v1246
        %vm1257 = vcmp.eq.f32.partialorder %v1256, 8.507059e+37
        %v1258 = vand.u32 %v1246, 2147483648
        %v1259 = vor.u32 1.1754944e-38, %v1258
        %v1260 = vsel %vm1257, %v1259, %v1255
        %v1261 = vmul.f32 1.0, %v1260
        %v1262 = vtanh.pop %v1242
        %1264 = vrot.lane.b32.xlu0 %v1196, 32
        %v1265 = vpop.permute.xlu0 %1264
        %v1267 = vmul.f32 %v1261, %v1265
        %1269 = vrot.lane.b32.xlu0 %v1262, 32
        %v1270 = vpop.permute.xlu0 %1269
        %v1272 = vmul.f32 %v1261, %v1270
        %1274 = vrot.lane.b32.xlu0 %v1272, 32
        %v1275 = vpop.permute.xlu0 %1274
        %v1277 = vadd.f32 %v1267, %v1275
        %v1278 = vtanh.pop %v1277
        %1280 = vrot.lane.b32.xlu0 %v1278, 32
        %v1281 = vpop.permute.xlu0 %1280
        %v1283 = vmul.f32 %v1261, %v1281
        %1285 = vrot.lane.b32.xlu0 %v1283, 64
        %v1286 = vpop.permute.xlu0 %1285
        %1288 = vst.msk [vmem:[%s455] sm:$0xff] %vm379, %v1286
        %1290 = vrot.lane.b32.xlu0 %v1277, 96
        %v1291 = vpop.permute.xlu0 %1290
        %1293 = vst.msk [vmem:[%s457] sm:$0xff] %vm379, %v1291
        %1294 = vst.msk [vmem:[%s345 + $0x8] sm:$0xff] %vm379, %v1286
        %1295 = vst.msk [vmem:[%s352 + $0x8] sm:$0xff] %vm379, %v1291
        %v1296 = vld [vmem:[#allocation2] sm:$0xff]
        %v1297 = vld [vmem:[#allocation3] sm:$0xff]
        %s1298 = scalar_lea.vmem %s303, 40 [#allocation4]
        %v1299 = vld [vmem:[%s1298] sm:$0xff]
        %v1301 = vsel %vm379, %v1296, 0
        %1303 = vmatpush.msra.mxu0 0.0
        %1304 = vmatpush.msra.mxu0 0.0
        %1305 = vmatpush.msra.mxu0 0.0
        %1306 = vmatpush.msra.mxu0 0.0
        %1307 = vmatpush.msra.mxu0 0.0
        %1308 = vmatpush.msra.mxu0 0.0
        %1309 = vmatpush.msra.mxu0 0.0
        %1310 = vmatpush.msra.mxu0 0.0
        %1311 = vmatpush.msra.mxu0 0.0
        %1312 = vmatpush.msra.mxu0 0.0
        %1313 = vmatpush.msra.mxu0 0.0
        %1314 = vmatpush.msra.mxu0 0.0
        %1315 = vmatpush.msra.mxu0 %v366
        %1316 = vmatpush.msra.mxu0 %v365
        %1317 = vmatpush.msra.mxu0 %v364
        %1318 = vmatpush.msra.mxu0 %v363
        %1319 = vmatmul.f32.gmra.mxu0 %v1301
        %v1320 = vpop.f32.mrf.mxu0
        %v1321 = vadd.f32 0.0, %v1320
        %1322 = vdwg.mxu0
        %v1323 = vadd.f32 %v1299, %v1321
        %v1324 = vxor.u32 %v1323, 2147483648
        %v1325 = vmul.f32 %v1324, 1.442695
        %v1326 = vpow.pop %v1325
        %v1327 = vadd.f32 %v1326, 1.0
        %v1328 = vrcp.pop %v1327
        %v1329 = vmul.f32 %v1327, %v1328
        %v1330 = vsub.f32 1.0, %v1329
        %v1331 = vmul.f32 %v1328, %v1330
        %v1332 = vadd.f32 %v1328, %v1331
        %vm1333 = vweird.f32 %v1327
        %vm1334 = vweird.f32 %v1328
        %vm1335 = vmor %vm1333, %vm1334
        %v1336 = vsel %vm1335, %v1328, %v1332
        %v1337 = vand.u32 2147483647, %v1327
        %vm1338 = vcmp.eq.f32.partialorder %v1337, 8.507059e+37
        %v1339 = vand.u32 %v1327, 2147483648
        %v1340 = vor.u32 1.1754944e-38, %v1339
        %v1341 = vsel %vm1338, %v1340, %v1336
        %v1342 = vmul.f32 1.0, %v1341
        %v1343 = vtanh.pop %v1323
        %1345 = vrot.lane.b32.xlu0 %v1297, 32
        %v1346 = vpop.permute.xlu0 %1345
        %v1348 = vmul.f32 %v1342, %v1346
        %1350 = vrot.lane.b32.xlu0 %v1343, 32
        %v1351 = vpop.permute.xlu0 %1350
        %v1353 = vmul.f32 %v1342, %v1351
        %1355 = vrot.lane.b32.xlu0 %v1353, 32
        %v1356 = vpop.permute.xlu0 %1355
        %v1358 = vadd.f32 %v1348, %v1356
        %v1359 = vtanh.pop %v1358
        %1361 = vrot.lane.b32.xlu0 %v1359, 32
        %v1362 = vpop.permute.xlu0 %1361
        %v1364 = vmul.f32 %v1342, %v1362
        %1366 = vrot.lane.b32.xlu0 %v1364, 64
        %v1367 = vpop.permute.xlu0 %1366
        %1369 = vst.msk [vmem:[#allocation2] sm:$0xff] %vm379, %v1367
        %1371 = vrot.lane.b32.xlu0 %v1358, 96
        %v1372 = vpop.permute.xlu0 %1371
        %1374 = vst.msk [vmem:[#allocation3] sm:$0xff] %vm379, %v1372
        %v1375 = vld [vmem:[%s455] sm:$0xff]
        %v1376 = vld [vmem:[%s457] sm:$0xff]
        %v1378 = vsel %vm379, %v1375, 0
        %1380 = vmatpush.msra.mxu0 0.0
        %1381 = vmatpush.msra.mxu0 0.0
        %1382 = vmatpush.msra.mxu0 0.0
        %1383 = vmatpush.msra.mxu0 0.0
        %1384 = vmatpush.msra.mxu0 0.0
        %1385 = vmatpush.msra.mxu0 0.0
        %1386 = vmatpush.msra.mxu0 0.0
        %1387 = vmatpush.msra.mxu0 0.0
        %1388 = vmatpush.msra.mxu0 0.0
        %1389 = vmatpush.msra.mxu0 0.0
        %1390 = vmatpush.msra.mxu0 0.0
        %1391 = vmatpush.msra.mxu0 0.0
        %1392 = vmatpush.msra.mxu0 %v374
        %1393 = vmatpush.msra.mxu0 %v373
        %1394 = vmatpush.msra.mxu0 %v372
        %1395 = vmatpush.msra.mxu0 %v371
        %1396 = vmatmul.f32.gmra.mxu0 %v1378
        %v1397 = vpop.f32.mrf.mxu0
        %v1398 = vadd.f32 0.0, %v1397
        %1399 = vdwg.mxu0
        %v1400 = vsel %vm379, %v1367, 0
        %1402 = vmatpush.msra.mxu0 0.0
        %1403 = vmatpush.msra.mxu0 0.0
        %1404 = vmatpush.msra.mxu0 0.0
        %1405 = vmatpush.msra.mxu0 0.0
        %1406 = vmatpush.msra.mxu0 0.0
        %1407 = vmatpush.msra.mxu0 0.0
        %1408 = vmatpush.msra.mxu0 0.0
        %1409 = vmatpush.msra.mxu0 0.0
        %1410 = vmatpush.msra.mxu0 0.0
        %1411 = vmatpush.msra.mxu0 0.0
        %1412 = vmatpush.msra.mxu0 0.0
        %1413 = vmatpush.msra.mxu0 0.0
        %1414 = vmatpush.msra.mxu0 %v370
        %1415 = vmatpush.msra.mxu0 %v369
        %1416 = vmatpush.msra.mxu0 %v368
        %1417 = vmatpush.msra.mxu0 %v367
        %1418 = vmatmul.f32.gmra.mxu0 %v1400
        %v1419 = vpop.f32.mrf.mxu0
        %v1420 = vadd.f32 %v1398, %v1419
        %1421 = vdwg.mxu0
        %v1422 = vadd.f32 %v1420, %v505
        %v1423 = vxor.u32 %v1422, 2147483648
        %v1424 = vmul.f32 %v1423, 1.442695
        %v1425 = vpow.pop %v1424
        %v1426 = vadd.f32 %v1425, 1.0
        %v1427 = vrcp.pop %v1426
        %v1428 = vmul.f32 %v1426, %v1427
        %v1429 = vsub.f32 1.0, %v1428
        %v1430 = vmul.f32 %v1427, %v1429
        %v1431 = vadd.f32 %v1427, %v1430
        %vm1432 = vweird.f32 %v1426
        %vm1433 = vweird.f32 %v1427
        %vm1434 = vmor %vm1432, %vm1433
        %v1435 = vsel %vm1434, %v1427, %v1431
        %v1436 = vand.u32 2147483647, %v1426
        %vm1437 = vcmp.eq.f32.partialorder %v1436, 8.507059e+37
        %v1438 = vand.u32 %v1426, 2147483648
        %v1439 = vor.u32 1.1754944e-38, %v1438
        %v1440 = vsel %vm1437, %v1439, %v1435
        %v1441 = vmul.f32 1.0, %v1440
        %v1442 = vtanh.pop %v1422
        %1444 = vrot.lane.b32.xlu0 %v1376, 32
        %v1445 = vpop.permute.xlu0 %1444
        %v1447 = vmul.f32 %v1441, %v1445
        %1449 = vrot.lane.b32.xlu0 %v1442, 32
        %v1450 = vpop.permute.xlu0 %1449
        %v1452 = vmul.f32 %v1441, %v1450
        %1454 = vrot.lane.b32.xlu0 %v1452, 32
        %v1455 = vpop.permute.xlu0 %1454
        %v1457 = vadd.f32 %v1447, %v1455
        %v1458 = vtanh.pop %v1457
        %1460 = vrot.lane.b32.xlu0 %v1458, 32
        %v1461 = vpop.permute.xlu0 %1460
        %v1463 = vmul.f32 %v1441, %v1461
        %1465 = vrot.lane.b32.xlu0 %v1463, 64
        %v1466 = vpop.permute.xlu0 %1465
        %1468 = vst.msk [vmem:[%s455] sm:$0xff] %vm379, %v1466
        %1470 = vrot.lane.b32.xlu0 %v1457, 96
        %v1471 = vpop.permute.xlu0 %1470
        %1473 = vst.msk [vmem:[%s457] sm:$0xff] %vm379, %v1471
        %1474 = vrot.lane.b32.xlu0 %v1463, 96
        %v1475 = vpop.permute.xlu0 %1474
        %1477 = vst.msk [vmem:[%s345 + $0x8] sm:$0xff] %vm742, %v1475
        %1478 = vst.msk [vmem:[%s352 + $0x8] sm:$0xff] %vm742, %v1457
        %v1479 = vld [vmem:[#allocation2] sm:$0xff]
        %v1480 = vld [vmem:[#allocation3] sm:$0xff]
        %s1481 = scalar_lea.vmem %s303, 48 [#allocation4]
        %v1482 = vld [vmem:[%s1481] sm:$0xff]
        %v1484 = vsel %vm379, %v1479, 0
        %1486 = vmatpush.msra.mxu0 0.0
        %1487 = vmatpush.msra.mxu0 0.0
        %1488 = vmatpush.msra.mxu0 0.0
        %1489 = vmatpush.msra.mxu0 0.0
        %1490 = vmatpush.msra.mxu0 0.0
        %1491 = vmatpush.msra.mxu0 0.0
        %1492 = vmatpush.msra.mxu0 0.0
        %1493 = vmatpush.msra.mxu0 0.0
        %1494 = vmatpush.msra.mxu0 0.0
        %1495 = vmatpush.msra.mxu0 0.0
        %1496 = vmatpush.msra.mxu0 0.0
        %1497 = vmatpush.msra.mxu0 0.0
        %1498 = vmatpush.msra.mxu0 %v366
        %1499 = vmatpush.msra.mxu0 %v365
        %1500 = vmatpush.msra.mxu0 %v364
        %1501 = vmatpush.msra.mxu0 %v363
        %1502 = vmatmul.f32.gmra.mxu0 %v1484
        %v1503 = vpop.f32.mrf.mxu0
        %v1504 = vadd.f32 0.0, %v1503
        %1505 = vdwg.mxu0
        %v1506 = vadd.f32 %v1482, %v1504
        %v1507 = vxor.u32 %v1506, 2147483648
        %v1508 = vmul.f32 %v1507, 1.442695
        %v1509 = vpow.pop %v1508
        %v1510 = vadd.f32 %v1509, 1.0
        %v1511 = vrcp.pop %v1510
        %v1512 = vmul.f32 %v1510, %v1511
        %v1513 = vsub.f32 1.0, %v1512
        %v1514 = vmul.f32 %v1511, %v1513
        %v1515 = vadd.f32 %v1511, %v1514
        %vm1516 = vweird.f32 %v1510
        %vm1517 = vweird.f32 %v1511
        %vm1518 = vmor %vm1516, %vm1517
        %v1519 = vsel %vm1518, %v1511, %v1515
        %v1520 = vand.u32 2147483647, %v1510
        %vm1521 = vcmp.eq.f32.partialorder %v1520, 8.507059e+37
        %v1522 = vand.u32 %v1510, 2147483648
        %v1523 = vor.u32 1.1754944e-38, %v1522
        %v1524 = vsel %vm1521, %v1523, %v1519
        %v1525 = vmul.f32 1.0, %v1524
        %v1526 = vtanh.pop %v1506
        %1528 = vrot.lane.b32.xlu0 %v1480, 32
        %v1529 = vpop.permute.xlu0 %1528
        %v1531 = vmul.f32 %v1525, %v1529
        %1533 = vrot.lane.b32.xlu0 %v1526, 32
        %v1534 = vpop.permute.xlu0 %1533
        %v1536 = vmul.f32 %v1525, %v1534
        %1538 = vrot.lane.b32.xlu0 %v1536, 32
        %v1539 = vpop.permute.xlu0 %1538
        %v1541 = vadd.f32 %v1531, %v1539
        %v1542 = vtanh.pop %v1541
        %1544 = vrot.lane.b32.xlu0 %v1542, 32
        %v1545 = vpop.permute.xlu0 %1544
        %v1547 = vmul.f32 %v1525, %v1545
        %1549 = vrot.lane.b32.xlu0 %v1547, 64
        %v1550 = vpop.permute.xlu0 %1549
        %1552 = vst.msk [vmem:[#allocation2] sm:$0xff] %vm379, %v1550
        %1554 = vrot.lane.b32.xlu0 %v1541, 96
        %v1555 = vpop.permute.xlu0 %1554
        %1557 = vst.msk [vmem:[#allocation3] sm:$0xff] %vm379, %v1555
        %v1558 = vld [vmem:[%s455] sm:$0xff]
        %v1559 = vld [vmem:[%s457] sm:$0xff]
        %v1561 = vsel %vm379, %v1558, 0
        %1563 = vmatpush.msra.mxu0 0.0
        %1564 = vmatpush.msra.mxu0 0.0
        %1565 = vmatpush.msra.mxu0 0.0
        %1566 = vmatpush.msra.mxu0 0.0
        %1567 = vmatpush.msra.mxu0 0.0
        %1568 = vmatpush.msra.mxu0 0.0
        %1569 = vmatpush.msra.mxu0 0.0
        %1570 = vmatpush.msra.mxu0 0.0
        %1571 = vmatpush.msra.mxu0 0.0
        %1572 = vmatpush.msra.mxu0 0.0
        %1573 = vmatpush.msra.mxu0 0.0
        %1574 = vmatpush.msra.mxu0 0.0
        %1575 = vmatpush.msra.mxu0 %v374
        %1576 = vmatpush.msra.mxu0 %v373
        %1577 = vmatpush.msra.mxu0 %v372
        %1578 = vmatpush.msra.mxu0 %v371
        %1579 = vmatmul.f32.gmra.mxu0 %v1561
        %v1580 = vpop.f32.mrf.mxu0
        %v1581 = vadd.f32 0.0, %v1580
        %1582 = vdwg.mxu0
        %v1583 = vsel %vm379, %v1550, 0
        %1585 = vmatpush.msra.mxu0 0.0
        %1586 = vmatpush.msra.mxu0 0.0
        %1587 = vmatpush.msra.mxu0 0.0
        %1588 = vmatpush.msra.mxu0 0.0
        %1589 = vmatpush.msra.mxu0 0.0
        %1590 = vmatpush.msra.mxu0 0.0
        %1591 = vmatpush.msra.mxu0 0.0
        %1592 = vmatpush.msra.mxu0 0.0
        %1593 = vmatpush.msra.mxu0 0.0
        %1594 = vmatpush.msra.mxu0 0.0
        %1595 = vmatpush.msra.mxu0 0.0
        %1596 = vmatpush.msra.mxu0 0.0
        %1597 = vmatpush.msra.mxu0 %v370
        %1598 = vmatpush.msra.mxu0 %v369
        %1599 = vmatpush.msra.mxu0 %v368
        %1600 = vmatpush.msra.mxu0 %v367
        %1601 = vmatmul.f32.gmra.mxu0 %v1583
        %v1602 = vpop.f32.mrf.mxu0
        %v1603 = vadd.f32 %v1581, %v1602
        %1604 = vdwg.mxu0
        %v1605 = vadd.f32 %v1603, %v505
        %v1606 = vxor.u32 %v1605, 2147483648
        %v1607 = vmul.f32 %v1606, 1.442695
        %v1608 = vpow.pop %v1607
        %v1609 = vadd.f32 %v1608, 1.0
        %v1610 = vrcp.pop %v1609
        %v1611 = vmul.f32 %v1609, %v1610
        %v1612 = vsub.f32 1.0, %v1611
        %v1613 = vmul.f32 %v1610, %v1612
        %v1614 = vadd.f32 %v1610, %v1613
        %vm1615 = vweird.f32 %v1609
        %vm1616 = vweird.f32 %v1610
        %vm1617 = vmor %vm1615, %vm1616
        %v1618 = vsel %vm1617, %v1610, %v1614
        %v1619 = vand.u32 2147483647, %v1609
        %vm1620 = vcmp.eq.f32.partialorder %v1619, 8.507059e+37
        %v1621 = vand.u32 %v1609, 2147483648
        %v1622 = vor.u32 1.1754944e-38, %v1621
        %v1623 = vsel %vm1620, %v1622, %v1618
        %v1624 = vmul.f32 1.0, %v1623
        %v1625 = vtanh.pop %v1605
        %1627 = vrot.lane.b32.xlu0 %v1559, 32
        %v1628 = vpop.permute.xlu0 %1627
        %v1630 = vmul.f32 %v1624, %v1628
        %1632 = vrot.lane.b32.xlu0 %v1625, 32
        %v1633 = vpop.permute.xlu0 %1632
        %v1635 = vmul.f32 %v1624, %v1633
        %1637 = vrot.lane.b32.xlu0 %v1635, 32
        %v1638 = vpop.permute.xlu0 %1637
        %v1640 = vadd.f32 %v1630, %v1638
        %v1641 = vtanh.pop %v1640
        %1643 = vrot.lane.b32.xlu0 %v1641, 32
        %v1644 = vpop.permute.xlu0 %1643
        %v1646 = vmul.f32 %v1624, %v1644
        %1648 = vrot.lane.b32.xlu0 %v1646, 64
        %v1649 = vpop.permute.xlu0 %1648
        %1651 = vst.msk [vmem:[%s455] sm:$0xff] %vm379, %v1649
        %1653 = vrot.lane.b32.xlu0 %v1640, 96
        %v1654 = vpop.permute.xlu0 %1653
        %1656 = vst.msk [vmem:[%s457] sm:$0xff] %vm379, %v1654
        %1657 = vst.msk [vmem:[%s345 + $0x8] sm:$0xff] %vm923, %v1646
        %1658 = vrot.lane.b32.xlu0 %v1640, 32
        %v1659 = vpop.permute.xlu0 %1658
        %1661 = vst.msk [vmem:[%s352 + $0x8] sm:$0xff] %vm923, %v1659
        %v1662 = vld [vmem:[#allocation2] sm:$0xff]
        %v1663 = vld [vmem:[#allocation3] sm:$0xff]
        %s1664 = scalar_lea.vmem %s303, 56 [#allocation4]
        %v1665 = vld [vmem:[%s1664] sm:$0xff]
        %v1667 = vsel %vm379, %v1662, 0
        %1669 = vmatpush.msra.mxu0 0.0
        %1670 = vmatpush.msra.mxu0 0.0
        %1671 = vmatpush.msra.mxu0 0.0
        %1672 = vmatpush.msra.mxu0 0.0
        %1673 = vmatpush.msra.mxu0 0.0
        %1674 = vmatpush.msra.mxu0 0.0
        %1675 = vmatpush.msra.mxu0 0.0
        %1676 = vmatpush.msra.mxu0 0.0
        %1677 = vmatpush.msra.mxu0 0.0
        %1678 = vmatpush.msra.mxu0 0.0
        %1679 = vmatpush.msra.mxu0 0.0
        %1680 = vmatpush.msra.mxu0 0.0
        %1681 = vmatpush.msra.mxu0 %v366
        %1682 = vmatpush.msra.mxu0 %v365
        %1683 = vmatpush.msra.mxu0 %v364
        %1684 = vmatpush.msra.mxu0 %v363
        %1685 = vmatmul.f32.gmra.mxu0 %v1667
        %v1686 = vpop.f32.mrf.mxu0
        %v1687 = vadd.f32 0.0, %v1686
        %1688 = vdwg.mxu0
        %v1689 = vadd.f32 %v1665, %v1687
        %v1690 = vxor.u32 %v1689, 2147483648
        %v1691 = vmul.f32 %v1690, 1.442695
        %v1692 = vpow.pop %v1691
        %v1693 = vadd.f32 %v1692, 1.0
        %v1694 = vrcp.pop %v1693
        %v1695 = vmul.f32 %v1693, %v1694
        %v1696 = vsub.f32 1.0, %v1695
        %v1697 = vmul.f32 %v1694, %v1696
        %v1698 = vadd.f32 %v1694, %v1697
        %vm1699 = vweird.f32 %v1693
        %vm1700 = vweird.f32 %v1694
        %vm1701 = vmor %vm1699, %vm1700
        %v1702 = vsel %vm1701, %v1694, %v1698
        %v1703 = vand.u32 2147483647, %v1693
        %vm1704 = vcmp.eq.f32.partialorder %v1703, 8.507059e+37
        %v1705 = vand.u32 %v1693, 2147483648
        %v1706 = vor.u32 1.1754944e-38, %v1705
        %v1707 = vsel %vm1704, %v1706, %v1702
        %v1708 = vmul.f32 1.0, %v1707
        %v1709 = vtanh.pop %v1689
        %1711 = vrot.lane.b32.xlu0 %v1663, 32
        %v1712 = vpop.permute.xlu0 %1711
        %v1714 = vmul.f32 %v1708, %v1712
        %1716 = vrot.lane.b32.xlu0 %v1709, 32
        %v1717 = vpop.permute.xlu0 %1716
        %v1719 = vmul.f32 %v1708, %v1717
        %1721 = vrot.lane.b32.xlu0 %v1719, 32
        %v1722 = vpop.permute.xlu0 %1721
        %v1724 = vadd.f32 %v1714, %v1722
        %v1725 = vtanh.pop %v1724
        %1727 = vrot.lane.b32.xlu0 %v1725, 32
        %v1728 = vpop.permute.xlu0 %1727
        %v1730 = vmul.f32 %v1708, %v1728
        %1732 = vrot.lane.b32.xlu0 %v1730, 64
        %v1733 = vpop.permute.xlu0 %1732
        %1735 = vst.msk [vmem:[#allocation2] sm:$0xff] %vm379, %v1733
        %1737 = vrot.lane.b32.xlu0 %v1724, 96
        %v1738 = vpop.permute.xlu0 %1737
        %1740 = vst.msk [vmem:[#allocation3] sm:$0xff] %vm379, %v1738
        %v1741 = vld [vmem:[%s455] sm:$0xff]
        %v1742 = vld [vmem:[%s457] sm:$0xff]
        %v1744 = vsel %vm379, %v1741, 0
        %1746 = vmatpush.msra.mxu0 0.0
        %1747 = vmatpush.msra.mxu0 0.0
        %1748 = vmatpush.msra.mxu0 0.0
        %1749 = vmatpush.msra.mxu0 0.0
        %1750 = vmatpush.msra.mxu0 0.0
        %1751 = vmatpush.msra.mxu0 0.0
        %1752 = vmatpush.msra.mxu0 0.0
        %1753 = vmatpush.msra.mxu0 0.0
        %1754 = vmatpush.msra.mxu0 0.0
        %1755 = vmatpush.msra.mxu0 0.0
        %1756 = vmatpush.msra.mxu0 0.0
        %1757 = vmatpush.msra.mxu0 0.0
        %1758 = vmatpush.msra.mxu0 %v374
        %1759 = vmatpush.msra.mxu0 %v373
        %1760 = vmatpush.msra.mxu0 %v372
        %1761 = vmatpush.msra.mxu0 %v371
        %1762 = vmatmul.f32.gmra.mxu0 %v1744
        %v1763 = vpop.f32.mrf.mxu0
        %v1764 = vadd.f32 0.0, %v1763
        %1765 = vdwg.mxu0
        %v1766 = vsel %vm379, %v1733, 0
        %1768 = vmatpush.msra.mxu0 0.0
        %1769 = vmatpush.msra.mxu0 0.0
        %1770 = vmatpush.msra.mxu0 0.0
        %1771 = vmatpush.msra.mxu0 0.0
        %1772 = vmatpush.msra.mxu0 0.0
        %1773 = vmatpush.msra.mxu0 0.0
        %1774 = vmatpush.msra.mxu0 0.0
        %1775 = vmatpush.msra.mxu0 0.0
        %1776 = vmatpush.msra.mxu0 0.0
        %1777 = vmatpush.msra.mxu0 0.0
        %1778 = vmatpush.msra.mxu0 0.0
        %1779 = vmatpush.msra.mxu0 0.0
        %1780 = vmatpush.msra.mxu0 %v370
        %1781 = vmatpush.msra.mxu0 %v369
        %1782 = vmatpush.msra.mxu0 %v368
        %1783 = vmatpush.msra.mxu0 %v367
        %1784 = vmatmul.f32.gmra.mxu0 %v1766
        %v1785 = vpop.f32.mrf.mxu0
        %v1786 = vadd.f32 %v1764, %v1785
        %1787 = vdwg.mxu0
        %v1788 = vadd.f32 %v1786, %v505
        %v1789 = vxor.u32 %v1788, 2147483648
        %v1790 = vmul.f32 %v1789, 1.442695
        %v1791 = vpow.pop %v1790
        %v1792 = vadd.f32 %v1791, 1.0
        %v1793 = vrcp.pop %v1792
        %v1794 = vmul.f32 %v1792, %v1793
        %v1795 = vsub.f32 1.0, %v1794
        %v1796 = vmul.f32 %v1793, %v1795
        %v1797 = vadd.f32 %v1793, %v1796
        %vm1798 = vweird.f32 %v1792
        %vm1799 = vweird.f32 %v1793
        %vm1800 = vmor %vm1798, %vm1799
        %v1801 = vsel %vm1800, %v1793, %v1797
        %v1802 = vand.u32 2147483647, %v1792
        %vm1803 = vcmp.eq.f32.partialorder %v1802, 8.507059e+37
        %v1804 = vand.u32 %v1792, 2147483648
        %v1805 = vor.u32 1.1754944e-38, %v1804
        %v1806 = vsel %vm1803, %v1805, %v1801
        %v1807 = vmul.f32 1.0, %v1806
        %v1808 = vtanh.pop %v1788
        %1810 = vrot.lane.b32.xlu0 %v1742, 32
        %v1811 = vpop.permute.xlu0 %1810
        %v1813 = vmul.f32 %v1807, %v1811
        %1815 = vrot.lane.b32.xlu0 %v1808, 32
        %v1816 = vpop.permute.xlu0 %1815
        %v1818 = vmul.f32 %v1807, %v1816
        %1820 = vrot.lane.b32.xlu0 %v1818, 32
        %v1821 = vpop.permute.xlu0 %1820
        %v1823 = vadd.f32 %v1813, %v1821
        %v1824 = vtanh.pop %v1823
        %1826 = vrot.lane.b32.xlu0 %v1824, 32
        %v1827 = vpop.permute.xlu0 %1826
        %v1829 = vmul.f32 %v1807, %v1827
        %1831 = vrot.lane.b32.xlu0 %v1829, 64
        %v1832 = vpop.permute.xlu0 %1831
        %1834 = vst.msk [vmem:[%s455] sm:$0xff] %vm379, %v1832
        %1836 = vrot.lane.b32.xlu0 %v1823, 96
        %v1837 = vpop.permute.xlu0 %1836
        %1839 = vst.msk [vmem:[%s457] sm:$0xff] %vm379, %v1837
        %1840 = vrot.lane.b32.xlu0 %v1829, 32
        %v1841 = vpop.permute.xlu0 %1840
        %1843 = vst.msk [vmem:[%s345 + $0x8] sm:$0xff] %vm1110, %v1841
        %1844 = vrot.lane.b32.xlu0 %v1823, 64
        %v1845 = vpop.permute.xlu0 %1844
        %1847 = vst.msk [vmem:[%s352 + $0x8] sm:$0xff] %vm1110, %v1845
        %s1848 = sand.u32 %s163, 1
        %s1849 = scalar_lea.sflag [#allocation6], %s1848
        %s1850 = sand.u32 %s163, 1
        %s1851 = smul.addr %s1850, 16
        %s1852 = scalar_lea.vmem [#allocation12], %s1851
        %s1853 = sand.u32 %s191, 1
        %s1854 = scalar_lea.sflag [#allocation14], %s1853
        %s1855 = sand.u32 %s191, 1
        %s1856 = smul.addr %s1855, 16
        %s1857 = scalar_lea.vmem [#allocation13], %s1856
        // Predicated region
        $region61: #{tpu_custom_call.1} parent=39 // pred_check
          %p1858 = pneg %p173
        $region62: #{tpu_custom_call.1} parent=39 // pred_check_branch
          %1860 = sbr.rel (%p1858) target = $region64
        $region63: #{tpu_custom_call.1} parent=39 // pred_region
          %1862 = vsyncadd %s1849, 0
          %s1863 = smul.addr %s34, 2
          %s1864 = smul.addr %s33, 4
          %s1865 = sadd.s32 %s1863, %s1864
          %s1866 = smul.addr %s1865, 8
          %s1867 = scalar_lea.hbm %s5, %s1866
          %s1869 = sshll.u32 %s1852, 4
          %s1870 = int_to_ptr.vmem [resolvable:$true] %s1869
          %s1871 = sshll.u32 %s1867, 4
          %s1872 = int_to_ptr.hbm [resolvable:$true] %s1871
          %1874 = dma.vmem_to_hbm [thread:$0]  %s1870, 256, %s1872, %s1849
        $region64: #{tpu_custom_call.1} parent=39 // pred_fallthru
          _
        // Predicated region
        $region65: #{tpu_custom_call.1} parent=39 // pred_check
          %p1875 = pneg %p201
        $region66: #{tpu_custom_call.1} parent=39 // pred_check_branch
          %1877 = sbr.rel (%p1875) target = $region68
        $region67: #{tpu_custom_call.1} parent=39 // pred_region
          %1879 = vsyncadd %s1854, 0
          %s1880 = smul.addr %s34, 2
          %s1881 = smul.addr %s33, 4
          %s1882 = sadd.s32 %s1880, %s1881
          %s1883 = smul.addr %s1882, 8
          %s1884 = scalar_lea.hbm %s6, %s1883
          %s1886 = sshll.u32 %s1857, 4
          %s1887 = int_to_ptr.vmem [resolvable:$true] %s1886
          %s1888 = sshll.u32 %s1884, 4
          %s1889 = int_to_ptr.hbm [resolvable:$true] %s1888
          %1891 = dma.vmem_to_hbm [thread:$0]  %s1887, 256, %s1889, %s1854
        $region68: #{tpu_custom_call.1} parent=39 // pred_fallthru
          _
      $region40: #{tpu_custom_call.1} parent=5 // pred_fallthru
        _
      %p1892 = scmp.le.s32.totalorder 2, %s24
      // Predicated region
      $region69: #{tpu_custom_call.1} parent=5 // pred_check
        %p1893 = pneg %p1892
      $region70: #{tpu_custom_call.1} parent=5 // pred_check_branch
        %1895 = sbr.rel (%p1893) target = $region72
      $region71: #{tpu_custom_call.1} parent=5 // pred_region
        %s1896 = ssub.s32 %s24, 2
        // Predicated region
        $region73: #{tpu_custom_call.1} parent=71 // pred_check
          %p1897 = pneg %p179
        $region74: #{tpu_custom_call.1} parent=71 // pred_check_branch
          %1899 = sbr.rel (%p1897) target = $region76
        $region75: #{tpu_custom_call.1} parent=71 // pred_region
          %s1900 = sand.u32 %s164, 1
          %s1901 = scalar_lea.sflag [#allocation6], %s1900
          %s1902 = sand.u32 %s164, 1
          %s1903 = smul.addr %s1902, 16
          %s1904 = scalar_lea.vmem [#allocation12], %s1903
          %1906 = dma.done %s1901, 256
        $region76: #{tpu_custom_call.1} parent=71 // pred_fallthru
          _
        // Predicated region
        $region77: #{tpu_custom_call.1} parent=71 // pred_check
          %p1907 = pneg %p207
        $region78: #{tpu_custom_call.1} parent=71 // pred_check_branch
          %1909 = sbr.rel (%p1907) target = $region80
        $region79: #{tpu_custom_call.1} parent=71 // pred_region
          %s1910 = sand.u32 %s192, 1
          %s1911 = scalar_lea.sflag [#allocation14], %s1910
          %s1912 = sand.u32 %s192, 1
          %s1913 = smul.addr %s1912, 16
          %s1914 = scalar_lea.vmem [#allocation13], %s1913
          %1916 = dma.done %s1911, 256
        $region80: #{tpu_custom_call.1} parent=71 // pred_fallthru
          _
      $region72: #{tpu_custom_call.1} parent=5 // pred_fallthru
        _
    $region6: #{tpu_custom_call.1} parent=1 // loop_footer
      %s28 = sadd.s32 1, %s24
    $region7: #{tpu_custom_call.1} parent=1 // loop_footer_branch
      %23 = sbr.rel target = $region3
    $region8: #{tpu_custom_call.1} parent=1 // loop_exit
      _
    %1917 = vsyncpa [#allocation5], 1
    %s1918 = scalar_lea.sflag [#allocation5], 1
    %1919 = vsyncpa %s1918, 1
    %1920 = vsyncpa [#allocation8], 1
    %1921 = vsyncpa [#allocation11], 1
    %1922 = vsyncpa [#allocation6], 1
    %s1923 = scalar_lea.sflag [#allocation6], 1
    %1924 = vsyncpa %s1923, 1
    %1925 = vsyncpa [#allocation14], 1
    %s1926 = scalar_lea.sflag [#allocation14], 1
    %1927 = vsyncpa %s1926, 1

</llo_original>
